<compile_context>
chip_gen: v6e
topology: v6e:2x2x1
jax: 0.10.0
libtpu: 0.0.40
codegen_flags: <defaults>
</compile_context>

<pallas_src>
import jax
import jax.numpy as jnp
from jax.experimental import pallas as pl
from jax.experimental.pallas import tpu as pltpu

D = 12              # filter output rows -> X6 is 12x12 -> FC dim 144 (matches fc_w1: (144, 10))
Q_TOP = 8           # number of top eigenvectors kept by OrthMap
BATCH_TILE_CAP = 256  # batch elements per grid step for large batches (multiple of 8)

# TODO(synk): call_reorthmap / call_orthmap are not defined in the provided source;
#             implemented with the standard GrNet semantics (QR retraction / top-q eigenvectors).


# ---------------------------------------------------------------------------
# Pallas kernels
# ---------------------------------------------------------------------------

def _filter_matmul_kernel(wf_ref, x_ref, o_ref):
    # wf_ref: (F*d, n) bf16 resident across the grid; x_ref: (n, TB*p) bf16;
    # o_ref: (F*d, TB*p) f32.  The batch tile lives on the lane axis, so both the
    # input DMA and the output stores are lane-dense (no masked vst / lane padding).
    o_ref[...] = jnp.dot(wf_ref[...], x_ref[...],
                         preferred_element_type=jnp.float32)


def _proj_pool_kernel(q_ref, o_ref):
    # q_ref: (TB, d, F*p) bf16 — filters and p folded into one contraction axis in
    # the wrapper, so the F-sum is part of the MXU contraction (length F*p) rather
    # than a separate (F, d, d) intermediate plus a cross-sublane reduce.
    q = q_ref[...]
    o_ref[...] = jnp.einsum('bik,bjk->bij', q, q,
                            preferred_element_type=jnp.float32)       # (TB, d, d)


def _head_kernel(x5_ref, wr_ref, b_ref, o_ref):
    # x5_ref: (TB, d, Q); wr_ref: (d, d, C) = fc_w1 reshaped row-major;
    # b_ref: (1, C); o_ref: (TB, C).
    x5 = x5_ref[...]
    # X6 = X5 @ X5^T for the whole batch tile (batched MXU matmul).
    x6 = jnp.einsum('biq,bjq->bij', x5, x5,
                    preferred_element_type=jnp.float32)                # (TB, d, d)
    # logits[b, c] = sum_{i,j} X6[b, i, j] * fc_w1[i*d + j, c]
    # Done as d real (TB, d) @ (d, C) MXU matmuls accumulated in registers (no
    # per-iteration stores).  A single (TB, 144) @ (144, C) matmul would require an
    # in-kernel (TB, d, d) -> (TB, d*d) lane-crossing relayout or a
    # multi-contracting-dim dot_general, which Mosaic does not lower reliably.
    dsz = x6.shape[1]
    acc = jnp.dot(x6[:, 0, :], wr_ref[0], preferred_element_type=jnp.float32)
    for i in range(1, dsz):
        acc = acc + jnp.dot(x6[:, i, :], wr_ref[i],
                            preferred_element_type=jnp.float32)
    logits = acc + b_ref[...]                                          # (TB, C)
    # Numerically stable log_softmax.
    m = jnp.max(logits, axis=-1, keepdims=True)
    z = logits - m
    lse = jnp.log(jnp.sum(jnp.exp(z), axis=-1, keepdims=True))
    o_ref[...] = z - lse


# ---------------------------------------------------------------------------
# Forward pass
# ---------------------------------------------------------------------------

def _compiler_params():
    # "parallel" lets v7x shard the batch grid across its two TensorCores; 32 MiB
    # lifts v5e's 16 MiB scoped-VMEM default and matches the v6e/v7x default
    # (well under v7x's 64 MiB physical VMEM; the blocks here are far smaller).
    return pltpu.CompilerParams(
        dimension_semantics=("parallel",),
        vmem_limit_bytes=32 * 1024 * 1024,
    )


def _batch_tile(batch):
    # Whole batch for small problems (block == full dims is always legal);
    # otherwise a fixed sublane-friendly tile (multiple of 8).
    return batch if batch <= BATCH_TILE_CAP else BATCH_TILE_CAP


@jax.jit
def grnet_forward(x, W, fc_w1, fc_b1):
    F_, d_, n_ = W.shape
    B, _, p_ = x.shape
    C_ = fc_w1.shape[1]

    tb = _batch_tile(B)
    # Kernel 1 tiles the lane axis (batch*p): a partial tile must be a multiple of
    # 128 lanes, otherwise fall back to the full axis (single lane block).
    tb1 = tb if (tb == B or (tb * p_) % 128 == 0) else B

    # ---- Kernel 1: collapsed filter matmul, lane-dense over the batch ----------
    # (F*d, n) @ (n, B*p): all filters for all batch elements as MXU matmuls.
    # bf16 inputs halve the HBM traffic that scales with B; accumulation is f32.
    wf = W.reshape(F_ * d_, n_).astype(jnp.bfloat16)
    x_flat = x.astype(jnp.bfloat16).transpose(1, 0, 2).reshape(n_, B * p_)

    x1_flat = pl.pallas_call(
        _filter_matmul_kernel,
        grid=(pl.cdiv(B, tb1),),
        in_specs=[
            pl.BlockSpec((F_ * d_, n_), lambda i: (0, 0)),        # weights resident
            pl.BlockSpec((n_, tb1 * p_), lambda i: (0, i)),
        ],
        out_specs=pl.BlockSpec((F_ * d_, tb1 * p_), lambda i: (0, i)),
        out_shape=jax.ShapeDtypeStruct((F_ * d_, B * p_), jnp.float32),
        compiler_params=_compiler_params(),
    )(wf, x_flat)

    # (F*d, B*p) -> (B, F, d, p): cheap XLA layout plumbing on a tiny array.
    x1 = x1_flat.reshape(F_, d_, B, p_).transpose(2, 0, 1, 3)

    # ReOrthMap: QR retraction (keep the orthonormal factor Q).
    # TODO(synk): batched small QR (Householder) has no clean Pallas equivalent; stays in XLA.
    q_mat, _ = jnp.linalg.qr(x1)                                   # (B, F, d, p)

    # ---- Kernel 2: ProjMap + filter pooling -------------------------------------
    # Fold (F, p) into one contraction axis in XLA so the kernel is one batched
    # matmul per tile: X4[b] = Qk[b] @ Qk[b]^T with Qk of shape (d, F*p).
    qk = q_mat.astype(jnp.bfloat16).transpose(0, 2, 1, 3).reshape(B, d_, F_ * p_)

    x4 = pl.pallas_call(
        _proj_pool_kernel,
        grid=(pl.cdiv(B, tb),),
        in_specs=[pl.BlockSpec((tb, d_, F_ * p_), lambda i: (i, 0, 0))],
        out_specs=pl.BlockSpec((tb, d_, d_), lambda i: (i, 0, 0)),
        out_shape=jax.ShapeDtypeStruct((B, d_, d_), jnp.float32),
        compiler_params=_compiler_params(),
    )(qk)

    # OrthMap: top-Q_TOP eigenvectors of the symmetric PSD matrix X4.
    # TODO(synk): batched symmetric eigendecomposition has no clean Pallas equivalent;
    #             stays in XLA (column order/sign differ from torch, but X6 = X5 @ X5^T
    #             is invariant to both).
    _, U = jnp.linalg.eigh(x4)                                     # ascending eigenvalues
    x5 = U[:, :, -Q_TOP:]                                          # (B, d, Q)

    # ---- Kernel 3: fused head (X6 = X5 X5^T, FC, log_softmax) -------------------
    wr = fc_w1.reshape(d_, d_, C_)        # row-major split == X6.view(batch, -1) order

    out = pl.pallas_call(
        _head_kernel,
        grid=(pl.cdiv(B, tb),),
        in_specs=[
            pl.BlockSpec((tb, d_, Q_TOP), lambda i: (i, 0, 0)),
            pl.BlockSpec((d_, d_, C_), lambda i: (0, 0, 0)),       # fc weights resident
            pl.BlockSpec((1, C_), lambda i: (0, 0)),               # bias resident
        ],
        out_specs=pl.BlockSpec((tb, C_), lambda i: (i, 0)),
        out_shape=jax.ShapeDtypeStruct((B, C_), jnp.float32),
        compiler_params=_compiler_params(),
    )(x5, wr, fc_b1)

    return out


# ---------------------------------------------------------------------------
# Main
# ---------------------------------------------------------------------------

if __name__ == "__main__":
    num_filters = 4
    batch, n, p = 2, 16, 8

    key = jax.random.PRNGKey(0)
    k_w, k_w1, k_b1, k_x = jax.random.split(key, 4)

    # Deterministic synthetic parameters (the module __init__ loads them from disk;
    # only fc_w1 / fc_b1 are used in forward, the other fc_* are dead code).
    W = jax.random.normal(k_w, (num_filters, D, n), dtype=jnp.float32)
    fc_w1 = jax.random.normal(k_w1, (D * D, 10), dtype=jnp.float32)
    fc_b1 = jax.random.normal(k_b1, (1, 10), dtype=jnp.float32)

    x = jax.random.normal(k_x, (batch, n, p), dtype=jnp.float32)

    out = grnet_forward(x, W, fc_w1, fc_b1)
    out = jax.block_until_ready(out)

    # Sanity: log_softmax rows must exponentiate-sum to 1 and be finite.
    assert out.shape == (batch, 10)
    assert bool(jnp.all(jnp.isfinite(out)))
    assert bool(jnp.allclose(jnp.exp(out).sum(axis=-1), 1.0, atol=1e-4))

    print("KERNEL_OK")
</pallas_src>

<mosaic_0001>
module attributes {stable_mosaic.version = 11 : i64} {
  func.func @_filter_matmul_kernel(%arg0: i32, %arg1: memref<48x16xbf16, #tpu.memory_space<vmem>>, %arg2: memref<16x16xbf16, #tpu.memory_space<vmem>>, %arg3: memref<48x16xf32, #tpu.memory_space<vmem>>) attributes {dimension_semantics = [#tpu.dimension_semantics<parallel>], iteration_bounds = array<i64: 1>, scalar_prefetch = 0 : i64, scratch_operands = 0 : i64, tpu.core_type = #tpu.core_type<tc>, window_params = [{pipeline_mode = #tpu.pipeline_mode<synchronous>, transform_indices = @transform_0, window_bounds = array<i64: 48, 16>}, {transform_indices = @transform_1, window_bounds = array<i64: 16, 16>}, {transform_indices = @transform_2, window_bounds = array<i64: 48, 16>}]} {
    %c0 = arith.constant 0 : index
    %c0_0 = arith.constant 0 : index
    %0 = vector.load %arg1[%c0, %c0_0] : memref<48x16xbf16, #tpu.memory_space<vmem>>, vector<48x16xbf16>
    %c0_1 = arith.constant 0 : index
    %c0_2 = arith.constant 0 : index
    %1 = vector.load %arg2[%c0_1, %c0_2] : memref<16x16xbf16, #tpu.memory_space<vmem>>, vector<16x16xbf16>
    %cst = arith.constant dense<0.000000e+00> : vector<48x16xf32>
    %2 = tpu.matmul %0, %1, %cst {dimension_numbers = #tpu.dot_dimension_numbers<[1], [0], [0], [1], [0, 0, 1, 1], [], []>} : vector<48x16xbf16>, vector<16x16xbf16>, vector<48x16xf32> -> vector<48x16xf32>
    %c0_3 = arith.constant 0 : index
    %c0_4 = arith.constant 0 : index
    %3 = vector.load %arg3[%c0_3, %c0_4] : memref<48x16xf32, #tpu.memory_space<vmem>>, vector<48x16xf32>
    tpu.vector_store %arg3[%c0_3, %c0_4], %2 {strides = array<i32>} : memref<48x16xf32, #tpu.memory_space<vmem>>, vector<48x16xf32>,
    return
  }
  func.func @transform_0(%arg0: i32) -> (i32, i32) {
    %c0_i32 = arith.constant 0 : i32
    %c0_i32_0 = arith.constant 0 : i32
    %c0_i32_1 = arith.constant 0 : i32
    return %c0_i32, %c0_i32_0 : i32, i32
  }
  func.func @transform_1(%arg0: i32) -> (i32, i32) {
    %c0_i32 = arith.constant 0 : i32
    %c0_i32_0 = arith.constant 0 : i32
    return %c0_i32, %arg0 : i32, i32
  }
  func.func @transform_2(%arg0: i32) -> (i32, i32) {
    %c0_i32 = arith.constant 0 : i32
    %c0_i32_0 = arith.constant 0 : i32
    return %c0_i32, %arg0 : i32, i32
  }
}

module attributes {stable_mosaic.version = 11 : i64} {
  func.func @_proj_pool_kernel(%arg0: i32, %arg1: memref<2x12x32xbf16, #tpu.memory_space<vmem>>, %arg2: memref<2x12x12xf32, #tpu.memory_space<vmem>>) attributes {dimension_semantics = [#tpu.dimension_semantics<parallel>], iteration_bounds = array<i64: 1>, scalar_prefetch = 0 : i64, scratch_operands = 0 : i64, tpu.core_type = #tpu.core_type<tc>, window_params = [{transform_indices = @transform_0, window_bounds = array<i64: 2, 12, 32>}, {transform_indices = @transform_1, window_bounds = array<i64: 2, 12, 12>}]} {
    %c0 = arith.constant 0 : index
    %c0_0 = arith.constant 0 : index
    %c0_1 = arith.constant 0 : index
    %0 = vector.load %arg1[%c0, %c0_0, %c0_1] : memref<2x12x32xbf16, #tpu.memory_space<vmem>>, vector<2x12x32xbf16>
    "tpu.trace_start"() <{level = 10 : i32, message = "bik,bjk->bij"}> : () -> ()
    %cst = arith.constant dense<0.000000e+00> : vector<2x12x12xf32>
    %1 = tpu.matmul %0, %0, %cst {dimension_numbers = #tpu.dot_dimension_numbers<[2], [2], [1], [1], [0, 0, 0, 1, 1, 1], [0], [0]>} : vector<2x12x32xbf16>, vector<2x12x32xbf16>, vector<2x12x12xf32> -> vector<2x12x12xf32>
    "tpu.trace_stop"() : () -> ()
    %c0_2 = arith.constant 0 : index
    %c0_3 = arith.constant 0 : index
    %c0_4 = arith.constant 0 : index
    %2 = vector.load %arg2[%c0_2, %c0_3, %c0_4] : memref<2x12x12xf32, #tpu.memory_space<vmem>>, vector<2x12x12xf32>
    tpu.vector_store %arg2[%c0_2, %c0_3, %c0_4], %1 {strides = array<i32>} : memref<2x12x12xf32, #tpu.memory_space<vmem>>, vector<2x12x12xf32>,
    return
  }
  func.func @transform_0(%arg0: i32) -> (i32, i32, i32) {
    %c0_i32 = arith.constant 0 : i32
    %c0_i32_0 = arith.constant 0 : i32
    %c0_i32_1 = arith.constant 0 : i32
    return %arg0, %c0_i32, %c0_i32_0 : i32, i32, i32
  }
  func.func @transform_1(%arg0: i32) -> (i32, i32, i32) {
    %c0_i32 = arith.constant 0 : i32
    %c0_i32_0 = arith.constant 0 : i32
    %c0_i32_1 = arith.constant 0 : i32
    return %arg0, %c0_i32, %c0_i32_0 : i32, i32, i32
  }
}

module attributes {stable_mosaic.version = 11 : i64} {
  func.func @_head_kernel(%arg0: i32, %arg1: memref<2x12x8xf32, #tpu.memory_space<vmem>>, %arg2: memref<12x12x10xf32, #tpu.memory_space<vmem>>, %arg3: memref<1x10xf32, #tpu.memory_space<vmem>>, %arg4: memref<2x10xf32, #tpu.memory_space<vmem>>) attributes {dimension_semantics = [#tpu.dimension_semantics<parallel>], iteration_bounds = array<i64: 1>, scalar_prefetch = 0 : i64, scratch_operands = 0 : i64, tpu.core_type = #tpu.core_type<tc>, window_params = [{transform_indices = @transform_0, window_bounds = array<i64: 2, 12, 8>}, {pipeline_mode = #tpu.pipeline_mode<synchronous>, transform_indices = @transform_1, window_bounds = array<i64: 12, 12, 10>}, {pipeline_mode = #tpu.pipeline_mode<synchronous>, transform_indices = @transform_2, window_bounds = array<i64: 1, 10>}, {transform_indices = @transform_3, window_bounds = array<i64: 2, 10>}]} {
    %c0 = arith.constant 0 : index
    %c0_0 = arith.constant 0 : index
    %c0_1 = arith.constant 0 : index
    %0 = vector.load %arg1[%c0, %c0_0, %c0_1] : memref<2x12x8xf32, #tpu.memory_space<vmem>>, vector<2x12x8xf32>
    "tpu.trace_start"() <{level = 10 : i32, message = "biq,bjq->bij"}> : () -> ()
    %cst = arith.constant dense<0.000000e+00> : vector<2x12x12xf32>
    %1 = tpu.matmul %0, %0, %cst {dimension_numbers = #tpu.dot_dimension_numbers<[2], [2], [1], [1], [0, 0, 0, 1, 1, 1], [0], [0]>} : vector<2x12x8xf32>, vector<2x12x8xf32>, vector<2x12x12xf32> -> vector<2x12x12xf32>
    "tpu.trace_stop"() : () -> ()
    %2 = vector.extract_strided_slice %1 {offsets = [0, 0, 0], sizes = [2, 1, 12], strides = [1, 1, 1]} : vector<2x12x12xf32> to vector<2x1x12xf32>
    %3 = vector.shape_cast %2 : vector<2x1x12xf32> to vector<2x12xf32>
    %c0_2 = arith.constant 0 : index
    %c0_3 = arith.constant 0 : index
    %c0_4 = arith.constant 0 : index
    %4 = vector.load %arg2[%c0_2, %c0_3, %c0_4] : memref<12x12x10xf32, #tpu.memory_space<vmem>>, vector<1x12x10xf32>
    %5 = vector.shape_cast %4 : vector<1x12x10xf32> to vector<12x10xf32>
    %cst_5 = arith.constant dense<0.000000e+00> : vector<2x10xf32>
    %6 = tpu.matmul %3, %5, %cst_5 {dimension_numbers = #tpu.dot_dimension_numbers<[1], [0], [0], [1], [0, 0, 1, 1], [], []>} : vector<2x12xf32>, vector<12x10xf32>, vector<2x10xf32> -> vector<2x10xf32>
    %7 = vector.extract_strided_slice %1 {offsets = [0, 1, 0], sizes = [2, 1, 12], strides = [1, 1, 1]} : vector<2x12x12xf32> to vector<2x1x12xf32>
    %8 = vector.shape_cast %7 : vector<2x1x12xf32> to vector<2x12xf32>
    %c1 = arith.constant 1 : index
    %c0_6 = arith.constant 0 : index
    %c0_7 = arith.constant 0 : index
    %9 = vector.load %arg2[%c1, %c0_6, %c0_7] : memref<12x12x10xf32, #tpu.memory_space<vmem>>, vector<1x12x10xf32>
    %10 = vector.shape_cast %9 : vector<1x12x10xf32> to vector<12x10xf32>
    %cst_8 = arith.constant dense<0.000000e+00> : vector<2x10xf32>
    %11 = tpu.matmul %8, %10, %cst_8 {dimension_numbers = #tpu.dot_dimension_numbers<[1], [0], [0], [1], [0, 0, 1, 1], [], []>} : vector<2x12xf32>, vector<12x10xf32>, vector<2x10xf32> -> vector<2x10xf32>
    %12 = arith.addf %6, %11 : vector<2x10xf32>
    %13 = vector.extract_strided_slice %1 {offsets = [0, 2, 0], sizes = [2, 1, 12], strides = [1, 1, 1]} : vector<2x12x12xf32> to vector<2x1x12xf32>
    %14 = vector.shape_cast %13 : vector<2x1x12xf32> to vector<2x12xf32>
    %c2 = arith.constant 2 : index
    %c0_9 = arith.constant 0 : index
    %c0_10 = arith.constant 0 : index
    %15 = vector.load %arg2[%c2, %c0_9, %c0_10] : memref<12x12x10xf32, #tpu.memory_space<vmem>>, vector<1x12x10xf32>
    %16 = vector.shape_cast %15 : vector<1x12x10xf32> to vector<12x10xf32>
    %cst_11 = arith.constant dense<0.000000e+00> : vector<2x10xf32>
    %17 = tpu.matmul %14, %16, %cst_11 {dimension_numbers = #tpu.dot_dimension_numbers<[1], [0], [0], [1], [0, 0, 1, 1], [], []>} : vector<2x12xf32>, vector<12x10xf32>, vector<2x10xf32> -> vector<2x10xf32>
    %18 = arith.addf %12, %17 : vector<2x10xf32>
    %19 = vector.extract_strided_slice %1 {offsets = [0, 3, 0], sizes = [2, 1, 12], strides = [1, 1, 1]} : vector<2x12x12xf32> to vector<2x1x12xf32>
    %20 = vector.shape_cast %19 : vector<2x1x12xf32> to vector<2x12xf32>
    %c3 = arith.constant 3 : index
    %c0_12 = arith.constant 0 : index
    %c0_13 = arith.constant 0 : index
    %21 = vector.load %arg2[%c3, %c0_12, %c0_13] : memref<12x12x10xf32, #tpu.memory_space<vmem>>, vector<1x12x10xf32>
    %22 = vector.shape_cast %21 : vector<1x12x10xf32> to vector<12x10xf32>
    %cst_14 = arith.constant dense<0.000000e+00> : vector<2x10xf32>
    %23 = tpu.matmul %20, %22, %cst_14 {dimension_numbers = #tpu.dot_dimension_numbers<[1], [0], [0], [1], [0, 0, 1, 1], [], []>} : vector<2x12xf32>, vector<12x10xf32>, vector<2x10xf32> -> vector<2x10xf32>
    %24 = arith.addf %18, %23 : vector<2x10xf32>
    %25 = vector.extract_strided_slice %1 {offsets = [0, 4, 0], sizes = [2, 1, 12], strides = [1, 1, 1]} : vector<2x12x12xf32> to vector<2x1x12xf32>
    %26 = vector.shape_cast %25 : vector<2x1x12xf32> to vector<2x12xf32>
    %c4 = arith.constant 4 : index
    %c0_15 = arith.constant 0 : index
    %c0_16 = arith.constant 0 : index
    %27 = vector.load %arg2[%c4, %c0_15, %c0_16] : memref<12x12x10xf32, #tpu.memory_space<vmem>>, vector<1x12x10xf32>
    %28 = vector.shape_cast %27 : vector<1x12x10xf32> to vector<12x10xf32>
    %cst_17 = arith.constant dense<0.000000e+00> : vector<2x10xf32>
    %29 = tpu.matmul %26, %28, %cst_17 {dimension_numbers = #tpu.dot_dimension_numbers<[1], [0], [0], [1], [0, 0, 1, 1], [], []>} : vector<2x12xf32>, vector<12x10xf32>, vector<2x10xf32> -> vector<2x10xf32>
    %30 = arith.addf %24, %29 : vector<2x10xf32>
    %31 = vector.extract_strided_slice %1 {offsets = [0, 5, 0], sizes = [2, 1, 12], strides = [1, 1, 1]} : vector<2x12x12xf32> to vector<2x1x12xf32>
    %32 = vector.shape_cast %31 : vector<2x1x12xf32> to vector<2x12xf32>
    %c5 = arith.constant 5 : index
    %c0_18 = arith.constant 0 : index
    %c0_19 = arith.constant 0 : index
    %33 = vector.load %arg2[%c5, %c0_18, %c0_19] : memref<12x12x10xf32, #tpu.memory_space<vmem>>, vector<1x12x10xf32>
    %34 = vector.shape_cast %33 : vector<1x12x10xf32> to vector<12x10xf32>
    %cst_20 = arith.constant dense<0.000000e+00> : vector<2x10xf32>
    %35 = tpu.matmul %32, %34, %cst_20 {dimension_numbers = #tpu.dot_dimension_numbers<[1], [0], [0], [1], [0, 0, 1, 1], [], []>} : vector<2x12xf32>, vector<12x10xf32>, vector<2x10xf32> -> vector<2x10xf32>
    %36 = arith.addf %30, %35 : vector<2x10xf32>
    %37 = vector.extract_strided_slice %1 {offsets = [0, 6, 0], sizes = [2, 1, 12], strides = [1, 1, 1]} : vector<2x12x12xf32> to vector<2x1x12xf32>
    %38 = vector.shape_cast %37 : vector<2x1x12xf32> to vector<2x12xf32>
    %c6 = arith.constant 6 : index
    %c0_21 = arith.constant 0 : index
    %c0_22 = arith.constant 0 : index
    %39 = vector.load %arg2[%c6, %c0_21, %c0_22] : memref<12x12x10xf32, #tpu.memory_space<vmem>>, vector<1x12x10xf32>
    %40 = vector.shape_cast %39 : vector<1x12x10xf32> to vector<12x10xf32>
    %cst_23 = arith.constant dense<0.000000e+00> : vector<2x10xf32>
    %41 = tpu.matmul %38, %40, %cst_23 {dimension_numbers = #tpu.dot_dimension_numbers<[1], [0], [0], [1], [0, 0, 1, 1], [], []>} : vector<2x12xf32>, vector<12x10xf32>, vector<2x10xf32> -> vector<2x10xf32>
    %42 = arith.addf %36, %41 : vector<2x10xf32>
    %43 = vector.extract_strided_slice %1 {offsets = [0, 7, 0], sizes = [2, 1, 12], strides = [1, 1, 1]} : vector<2x12x12xf32> to vector<2x1x12xf32>
    %44 = vector.shape_cast %43 : vector<2x1x12xf32> to vector<2x12xf32>
    %c7 = arith.constant 7 : index
    %c0_24 = arith.constant 0 : index
    %c0_25 = arith.constant 0 : index
    %45 = vector.load %arg2[%c7, %c0_24, %c0_25] : memref<12x12x10xf32, #tpu.memory_space<vmem>>, vector<1x12x10xf32>
    %46 = vector.shape_cast %45 : vector<1x12x10xf32> to vector<12x10xf32>
    %cst_26 = arith.constant dense<0.000000e+00> : vector<2x10xf32>
    %47 = tpu.matmul %44, %46, %cst_26 {dimension_numbers = #tpu.dot_dimension_numbers<[1], [0], [0], [1], [0, 0, 1, 1], [], []>} : vector<2x12xf32>, vector<12x10xf32>, vector<2x10xf32> -> vector<2x10xf32>
    %48 = arith.addf %42, %47 : vector<2x10xf32>
    %49 = vector.extract_strided_slice %1 {offsets = [0, 8, 0], sizes = [2, 1, 12], strides = [1, 1, 1]} : vector<2x12x12xf32> to vector<2x1x12xf32>
    %50 = vector.shape_cast %49 : vector<2x1x12xf32> to vector<2x12xf32>
    %c8 = arith.constant 8 : index
    %c0_27 = arith.constant 0 : index
    %c0_28 = arith.constant 0 : index
    %51 = vector.load %arg2[%c8, %c0_27, %c0_28] : memref<12x12x10xf32, #tpu.memory_space<vmem>>, vector<1x12x10xf32>
    %52 = vector.shape_cast %51 : vector<1x12x10xf32> to vector<12x10xf32>
    %cst_29 = arith.constant dense<0.000000e+00> : vector<2x10xf32>
    %53 = tpu.matmul %50, %52, %cst_29 {dimension_numbers = #tpu.dot_dimension_numbers<[1], [0], [0], [1], [0, 0, 1, 1], [], []>} : vector<2x12xf32>, vector<12x10xf32>, vector<2x10xf32> -> vector<2x10xf32>
    %54 = arith.addf %48, %53 : vector<2x10xf32>
    %55 = vector.extract_strided_slice %1 {offsets = [0, 9, 0], sizes = [2, 1, 12], strides = [1, 1, 1]} : vector<2x12x12xf32> to vector<2x1x12xf32>
    %56 = vector.shape_cast %55 : vector<2x1x12xf32> to vector<2x12xf32>
    %c9 = arith.constant 9 : index
    %c0_30 = arith.constant 0 : index
    %c0_31 = arith.constant 0 : index
    %57 = vector.load %arg2[%c9, %c0_30, %c0_31] : memref<12x12x10xf32, #tpu.memory_space<vmem>>, vector<1x12x10xf32>
    %58 = vector.shape_cast %57 : vector<1x12x10xf32> to vector<12x10xf32>
    %cst_32 = arith.constant dense<0.000000e+00> : vector<2x10xf32>
    %59 = tpu.matmul %56, %58, %cst_32 {dimension_numbers = #tpu.dot_dimension_numbers<[1], [0], [0], [1], [0, 0, 1, 1], [], []>} : vector<2x12xf32>, vector<12x10xf32>, vector<2x10xf32> -> vector<2x10xf32>
    %60 = arith.addf %54, %59 : vector<2x10xf32>
    %61 = vector.extract_strided_slice %1 {offsets = [0, 10, 0], sizes = [2, 1, 12], strides = [1, 1, 1]} : vector<2x12x12xf32> to vector<2x1x12xf32>
    %62 = vector.shape_cast %61 : vector<2x1x12xf32> to vector<2x12xf32>
    %c10 = arith.constant 10 : index
    %c0_33 = arith.constant 0 : index
    %c0_34 = arith.constant 0 : index
    %63 = vector.load %arg2[%c10, %c0_33, %c0_34] : memref<12x12x10xf32, #tpu.memory_space<vmem>>, vector<1x12x10xf32>
    %64 = vector.shape_cast %63 : vector<1x12x10xf32> to vector<12x10xf32>
    %cst_35 = arith.constant dense<0.000000e+00> : vector<2x10xf32>
    %65 = tpu.matmul %62, %64, %cst_35 {dimension_numbers = #tpu.dot_dimension_numbers<[1], [0], [0], [1], [0, 0, 1, 1], [], []>} : vector<2x12xf32>, vector<12x10xf32>, vector<2x10xf32> -> vector<2x10xf32>
    %66 = arith.addf %60, %65 : vector<2x10xf32>
    %67 = vector.extract_strided_slice %1 {offsets = [0, 11, 0], sizes = [2, 1, 12], strides = [1, 1, 1]} : vector<2x12x12xf32> to vector<2x1x12xf32>
    %68 = vector.shape_cast %67 : vector<2x1x12xf32> to vector<2x12xf32>
    %c11 = arith.constant 11 : index
    %c0_36 = arith.constant 0 : index
    %c0_37 = arith.constant 0 : index
    %69 = vector.load %arg2[%c11, %c0_36, %c0_37] : memref<12x12x10xf32, #tpu.memory_space<vmem>>, vector<1x12x10xf32>
    %70 = vector.shape_cast %69 : vector<1x12x10xf32> to vector<12x10xf32>
    %cst_38 = arith.constant dense<0.000000e+00> : vector<2x10xf32>
    %71 = tpu.matmul %68, %70, %cst_38 {dimension_numbers = #tpu.dot_dimension_numbers<[1], [0], [0], [1], [0, 0, 1, 1], [], []>} : vector<2x12xf32>, vector<12x10xf32>, vector<2x10xf32> -> vector<2x10xf32>
    %72 = arith.addf %66, %71 : vector<2x10xf32>
    %c0_39 = arith.constant 0 : index
    %c0_40 = arith.constant 0 : index
    %73 = vector.load %arg3[%c0_39, %c0_40] : memref<1x10xf32, #tpu.memory_space<vmem>>, vector<1x10xf32>
    %74 = vector.broadcast %73 : vector<1x10xf32> to vector<2x10xf32>
    %75 = arith.addf %72, %74 : vector<2x10xf32>
    %cst_41 = arith.constant dense<0xFF800000> : vector<2xf32>
    %76 = vector.multi_reduction <maximumf>, %75, %cst_41 [1] : vector<2x10xf32> to vector<2xf32>
    %77 = vector.shape_cast %76 : vector<2xf32> to vector<2x1xf32>
    %78 = vector.broadcast %77 : vector<2x1xf32> to vector<2x10xf32>
    %79 = arith.subf %75, %78 : vector<2x10xf32>
    %80 = math.exp %79 : vector<2x10xf32>
    %cst_42 = arith.constant dense<0.000000e+00> : vector<2xf32>
    %81 = vector.multi_reduction <add>, %80, %cst_42 [1] : vector<2x10xf32> to vector<2xf32>
    %82 = vector.shape_cast %81 : vector<2xf32> to vector<2x1xf32>
    %83 = math.log %82 : vector<2x1xf32>
    %84 = vector.broadcast %83 : vector<2x1xf32> to vector<2x10xf32>
    %85 = arith.subf %79, %84 : vector<2x10xf32>
    %c0_43 = arith.constant 0 : index
    %c0_44 = arith.constant 0 : index
    %86 = vector.load %arg4[%c0_43, %c0_44] : memref<2x10xf32, #tpu.memory_space<vmem>>, vector<2x10xf32>
    tpu.vector_store %arg4[%c0_43, %c0_44], %85 {strides = array<i32>} : memref<2x10xf32, #tpu.memory_space<vmem>>, vector<2x10xf32>,
    return
  }
  func.func @transform_0(%arg0: i32) -> (i32, i32, i32) {
    %c0_i32 = arith.constant 0 : i32
    %c0_i32_0 = arith.constant 0 : i32
    %c0_i32_1 = arith.constant 0 : i32
    return %arg0, %c0_i32, %c0_i32_0 : i32, i32, i32
  }
  func.func @transform_1(%arg0: i32) -> (i32, i32, i32) {
    %c0_i32 = arith.constant 0 : i32
    %c0_i32_0 = arith.constant 0 : i32
    %c0_i32_1 = arith.constant 0 : i32
    %c0_i32_2 = arith.constant 0 : i32
    return %c0_i32, %c0_i32_0, %c0_i32_1 : i32, i32, i32
  }
  func.func @transform_2(%arg0: i32) -> (i32, i32) {
    %c0_i32 = arith.constant 0 : i32
    %c0_i32_0 = arith.constant 0 : i32
    %c0_i32_1 = arith.constant 0 : i32
    return %c0_i32, %c0_i32_0 : i32, i32
  }
  func.func @transform_3(%arg0: i32) -> (i32, i32) {
    %c0_i32 = arith.constant 0 : i32
    %c0_i32_0 = arith.constant 0 : i32
    return %arg0, %c0_i32 : i32, i32
  }
}

</mosaic_0001>

<llo_original>
// kernel: custom-call.8
$region0: #{custom-call.8}
  %s0 = inlined_call_operand.vmem [shape: f32[2,4,12,8], index: 0, kind: input, shape index: {}]
  %s1 = inlined_call_operand.vmem [shape: f32[2,4,12,8], index: 1, kind: output, shape index: {0}]
  %s2 = inlined_call_operand.vmem [shape: f32[2,4,8], index: 2, kind: output, shape index: {1}]
  %3 = xla_tuple %s1, %s2
  $region1: #{custom-call.8} parent=0
    #allocation0 [shape = 'u8[16384]{0}', space=vmem, size = 0x4000, scoped, tag = 'operand span for operand 0']
    #allocation1 [shape = 'u8[16384]{0}', space=vmem, size = 0x4000, scoped, tag = 'operand span for operand 1']
    #allocation2 [shape = 'u8[4096]{0}', space=vmem, size = 0x1000, scoped, tag = 'operand span for operand 2']
    #allocation3 [shape = 'u8[4096]{0}', space=vmem, size = 0x1000, scoped, tag = 'packed  for operand 2']
    loop: start=0, step=1, limit=10
    $region2: #{custom-call.8} parent=1 // loop_pre_header
      _
    $region3: #{custom-call.8} parent=1 // loop_header
      %s5 = sphi 0, %s9
      %p6 = scmp.ge.s32.totalorder %s5, 10
      %s12 = sphi 0, %s38
      %s13 = sphi 0, %s34
      %s14 = sphi 0, %s30
      %s15 = sphi 0, %s26
      %s16 = sphi 0, %s12
      %s17 = sphi 0, %s13
      %s18 = sphi 0, %s14
      %s19 = sphi 0, %s15
      %s20 = sphi 0, %s16
      %s21 = sphi 0, %s17
      %s22 = sphi 0, %s18
      %s23 = sphi 0, %s19
      %s55 = sphi 0, %s57
      %s58 = sphi 0, %s55
      %s59 = sphi 0, %s58
      %s75 = sphi 0, %s59
    $region4: #{custom-call.8} parent=1 // loop_header_branch
      %8 = sbr.rel (%p6) target = $region8
    $region5: #{custom-call.8} parent=1 // loop_body
      %s10 = ssub.s32 %s5, 1
      %s11 = ssub.s32 %s5, 2
      %s24 = sadd.s32 1, %s15
      %p25 = scmp.ge.s32.totalorder %s24, 1
      %s26 = scalar_select %p25, 0, %s24
      %s27 = sadd.s32 1, %s14
      %s28 = scalar_select %p25, %s27, %s14
      %p29 = scmp.ge.s32.totalorder %s28, 1
      %s30 = scalar_select %p29, 0, %s28
      %s31 = sadd.s32 1, %s13
      %s32 = scalar_select %p29, %s31, %s13
      %p33 = scmp.ge.s32.totalorder %s32, 4
      %s34 = scalar_select %p33, 0, %s32
      %s35 = sadd.s32 1, %s12
      %s36 = scalar_select %p33, %s35, %s12
      %p37 = scmp.ge.s32.totalorder %s36, 2
      %s38 = scalar_select %p37, 0, %s36
      %p39 = scmp.lt.s32.totalorder %s13, 0
      %s40 = ssub.s32 0, %s13
      %s41 = scalar_select %p39, %s40, %s13
      %s42 = sshrl.u32 %s41, 3
      %s43 = ssub.s32 0, %s42
      %s44 = scalar_select %p39, %s43, %s42
      %p45 = scmp.lt.s32.totalorder %s34, 0
      %s46 = ssub.s32 0, %s34
      %s47 = scalar_select %p45, %s46, %s34
      %s48 = sshrl.u32 %s47, 3
      %s49 = ssub.s32 0, %s48
      %s50 = scalar_select %p45, %s49, %s48
      %s51 = ssub.s32 %s12, %s38
      %s52 = ssub.s32 %s44, %s50
      %s53 = sor.u32 %s51, %s52
      %p54 = scmp.eq.s32.totalorder %s53, 0
      %s56 = sadd.s32 %s55, 1
      %s57 = scalar_select %p54, %s55, %s56
      %p60 = pneg %p54
      %p61 = scmp.eq.s32.totalorder %s5, 7
      %p62 = por %p60, %p61
      %p63 = scmp.ne.s32.totalorder %s55, %s58
      %p64 = scmp.eq.s32.totalorder %s5, 0
      %p65 = por %p63, %p64
      %p66 = scmp.ne.s32.totalorder %s55, %s58
      %p67 = scmp.eq.s32.totalorder %s10, 7
      %p68 = por %p66, %p67
      %p69 = scmp.ne.s32.totalorder %s58, %s59
      %p70 = scmp.eq.s32.totalorder %s10, 0
      %p71 = por %p69, %p70
      %p72 = scmp.ne.s32.totalorder %s58, %s59
      %p73 = scmp.eq.s32.totalorder %s11, 7
      %p74 = por %p72, %p73
      %p76 = scmp.ne.s32.totalorder %s59, %s75
      %p77 = scmp.eq.s32.totalorder %s11, 0
      %p78 = por %p76, %p77
      %p79 = scmp.le.s32.totalorder 1, %s5
      %p80 = scmp.lt.s32.totalorder %s5, 9
      %p81 = pnand %p79, %p80
      %p82 = pneg %p81
      // Predicated region
      $region9: #{custom-call.8} parent=5 // pred_check
        _
      $region10: #{custom-call.8} parent=5 // pred_check_branch
        %84 = sbr.rel (%p81) target = $region12
      $region11: #{custom-call.8} parent=5 // pred_region
        %s85 = ssub.s32 %s5, 1
      $region12: #{custom-call.8} parent=5 // pred_fallthru
        _
      %p86 = scmp.lt.s32.totalorder %s5, 8
      // Predicated region
      $region13: #{custom-call.8} parent=5 // pred_check
        %p87 = pneg %p86
      $region14: #{custom-call.8} parent=5 // pred_check_branch
        %89 = sbr.rel (%p87) target = $region16
      $region15: #{custom-call.8} parent=5 // pred_region
        %s90 = sand.u32 %s5, 1
        %s91 = sand.u32 %s5, 1
        %s92 = smul.addr %s91, 16
        %s93 = scalar_lea.vmem [#allocation0], %s92
        %s94 = smul.u32 2, %s14
        %s95 = sadd.s32 %s15, %s94
        %s96 = smul.addr %s13, 2
        %s97 = sadd.s32 %s95, %s96
        %s98 = smul.addr %s12, 8
        %s99 = sadd.s32 %s97, %s98
        %s100 = smul.addr %s99, 8
        %s101 = scalar_lea.vmem %s0, %s100
        // Predicated region
        $region17: #{custom-call.8} parent=15 // pred_check
          _
        $region18: #{custom-call.8} parent=15 // pred_check_branch
          %103 = sbr.rel (0) target = $region20
        $region19: #{custom-call.8} parent=15 // pred_region
          // Predicated region
          $region21: #{custom-call.8} parent=19 // pred_check
            _
          $region22: #{custom-call.8} parent=19 // pred_check_branch
            %105 = sbr.rel (0) target = $region24
          $region23: #{custom-call.8} parent=19 // pred_region
            // Predicated region
            $region36: #{custom-call.8} parent=23 // pred_check
              _
            $region37: #{custom-call.8} parent=23 // pred_check_branch
              %123 = sbr.rel (0) target = $region39
            $region38: #{custom-call.8} parent=23 // pred_region
              loop: start=0, step=1, limit=1
              $region40: #{custom-call.8} parent=38 // loop_pre_header
                _
              $region41: #{custom-call.8} parent=38 // loop_header
                %s125 = sphi 0, %s129
                %p126 = scmp.ge.s32.totalorder %s125, 1
                %s130 = sphi %s101, %s101
                %s131 = sphi %s93, %s93
              $region42: #{custom-call.8} parent=38 // loop_header_branch
                %128 = sbr.rel (%p126) target = $region46
              $region43: #{custom-call.8} parent=38 // loop_body
                %v132 = vld [vmem:[%s130] sm:$0xff]
                %133 = vst [vmem:[%s131] sm:$0xff] %v132
                %v134 = vld [vmem:[%s130 + $0x8] sm:$0xff]
                %135 = vst [vmem:[%s131 + $0x8] sm:$0xff] %v134
              $region44: #{custom-call.8} parent=38 // loop_footer
                %s129 = sadd.s32 1, %s125
              $region45: #{custom-call.8} parent=38 // loop_footer_branch
                %124 = sbr.rel target = $region41
              $region46: #{custom-call.8} parent=38 // loop_exit
                _
            $region39: #{custom-call.8} parent=23 // pred_fallthru
              _
            // Predicated region
            $region47: #{custom-call.8} parent=23 // pred_check
              _
            $region48: #{custom-call.8} parent=23 // pred_check_branch
              %137 = sbr.rel target = $region50
            $region49: #{custom-call.8} parent=23 // pred_region
              _
            $region50: #{custom-call.8} parent=23 // pred_fallthru
              _
          $region24: #{custom-call.8} parent=19 // pred_fallthru
            _
          // Predicated region
          $region25: #{custom-call.8} parent=19 // pred_check
            _
          $region26: #{custom-call.8} parent=19 // pred_check_branch
            %107 = sbr.rel target = $region28
          $region27: #{custom-call.8} parent=19 // pred_region
            %s109 = ssub.s32 256, 1
            loop: start=0, step=1, limit=1
            $region29: #{custom-call.8} parent=27 // loop_pre_header
              _
            $region30: #{custom-call.8} parent=27 // loop_header
              %s111 = sphi 0, %s115
              %p112 = scmp.ge.s32.totalorder %s111, 1
              %s116 = sphi %s101, %s101
              %s117 = sphi %s93, %s93
            $region31: #{custom-call.8} parent=27 // loop_header_branch
              %114 = sbr.rel (%p112) target = $region35
            $region32: #{custom-call.8} parent=27 // loop_body
              %v118 = vld [vmem:[%s116] sm:%s109]
              %119 = vst [vmem:[%s117] sm:%s109] %v118
              %v120 = vld [vmem:[%s116 + $0x8] sm:%s109]
              %121 = vst [vmem:[%s117 + $0x8] sm:%s109] %v120
            $region33: #{custom-call.8} parent=27 // loop_footer
              %s115 = sadd.s32 1, %s111
            $region34: #{custom-call.8} parent=27 // loop_footer_branch
              %110 = sbr.rel target = $region30
            $region35: #{custom-call.8} parent=27 // loop_exit
              _
          $region28: #{custom-call.8} parent=19 // pred_fallthru
            _
        $region20: #{custom-call.8} parent=15 // pred_fallthru
          _
        %138 = vnop
      $region16: #{custom-call.8} parent=5 // pred_fallthru
        _
      %p139 = scmp.le.s32.totalorder 1, %s5
      %p140 = scmp.lt.s32.totalorder %s5, 9
      %p141 = pnand %p139, %p140
      %p142 = pneg %p141
      // Predicated region
      $region51: #{custom-call.8} parent=5 // pred_check
        _
      $region52: #{custom-call.8} parent=5 // pred_check_branch
        %144 = sbr.rel (%p141) target = $region54
      $region53: #{custom-call.8} parent=5 // pred_region
        #allocation4 [shape = 'f32[12,128]{1,0}', space=vmem, size = 0x2000, scoped, tag = 'scratch for Householder reflectors']
        %s145 = ssub.s32 %s5, 1
        %s146 = sand.u32 %s10, 1
        %s147 = sand.u32 %s10, 1
        %s148 = smul.addr %s147, 16
        %s149 = scalar_lea.vmem [#allocation0], %s148
        %s150 = sand.u32 %s10, 1
        %s151 = sand.u32 %s10, 1
        %s152 = smul.addr %s151, 16
        %s153 = scalar_lea.vmem [#allocation0], %s152
        %s154 = sand.u32 %s10, 1
        %s155 = sand.u32 %s10, 1
        %s156 = smul.addr %s155, 16
        %s157 = scalar_lea.vmem [#allocation1], %s156
        %p158 = pneg %p71
        %p159 = pneg %p68
        %s160 = sand.u32 %s58, 1
        %s161 = sand.u32 %s58, 1
        %s162 = smul.addr %s161, 4
        %s163 = scalar_lea.vmem [#allocation3], %s162
        %s164 = smul.u32 2, %s18
        %s165 = smul.u32 2, %s18
        %p166 = scmp.lt.s32.totalorder %s17, 0
        %s167 = ssub.s32 0, %s17
        %s168 = scalar_select %p166, %s167, %s17
        %s169 = sshrl.u32 %s168, 3
        %s170 = ssub.s32 0, %s169
        %s171 = scalar_select %p166, %s170, %s169
        %s172 = sand.u32 %s17, 7
        %s173 = scalar_lea.vmem [#allocation2], %s172
        %v174 = vld [vmem:[%s149] sm:$0xff]
        %175 = vst [vmem:[%s157] sm:$0xff] %v174
        %s176 = scalar_lea.vmem %s157, 8 [#allocation1]
        %s177 = scalar_lea.vmem %s149, 8 [#allocation0]
        %v178 = vld [vmem:[%s177] sm:$0xff]
        %179 = vst [vmem:[%s176] sm:$0xff] %v178
        %180 = vst [vmem:[%s173] sm:$0x1] 0.0
        loop: start=0, step=1, limit=8
        $region55: #{custom-call.8} parent=53 // loop_pre_header
          _
        $region56: #{custom-call.8} parent=53 // loop_header
          %s182 = sphi 0, %s186
          %p183 = scmp.ge.s32.totalorder %s182, 8
        $region57: #{custom-call.8} parent=53 // loop_header_branch
          %185 = sbr.rel (%p183) target = $region61
        $region58: #{custom-call.8} parent=53 // loop_body
          %v187 = vld [vmem:[%s157] sm:$0xff]
          %v188 = vlaneseq
          %v189 = vshrl.u32 %v188, 7
          %v191 = vstv %s182
          %vm192 = vcmp.gt.s32.totalorder %v189, %v191
          %v193 = vsel %vm192, %v187, 0.0
          %v194 = vmul.f32 %v193, %v193
          %s195 = scalar_lea.vmem %s157, 8 [#allocation1]
          %v196 = vld [vmem:[%s195] sm:$0xff]
          %v197 = vlaneseq
          %v198 = vshrl.u32 %v197, 7
          %v199 = vadd.s32 %v198, 8
          %v200 = vstv %s182
          %vm201 = vcmp.gt.s32.totalorder %v199, %v200
          %vm202 = vcmp.lt.s32.totalorder %v199, 12
          %vm203 = vmand %vm201, %vm202
          %v204 = vsel %vm203, %v196, 0.0
          %v205 = vmul.f32 %v204, %v204
          %v206 = vadd.f32 %v194, %v205
          %v207 = vrot.slane %v206, 4
          %v208 = vadd.f32 %v206, %v207
          %v209 = vrot.slane %v208, 2
          %v210 = vadd.f32 %v208, %v209
          %v211 = vrot.slane %v210, 1
          %v212 = vadd.f32 %v210, %v211
          %v213 = vrsqrt.pop %v212
          %v214 = vmul.f32 %v212, %v213
          %vm215 = vcmp.eq.f32.partialorder %v212, inf
          %v216 = vsel %vm215, %v212, %v214
          %vm217 = vcmp.eq.f32.partialorder %v212, 0.0
          %v218 = vand.u32 %v212, 2147483648
          %v219 = vsel %vm217, %v218, %v216
          %vm220 = vcmp.eq.f32.partialorder %v212, 0.0
          %s221 = sshrl.u32 %s182, 3
          %s222 = sand.u32 %s182, 7
          %s223 = smul.addr %s221, 8
          %s224 = sadd.s32 %s222, %s223
          %s225 = scalar_lea.vmem %s157, %s224 [#allocation1]
          %v226 = vld [vmem:[%s225] ss:$0 sm:$0xff]
          %v227 = vand.u32 2147483647, %v226
          %v228 = vmax.f32 %v227, 0.0
          %v229 = vand.u32 2147483647, %v219
          %v230 = vmax.f32 %v228, %v229
          %v231 = vrcp.pop %v230
          %v232 = vmul.f32 %v227, %v231
          %v233 = vmul.f32 %v232, %v232
          %v234 = vrcp.pop %v230
          %v235 = vmul.f32 0.0, %v234
          %v236 = vmul.f32 %v235, %v235
          %v237 = vadd.f32 %v233, %v236
          %v238 = vrcp.pop %v230
          %v239 = vmul.f32 %v229, %v238
          %v240 = vmul.f32 %v239, %v239
          %v241 = vadd.f32 %v237, %v240
          %vm242 = vcmp.eq.f32.partialorder %v230, 0.0
          %v243 = vrsqrt.pop %v241
          %v244 = vmul.f32 %v241, %v243
          %vm245 = vcmp.eq.f32.partialorder %v241, inf
          %v246 = vsel %vm245, %v241, %v244
          %vm247 = vcmp.eq.f32.partialorder %v241, 0.0
          %v248 = vand.u32 %v241, 2147483648
          %v249 = vsel %vm247, %v248, %v246
          %v250 = vmul.f32 %v230, %v249
          %v251 = vsel %vm242, 0.0, %v250
          %vm252 = vcmp.lt.f32.partialorder %v226, 0.0
          %v253 = vxor.u32 %v251, 2147483648
          %v254 = vsel %vm252, %v251, %v253
          %v255 = vsub.f32 %v254, %v226
          %v256 = vrcp.pop %v254
          %v257 = vmul.f32 %v255, %v256
          %v258 = vsel %vm220, %v226, %v254
          %v259 = vsel %vm220, 0.0, %v257
          %v260 = vsub.f32 %v226, %v258
          %s261 = smov %s157
          %v262 = vlaneseq
          %v263 = vshrl.u32 %v262, 7
          %v264 = vmov %v263
          %v265 = vld [vmem:[%s261] sm:$0xff]
          %v267 = vstv %s182
          %vm268 = vcmp.gt.s32.totalorder %v264, %v267
          %v269 = vsel %vm268, %v265, 0.0
          %v270 = vrcp.pop %v260
          %v271 = vmul.f32 %v269, %v270
          %v272 = vsel %vm220, 0.0, %v271
          %v273 = vstv %s182
          %v274 = vlaneseq
          %v275 = vand.u32 %v274, 127
          %vm276 = vcmp.eq.s32.totalorder %v275, %v273
          %v277 = vsel %vm276, %v272, 0.0
          %278 = vadd.xlane.f32.xlu0 %v277
          %v279 = vpop.xlane.xlu0 %278
          %280 = vst [vmem:[#allocation4] sm:$0xff] %v279
          %s281 = scalar_lea.vmem %s261, 8
          %v282 = vld [vmem:[%s281] sm:$0xff]
          %v283 = vadd.s32 %v264, 8
          %v284 = vstv %s182
          %vm285 = vcmp.gt.s32.totalorder %v283, %v284
          %vm286 = vcmp.lt.s32.totalorder %v283, 12
          %vm287 = vmand %vm285, %vm286
          %v288 = vsel %vm287, %v282, 0.0
          %v289 = vrcp.pop %v260
          %v290 = vmul.f32 %v288, %v289
          %v291 = vsel %vm220, 0.0, %v290
          %v292 = vstv %s182
          %v293 = vlaneseq
          %v294 = vand.u32 %v293, 127
          %vm295 = vcmp.eq.s32.totalorder %v294, %v292
          %v296 = vsel %vm295, %v291, 0.0
          %297 = vadd.xlane.f32.xlu0 %v296
          %v298 = vpop.xlane.xlu0 %297
          %s299 = scalar_lea.vmem [#allocation4], 8
          %300 = vst [vmem:[%s299] sm:$0xff] %v298
          %s301 = scalar_lea.vmem [#allocation4], %s182
          %302 = vst [vmem:[%s301] sm:$0x1] 1.0
          %v303 = vstv %s182
          %v304 = vlaneseq
          %v305 = vand.u32 %v304, 127
          %vm306 = vcmp.eq.s32.totalorder %v305, %v303
          %v307 = vsel %vm306, %v259, 0.0
          %308 = vadd.xlane.f32.xlu0 %v307
          %v309 = vpop.xlane.xlu0 %308
          %v310 = vstv %s182
          %v311 = vlaneseq
          %v312 = vand.u32 %v311, 127
          %vm313 = vcmp.eq.s32.totalorder %v312, %v310
          %v314 = vld [vmem:[%s173] ss:$0 sm:$0xff]
          %v315 = vsel %vm313, %v309, %v314
          %316 = vst [vmem:[%s173] sm:$0x1] %v315
          %s317 = smov %s157
          %s318 = smov [#allocation4]
          %v319 = vlaneseq
          %v320 = vshrl.u32 %v319, 7
          %v321 = vmov %v320
          %v323 = vld [vmem:[%s318] sm:$0xff]
          %v324 = vld [vmem:[%s317] sm:$0xff]
          %v325 = vmul.f32 %v323, %v324
          %v326 = vadd.s32 %v321, 8
          %s327 = scalar_lea.vmem %s318, 8
          %v328 = vld [vmem:[%s327] sm:$0xff]
          %s329 = scalar_lea.vmem %s317, 8
          %v330 = vld [vmem:[%s329] sm:$0xff]
          %v331 = vmul.f32 %v328, %v330
          %vm332 = vcmp.lt.s32.totalorder %v326, 12
          %v333 = vsel %vm332, %v331, 0.0
          %v334 = vadd.f32 %v325, %v333
          %v335 = vrot.slane %v334, 4
          %v336 = vadd.f32 %v334, %v335
          %v337 = vrot.slane %v336, 2
          %v338 = vadd.f32 %v336, %v337
          %v339 = vrot.slane %v338, 1
          %v340 = vadd.f32 %v338, %v339
          %s341 = smov %s317
          %s342 = smov %s318
          %v343 = vlaneseq
          %v344 = vshrl.u32 %v343, 7
          %v345 = vmov %v344
          %v346 = vmul.f32 %v340, %v309
          %v348 = vlaneseq
          %v349 = vand.u32 %v348, 127
          %v350 = vld [vmem:[%s342] sm:$0xff]
          %v351 = vmul.f32 %v350, %v346
          %v352 = vld [vmem:[%s341] sm:$0xff]
          %v353 = vstv %s182
          %vm354 = vcmp.gt.s32.totalorder %v349, %v353
          %v355 = vsub.f32 %v352, %v351
          %v356 = vsel %vm354, %v355, %v352
          %v357 = vstv %s182
          %v358 = vlaneseq
          %v359 = vand.u32 %v358, 127
          %vm360 = vcmp.eq.s32.totalorder %v359, %v357
          %v361 = vstv %s182
          %vm362 = vcmp.ge.s32.totalorder %v345, %v361
          %vm363 = vmand %vm360, %vm362
          %v364 = vsel %vm363, %v350, %v356
          %365 = vst [vmem:[%s341] sm:$0xff] %v364
          %v366 = vadd.s32 %v345, 8
          %v367 = vlaneseq
          %v368 = vand.u32 %v367, 127
          %s369 = scalar_lea.vmem %s342, 8
          %v370 = vld [vmem:[%s369] sm:$0xff]
          %v371 = vmul.f32 %v370, %v346
          %s372 = scalar_lea.vmem %s341, 8
          %v373 = vld [vmem:[%s372] sm:$0xff]
          %v374 = vstv %s182
          %vm375 = vcmp.gt.s32.totalorder %v368, %v374
          %v376 = vsub.f32 %v373, %v371
          %v377 = vsel %vm375, %v376, %v373
          %v378 = vstv %s182
          %v379 = vlaneseq
          %v380 = vand.u32 %v379, 127
          %vm381 = vcmp.eq.s32.totalorder %v380, %v378
          %v382 = vstv %s182
          %vm383 = vcmp.ge.s32.totalorder %v366, %v382
          %vm384 = vmand %vm381, %vm383
          %v385 = vsel %vm384, %v370, %v377
          %386 = vst [vmem:[%s372] sm:$0xff] %v385
          %s387 = scalar_lea.vmem %s341, %s182
          %v388 = vld [vmem:[%s387] ss:$0 sm:$0xff]
          %v389 = vstv %s182
          %v390 = vlaneseq
          %v391 = vand.u32 %v390, 127
          %vm392 = vcmp.eq.s32.totalorder %v391, %v389
          %v393 = vsel %vm392, %v258, %v388
          %394 = vst [vmem:[%s387] sm:$0x1] %v393
        $region59: #{custom-call.8} parent=53 // loop_footer
          %s186 = sadd.s32 1, %s182
        $region60: #{custom-call.8} parent=53 // loop_footer_branch
          %181 = sbr.rel target = $region56
        $region61: #{custom-call.8} parent=53 // loop_exit
          _
        %s396 = sshll.u32 1, 4
        %s397 = ssub.s32 %s396, 1
        %v399 = vld [vmem:[#allocation2] sm:%s397]
        %s400 = sshll.u32 1, 4
        %s401 = ssub.s32 %s400, 1
        %402 = vst [vmem:[%s163] sm:%s401] %v399
        %s403 = sand.u32 %s10, 1
        %s404 = sand.u32 %s10, 1
        %s405 = smul.addr %s404, 16
        %s406 = scalar_lea.vmem [#allocation1], %s405
        %s407 = sand.u32 %s58, 1
        %s408 = sand.u32 %s58, 1
        %s409 = smul.addr %s408, 4
        %s410 = scalar_lea.vmem [#allocation3], %s409
        %s411 = smul.u32 2, %s18
        %s412 = sadd.s32 %s19, %s411
        %s413 = smul.addr %s17, 2
        %s414 = sadd.s32 %s412, %s413
        %s415 = smul.addr %s16, 8
        %s416 = sadd.s32 %s414, %s415
        %s417 = smul.addr %s416, 8
        %s418 = scalar_lea.vmem %s1, %s417
        // Predicated region
        $region62: #{custom-call.8} parent=53 // pred_check
          _
        $region63: #{custom-call.8} parent=53 // pred_check_branch
          %420 = sbr.rel (0) target = $region65
        $region64: #{custom-call.8} parent=53 // pred_region
          // Predicated region
          $region66: #{custom-call.8} parent=64 // pred_check
            _
          $region67: #{custom-call.8} parent=64 // pred_check_branch
            %422 = sbr.rel (0) target = $region69
          $region68: #{custom-call.8} parent=64 // pred_region
            // Predicated region
            $region81: #{custom-call.8} parent=68 // pred_check
              _
            $region82: #{custom-call.8} parent=68 // pred_check_branch
              %440 = sbr.rel (0) target = $region84
            $region83: #{custom-call.8} parent=68 // pred_region
              loop: start=0, step=1, limit=1
              $region85: #{custom-call.8} parent=83 // loop_pre_header
                _
              $region86: #{custom-call.8} parent=83 // loop_header
                %s442 = sphi 0, %s446
                %p443 = scmp.ge.s32.totalorder %s442, 1
                %s447 = sphi %s406, %s406
                %s448 = sphi %s418, %s418
              $region87: #{custom-call.8} parent=83 // loop_header_branch
                %445 = sbr.rel (%p443) target = $region91
              $region88: #{custom-call.8} parent=83 // loop_body
                %v449 = vld [vmem:[%s447] sm:$0xff]
                %450 = vst [vmem:[%s448] sm:$0xff] %v449
                %v451 = vld [vmem:[%s447 + $0x8] sm:$0xff]
                %452 = vst [vmem:[%s448 + $0x8] sm:$0xff] %v451
              $region89: #{custom-call.8} parent=83 // loop_footer
                %s446 = sadd.s32 1, %s442
              $region90: #{custom-call.8} parent=83 // loop_footer_branch
                %441 = sbr.rel target = $region86
              $region91: #{custom-call.8} parent=83 // loop_exit
                _
            $region84: #{custom-call.8} parent=68 // pred_fallthru
              _
            // Predicated region
            $region92: #{custom-call.8} parent=68 // pred_check
              _
            $region93: #{custom-call.8} parent=68 // pred_check_branch
              %454 = sbr.rel target = $region95
            $region94: #{custom-call.8} parent=68 // pred_region
              _
            $region95: #{custom-call.8} parent=68 // pred_fallthru
              _
          $region69: #{custom-call.8} parent=64 // pred_fallthru
            _
          // Predicated region
          $region70: #{custom-call.8} parent=64 // pred_check
            _
          $region71: #{custom-call.8} parent=64 // pred_check_branch
            %424 = sbr.rel target = $region73
          $region72: #{custom-call.8} parent=64 // pred_region
            %s426 = ssub.s32 256, 1
            loop: start=0, step=1, limit=1
            $region74: #{custom-call.8} parent=72 // loop_pre_header
              _
            $region75: #{custom-call.8} parent=72 // loop_header
              %s428 = sphi 0, %s432
              %p429 = scmp.ge.s32.totalorder %s428, 1
              %s433 = sphi %s406, %s406
              %s434 = sphi %s418, %s418
            $region76: #{custom-call.8} parent=72 // loop_header_branch
              %431 = sbr.rel (%p429) target = $region80
            $region77: #{custom-call.8} parent=72 // loop_body
              %v435 = vld [vmem:[%s433] sm:%s426]
              %436 = vst [vmem:[%s434] sm:%s426] %v435
              %v437 = vld [vmem:[%s433 + $0x8] sm:%s426]
              %438 = vst [vmem:[%s434 + $0x8] sm:%s426] %v437
            $region78: #{custom-call.8} parent=72 // loop_footer
              %s432 = sadd.s32 1, %s428
            $region79: #{custom-call.8} parent=72 // loop_footer_branch
              %427 = sbr.rel target = $region75
            $region80: #{custom-call.8} parent=72 // loop_exit
              _
          $region73: #{custom-call.8} parent=64 // pred_fallthru
            _
        $region65: #{custom-call.8} parent=53 // pred_fallthru
          _
        %455 = vnop
        // Predicated region
        $region96: #{custom-call.8} parent=53 // pred_check
          %p456 = pneg %p68
        $region97: #{custom-call.8} parent=53 // pred_check_branch
          %458 = sbr.rel (%p456) target = $region99
        $region98: #{custom-call.8} parent=53 // pred_region
          %p459 = scmp.lt.s32.totalorder %s17, 0
          %s460 = ssub.s32 0, %s17
          %s461 = scalar_select %p459, %s460, %s17
          %s462 = sshrl.u32 %s461, 3
          %s463 = ssub.s32 0, %s462
          %s464 = scalar_select %p459, %s463, %s462
          %s465 = sadd.s32 %s464, %s16
          %s466 = smul.addr %s465, 4
          %s467 = scalar_lea.vmem %s2, %s466
          // Predicated region
          $region100: #{custom-call.8} parent=98 // pred_check
            _
          $region101: #{custom-call.8} parent=98 // pred_check_branch
            %469 = sbr.rel (0) target = $region103
          $region102: #{custom-call.8} parent=98 // pred_region
            // Predicated region
            $region104: #{custom-call.8} parent=102 // pred_check
              _
            $region105: #{custom-call.8} parent=102 // pred_check_branch
              %471 = sbr.rel target = $region107
            $region106: #{custom-call.8} parent=102 // pred_region
              // Predicated region
              $region119: #{custom-call.8} parent=106 // pred_check
                _
              $region120: #{custom-call.8} parent=106 // pred_check_branch
                %487 = sbr.rel (0) target = $region122
              $region121: #{custom-call.8} parent=106 // pred_region
                %s489 = ssub.s32 16, 1
                loop: start=0, step=1, limit=1
                $region123: #{custom-call.8} parent=121 // loop_pre_header
                  _
                $region124: #{custom-call.8} parent=121 // loop_header
                  %s491 = sphi 0, %s495
                  %p492 = scmp.ge.s32.totalorder %s491, 1
                  %s496 = sphi %s410, %s410
                  %s497 = sphi %s467, %s467
                $region125: #{custom-call.8} parent=121 // loop_header_branch
                  %494 = sbr.rel (%p492) target = $region129
                $region126: #{custom-call.8} parent=121 // loop_body
                  %v498 = vld [vmem:[%s496] sm:%s489]
                  %499 = vst [vmem:[%s497] sm:%s489] %v498
                $region127: #{custom-call.8} parent=121 // loop_footer
                  %s495 = sadd.s32 1, %s491
                $region128: #{custom-call.8} parent=121 // loop_footer_branch
                  %490 = sbr.rel target = $region124
                $region129: #{custom-call.8} parent=121 // loop_exit
                  _
              $region122: #{custom-call.8} parent=106 // pred_fallthru
                _
            $region107: #{custom-call.8} parent=102 // pred_fallthru
              _
            // Predicated region
            $region108: #{custom-call.8} parent=102 // pred_check
              _
            $region109: #{custom-call.8} parent=102 // pred_check_branch
              %473 = sbr.rel (0) target = $region111
            $region110: #{custom-call.8} parent=102 // pred_region
              %s475 = ssub.s32 16, 1
              loop: start=0, step=1, limit=1
              $region112: #{custom-call.8} parent=110 // loop_pre_header
                _
              $region113: #{custom-call.8} parent=110 // loop_header
                %s477 = sphi 0, %s481
                %p478 = scmp.ge.s32.totalorder %s477, 1
                %s482 = sphi %s410, %s410
                %s483 = sphi %s467, %s467
              $region114: #{custom-call.8} parent=110 // loop_header_branch
                %480 = sbr.rel (%p478) target = $region118
              $region115: #{custom-call.8} parent=110 // loop_body
                %v484 = vld [vmem:[%s482] sm:%s475]
                %485 = vst [vmem:[%s483] sm:%s475] %v484
              $region116: #{custom-call.8} parent=110 // loop_footer
                %s481 = sadd.s32 1, %s477
              $region117: #{custom-call.8} parent=110 // loop_footer_branch
                %476 = sbr.rel target = $region113
              $region118: #{custom-call.8} parent=110 // loop_exit
                _
            $region111: #{custom-call.8} parent=102 // pred_fallthru
              _
          $region103: #{custom-call.8} parent=98 // pred_fallthru
            _
          %500 = vnop
        $region99: #{custom-call.8} parent=53 // pred_fallthru
          _
      $region54: #{custom-call.8} parent=5 // pred_fallthru
        _
      %p501 = scmp.le.s32.totalorder 2, %s5
      // Predicated region
      $region130: #{custom-call.8} parent=5 // pred_check
        %p502 = pneg %p501
      $region131: #{custom-call.8} parent=5 // pred_check_branch
        %504 = sbr.rel (%p502) target = $region133
      $region132: #{custom-call.8} parent=5 // pred_region
        %s505 = ssub.s32 %s5, 2
        %s506 = sand.u32 %s11, 1
        %s507 = sand.u32 %s11, 1
        %s508 = smul.addr %s507, 16
        %s509 = scalar_lea.vmem [#allocation1], %s508
        // Predicated region
        $region134: #{custom-call.8} parent=132 // pred_check
          %p510 = pneg %p74
        $region135: #{custom-call.8} parent=132 // pred_check_branch
          %512 = sbr.rel (%p510) target = $region137
        $region136: #{custom-call.8} parent=132 // pred_region
          %s513 = sand.u32 %s59, 1
          %s514 = sand.u32 %s59, 1
          %s515 = smul.addr %s514, 4
          %s516 = scalar_lea.vmem [#allocation3], %s515
        $region137: #{custom-call.8} parent=132 // pred_fallthru
          _
      $region133: #{custom-call.8} parent=5 // pred_fallthru
        _
    $region6: #{custom-call.8} parent=1 // loop_footer
      %s9 = sadd.s32 1, %s5
    $region7: #{custom-call.8} parent=1 // loop_footer_branch
      %4 = sbr.rel target = $region3
    $region8: #{custom-call.8} parent=1 // loop_exit
      _

// kernel: custom-call.10
$region0: #{custom-call.10}
  %s0 = inlined_call_operand.vmem [shape: f32[2,4,8,8], index: 0, kind: input, shape index: {}]
  %s1 = inlined_call_operand.vmem [shape: f32[2,4,8,8], index: 1, kind: output, shape index: {}]
  $region1: #{custom-call.10} parent=0
    #allocation0 [shape = 'u8[8192]{0}', space=vmem, size = 0x2000, scoped, tag = 'operand span for operand 0']
    #allocation1 [shape = 'u8[8192]{0}', space=vmem, size = 0x2000, scoped, tag = 'operand span for operand 1']
    loop: start=0, step=1, limit=10
    $region2: #{custom-call.10} parent=1 // loop_pre_header
      _
    $region3: #{custom-call.10} parent=1 // loop_header
      %s3 = sphi 0, %s7
      %p4 = scmp.ge.s32.totalorder %s3, 10
      %s10 = sphi 0, %s22
      %s11 = sphi 0, %s18
      %s12 = sphi 0, %s10
      %s13 = sphi 0, %s11
      %s14 = sphi 0, %s12
      %s15 = sphi 0, %s13
    $region4: #{custom-call.10} parent=1 // loop_header_branch
      %6 = sbr.rel (%p4) target = $region8
    $region5: #{custom-call.10} parent=1 // loop_body
      %s8 = ssub.s32 %s3, 1
      %s9 = ssub.s32 %s3, 2
      %s16 = sadd.s32 1, %s11
      %p17 = scmp.ge.s32.totalorder %s16, 4
      %s18 = scalar_select %p17, 0, %s16
      %s19 = sadd.s32 1, %s10
      %s20 = scalar_select %p17, %s19, %s10
      %p21 = scmp.ge.s32.totalorder %s20, 2
      %s22 = scalar_select %p21, 0, %s20
      %p23 = scmp.le.s32.totalorder 1, %s3
      %p24 = scmp.lt.s32.totalorder %s3, 9
      %p25 = pnand %p23, %p24
      %p26 = pneg %p25
      // Predicated region
      $region9: #{custom-call.10} parent=5 // pred_check
        _
      $region10: #{custom-call.10} parent=5 // pred_check_branch
        %28 = sbr.rel (%p25) target = $region12
      $region11: #{custom-call.10} parent=5 // pred_region
        %s29 = ssub.s32 %s3, 1
      $region12: #{custom-call.10} parent=5 // pred_fallthru
        _
      %p30 = scmp.lt.s32.totalorder %s3, 8
      // Predicated region
      $region13: #{custom-call.10} parent=5 // pred_check
        %p31 = pneg %p30
      $region14: #{custom-call.10} parent=5 // pred_check_branch
        %33 = sbr.rel (%p31) target = $region16
      $region15: #{custom-call.10} parent=5 // pred_region
        %s34 = sand.u32 %s3, 1
        %s35 = sand.u32 %s3, 1
        %s36 = smul.addr %s35, 8
        %s37 = scalar_lea.vmem [#allocation0], %s36
        %s38 = smul.addr %s10, 4
        %s39 = sadd.s32 %s11, %s38
        %s40 = smul.addr %s39, 8
        %s41 = scalar_lea.vmem %s0, %s40
        // Predicated region
        $region17: #{custom-call.10} parent=15 // pred_check
          _
        $region18: #{custom-call.10} parent=15 // pred_check_branch
          %43 = sbr.rel (0) target = $region20
        $region19: #{custom-call.10} parent=15 // pred_region
          // Predicated region
          $region21: #{custom-call.10} parent=19 // pred_check
            _
          $region22: #{custom-call.10} parent=19 // pred_check_branch
            %45 = sbr.rel (0) target = $region24
          $region23: #{custom-call.10} parent=19 // pred_region
            // Predicated region
            $region36: #{custom-call.10} parent=23 // pred_check
              _
            $region37: #{custom-call.10} parent=23 // pred_check_branch
              %61 = sbr.rel (0) target = $region39
            $region38: #{custom-call.10} parent=23 // pred_region
              loop: start=0, step=1, limit=1
              $region40: #{custom-call.10} parent=38 // loop_pre_header
                _
              $region41: #{custom-call.10} parent=38 // loop_header
                %s63 = sphi 0, %s67
                %p64 = scmp.ge.s32.totalorder %s63, 1
                %s68 = sphi %s41, %s41
                %s69 = sphi %s37, %s37
              $region42: #{custom-call.10} parent=38 // loop_header_branch
                %66 = sbr.rel (%p64) target = $region46
              $region43: #{custom-call.10} parent=38 // loop_body
                %v70 = vld [vmem:[%s68] sm:$0xff]
                %71 = vst [vmem:[%s69] sm:$0xff] %v70
              $region44: #{custom-call.10} parent=38 // loop_footer
                %s67 = sadd.s32 1, %s63
              $region45: #{custom-call.10} parent=38 // loop_footer_branch
                %62 = sbr.rel target = $region41
              $region46: #{custom-call.10} parent=38 // loop_exit
                _
            $region39: #{custom-call.10} parent=23 // pred_fallthru
              _
            // Predicated region
            $region47: #{custom-call.10} parent=23 // pred_check
              _
            $region48: #{custom-call.10} parent=23 // pred_check_branch
              %73 = sbr.rel target = $region50
            $region49: #{custom-call.10} parent=23 // pred_region
              _
            $region50: #{custom-call.10} parent=23 // pred_fallthru
              _
          $region24: #{custom-call.10} parent=19 // pred_fallthru
            _
          // Predicated region
          $region25: #{custom-call.10} parent=19 // pred_check
            _
          $region26: #{custom-call.10} parent=19 // pred_check_branch
            %47 = sbr.rel target = $region28
          $region27: #{custom-call.10} parent=19 // pred_region
            %s49 = ssub.s32 256, 1
            loop: start=0, step=1, limit=1
            $region29: #{custom-call.10} parent=27 // loop_pre_header
              _
            $region30: #{custom-call.10} parent=27 // loop_header
              %s51 = sphi 0, %s55
              %p52 = scmp.ge.s32.totalorder %s51, 1
              %s56 = sphi %s41, %s41
              %s57 = sphi %s37, %s37
            $region31: #{custom-call.10} parent=27 // loop_header_branch
              %54 = sbr.rel (%p52) target = $region35
            $region32: #{custom-call.10} parent=27 // loop_body
              %v58 = vld [vmem:[%s56] sm:%s49]
              %59 = vst [vmem:[%s57] sm:%s49] %v58
            $region33: #{custom-call.10} parent=27 // loop_footer
              %s55 = sadd.s32 1, %s51
            $region34: #{custom-call.10} parent=27 // loop_footer_branch
              %50 = sbr.rel target = $region30
            $region35: #{custom-call.10} parent=27 // loop_exit
              _
          $region28: #{custom-call.10} parent=19 // pred_fallthru
            _
        $region20: #{custom-call.10} parent=15 // pred_fallthru
          _
        %74 = vnop
      $region16: #{custom-call.10} parent=5 // pred_fallthru
        _
      %p75 = scmp.le.s32.totalorder 1, %s3
      %p76 = scmp.lt.s32.totalorder %s3, 9
      %p77 = pnand %p75, %p76
      %p78 = pneg %p77
      // Predicated region
      $region51: #{custom-call.10} parent=5 // pred_check
        _
      $region52: #{custom-call.10} parent=5 // pred_check_branch
        %80 = sbr.rel (%p77) target = $region54
      $region53: #{custom-call.10} parent=5 // pred_region
        %s81 = ssub.s32 %s3, 1
        %s82 = sand.u32 %s8, 1
        %s83 = sand.u32 %s8, 1
        %s84 = smul.addr %s83, 8
        %s85 = scalar_lea.vmem [#allocation0], %s84
        %s86 = sand.u32 %s8, 1
        %s87 = sand.u32 %s8, 1
        %s88 = smul.addr %s87, 8
        %s89 = scalar_lea.vmem [#allocation0], %s88
        %s90 = sand.u32 %s8, 1
        %s91 = sand.u32 %s8, 1
        %s92 = smul.addr %s91, 8
        %s93 = scalar_lea.vmem [#allocation1], %s92
        %v94 = vlaneseq
        %v95 = vand.u32 %v94, 127
        %v96 = vlaneseq
        %v97 = vshrl.u32 %v96, 7
        %vm99 = vcmp.eq.s32.totalorder %v95, %v97
        %v100 = vld [vmem:[%s85] sm:$0xff]
        %v101 = vlaneseq
        %v102 = vand.u32 %v101, 127
        %vm103 = vcmp.eq.s32.totalorder %v102, 0
        %v104 = vsel %vm103, %v100, 1.0
        %v105 = vsel %vm99, %v104, 0.0
        %s106 = scalar_lea.vmem %s85, 1 [#allocation0]
        %v107 = vld [vmem:[%s106] ss:$0 sm:$0xff]
        %vm108 = vcmask 64512
        %v109 = vsel %vm108, %v107, 0.0
        %v110 = vlaneseq
        %v111 = vand.u32 %v110, 127
        %vm112 = vcmp.eq.s32.totalorder %v111, 1
        %v113 = vmul.f32 %v109, %v105
        %114 = vadd.xlane.f32.xlu0 %v113
        %v115 = vpop.xlane.xlu0 %114
        %v116 = vsel %vm112, %v115, %v105
        %s117 = scalar_lea.vmem %s85, 2 [#allocation0]
        %v118 = vld [vmem:[%s117] ss:$0 sm:$0xff]
        %vm119 = vcmask 64512
        %v120 = vsel %vm119, %v118, 0.0
        %v121 = vlaneseq
        %v122 = vand.u32 %v121, 127
        %vm123 = vcmp.eq.s32.totalorder %v122, 2
        %v124 = vmul.f32 %v120, %v116
        %125 = vadd.xlane.f32.xlu0 %v124
        %v126 = vpop.xlane.xlu0 %125
        %v127 = vsel %vm123, %v126, %v116
        %s128 = scalar_lea.vmem %s85, 3 [#allocation0]
        %v129 = vld [vmem:[%s128] ss:$0 sm:$0xff]
        %vm130 = vcmask 64512
        %v131 = vsel %vm130, %v129, 0.0
        %v132 = vlaneseq
        %v133 = vand.u32 %v132, 127
        %vm134 = vcmp.eq.s32.totalorder %v133, 3
        %v135 = vmul.f32 %v131, %v127
        %136 = vadd.xlane.f32.xlu0 %v135
        %v137 = vpop.xlane.xlu0 %136
        %v138 = vsel %vm134, %v137, %v127
        %s139 = scalar_lea.vmem %s85, 4 [#allocation0]
        %v140 = vld [vmem:[%s139] ss:$0 sm:$0xff]
        %vm141 = vcmask 64512
        %v142 = vsel %vm141, %v140, 0.0
        %v143 = vlaneseq
        %v144 = vand.u32 %v143, 127
        %vm145 = vcmp.eq.s32.totalorder %v144, 4
        %v146 = vmul.f32 %v142, %v138
        %147 = vadd.xlane.f32.xlu0 %v146
        %v148 = vpop.xlane.xlu0 %147
        %v149 = vsel %vm145, %v148, %v138
        %s150 = scalar_lea.vmem %s85, 5 [#allocation0]
        %v151 = vld [vmem:[%s150] ss:$0 sm:$0xff]
        %vm152 = vcmask 64512
        %v153 = vsel %vm152, %v151, 0.0
        %v154 = vlaneseq
        %v155 = vand.u32 %v154, 127
        %vm156 = vcmp.eq.s32.totalorder %v155, 5
        %v157 = vmul.f32 %v153, %v149
        %158 = vadd.xlane.f32.xlu0 %v157
        %v159 = vpop.xlane.xlu0 %158
        %v160 = vsel %vm156, %v159, %v149
        %s161 = scalar_lea.vmem %s85, 6 [#allocation0]
        %v162 = vld [vmem:[%s161] ss:$0 sm:$0xff]
        %vm163 = vcmask 64512
        %v164 = vsel %vm163, %v162, 0.0
        %v165 = vlaneseq
        %v166 = vand.u32 %v165, 127
        %vm167 = vcmp.eq.s32.totalorder %v166, 6
        %v168 = vmul.f32 %v164, %v160
        %169 = vadd.xlane.f32.xlu0 %v168
        %v170 = vpop.xlane.xlu0 %169
        %v171 = vsel %vm167, %v170, %v160
        %s172 = scalar_lea.vmem %s85, 7 [#allocation0]
        %v173 = vld [vmem:[%s172] ss:$0 sm:$0xff]
        %vm174 = vcmask 64512
        %v175 = vsel %vm174, %v173, 0.0
        %v176 = vlaneseq
        %v177 = vand.u32 %v176, 127
        %vm178 = vcmp.eq.s32.totalorder %v177, 7
        %v179 = vmul.f32 %v175, %v171
        %180 = vadd.xlane.f32.xlu0 %v179
        %v181 = vpop.xlane.xlu0 %180
        %v182 = vsel %vm178, %v181, %v171
        %183 = vst [vmem:[%s93] sm:$0xff] %v182
        %s184 = sand.u32 %s8, 1
        %s185 = sand.u32 %s8, 1
        %s186 = smul.addr %s185, 8
        %s187 = scalar_lea.vmem [#allocation1], %s186
        %s188 = smul.addr %s12, 4
        %s189 = sadd.s32 %s13, %s188
        %s190 = smul.addr %s189, 8
        %s191 = scalar_lea.vmem %s1, %s190
        // Predicated region
        $region55: #{custom-call.10} parent=53 // pred_check
          _
        $region56: #{custom-call.10} parent=53 // pred_check_branch
          %193 = sbr.rel (0) target = $region58
        $region57: #{custom-call.10} parent=53 // pred_region
          // Predicated region
          $region59: #{custom-call.10} parent=57 // pred_check
            _
          $region60: #{custom-call.10} parent=57 // pred_check_branch
            %195 = sbr.rel (0) target = $region62
          $region61: #{custom-call.10} parent=57 // pred_region
            // Predicated region
            $region74: #{custom-call.10} parent=61 // pred_check
              _
            $region75: #{custom-call.10} parent=61 // pred_check_branch
              %211 = sbr.rel (0) target = $region77
            $region76: #{custom-call.10} parent=61 // pred_region
              loop: start=0, step=1, limit=1
              $region78: #{custom-call.10} parent=76 // loop_pre_header
                _
              $region79: #{custom-call.10} parent=76 // loop_header
                %s213 = sphi 0, %s217
                %p214 = scmp.ge.s32.totalorder %s213, 1
                %s218 = sphi %s187, %s187
                %s219 = sphi %s191, %s191
              $region80: #{custom-call.10} parent=76 // loop_header_branch
                %216 = sbr.rel (%p214) target = $region84
              $region81: #{custom-call.10} parent=76 // loop_body
                %v220 = vld [vmem:[%s218] sm:$0xff]
                %221 = vst [vmem:[%s219] sm:$0xff] %v220
              $region82: #{custom-call.10} parent=76 // loop_footer
                %s217 = sadd.s32 1, %s213
              $region83: #{custom-call.10} parent=76 // loop_footer_branch
                %212 = sbr.rel target = $region79
              $region84: #{custom-call.10} parent=76 // loop_exit
                _
            $region77: #{custom-call.10} parent=61 // pred_fallthru
              _
            // Predicated region
            $region85: #{custom-call.10} parent=61 // pred_check
              _
            $region86: #{custom-call.10} parent=61 // pred_check_branch
              %223 = sbr.rel target = $region88
            $region87: #{custom-call.10} parent=61 // pred_region
              _
            $region88: #{custom-call.10} parent=61 // pred_fallthru
              _
          $region62: #{custom-call.10} parent=57 // pred_fallthru
            _
          // Predicated region
          $region63: #{custom-call.10} parent=57 // pred_check
            _
          $region64: #{custom-call.10} parent=57 // pred_check_branch
            %197 = sbr.rel target = $region66
          $region65: #{custom-call.10} parent=57 // pred_region
            %s199 = ssub.s32 256, 1
            loop: start=0, step=1, limit=1
            $region67: #{custom-call.10} parent=65 // loop_pre_header
              _
            $region68: #{custom-call.10} parent=65 // loop_header
              %s201 = sphi 0, %s205
              %p202 = scmp.ge.s32.totalorder %s201, 1
              %s206 = sphi %s187, %s187
              %s207 = sphi %s191, %s191
            $region69: #{custom-call.10} parent=65 // loop_header_branch
              %204 = sbr.rel (%p202) target = $region73
            $region70: #{custom-call.10} parent=65 // loop_body
              %v208 = vld [vmem:[%s206] sm:%s199]
              %209 = vst [vmem:[%s207] sm:%s199] %v208
            $region71: #{custom-call.10} parent=65 // loop_footer
              %s205 = sadd.s32 1, %s201
            $region72: #{custom-call.10} parent=65 // loop_footer_branch
              %200 = sbr.rel target = $region68
            $region73: #{custom-call.10} parent=65 // loop_exit
              _
          $region66: #{custom-call.10} parent=57 // pred_fallthru
            _
        $region58: #{custom-call.10} parent=53 // pred_fallthru
          _
        %224 = vnop
      $region54: #{custom-call.10} parent=5 // pred_fallthru
        _
      %p225 = scmp.le.s32.totalorder 2, %s3
      // Predicated region
      $region89: #{custom-call.10} parent=5 // pred_check
        %p226 = pneg %p225
      $region90: #{custom-call.10} parent=5 // pred_check_branch
        %228 = sbr.rel (%p226) target = $region92
      $region91: #{custom-call.10} parent=5 // pred_region
        %s229 = ssub.s32 %s3, 2
        %s230 = sand.u32 %s9, 1
        %s231 = sand.u32 %s9, 1
        %s232 = smul.addr %s231, 8
        %s233 = scalar_lea.vmem [#allocation1], %s232
      $region92: #{custom-call.10} parent=5 // pred_fallthru
        _
    $region6: #{custom-call.10} parent=1 // loop_footer
      %s7 = sadd.s32 1, %s3
    $region7: #{custom-call.10} parent=1 // loop_footer_branch
      %2 = sbr.rel target = $region3
    $region8: #{custom-call.10} parent=1 // loop_exit
      _

// kernel: grnet_forward.3
$region0: #{grnet_forward.3}
  #allocation0 [shape = 'u32[]', space=smem, size = 0x4, offset = 0x4, fixed_abs, tag = 'smem constant byte address 0x4 - core index']
  #allocation1 [shape = 'u32[144,128]{1,0:T(1,128)}', space=vmem, size = 0x12000, scoped, tag = 'internal scratch']
  %s0 = inlined_call_operand.vmem [shape: bf16[48,16], index: 0, kind: input, shape index: {}]
  %s1 = inlined_call_operand.vmem [shape: bf16[16,16], index: 1, kind: input, shape index: {}]
  %s2 = inlined_call_operand.vmem [shape: f32[48,16], index: 2, kind: output, shape index: {}]
  %s3 = sld [smem:[#allocation0]]
  $region18: #{grnet_forward.3} parent=0
    _
  %s5 = ssub.s32 1, %s3
  %s6 = scalar_select 0, %s5, %s3
  // Predicated region
  $region2: #{grnet_forward.3} parent=0 // pred_check
    _
  $region3: #{grnet_forward.3} parent=0 // pred_check_branch
    %8 = sbr.rel (0) target = $region5
  $region4: #{grnet_forward.3} parent=0 // pred_region
    _
  $region5: #{grnet_forward.3} parent=0 // pred_fallthru
    _
  // Predicated region
  $region6: #{grnet_forward.3} parent=0 // pred_check
    _
  $region7: #{grnet_forward.3} parent=0 // pred_check_branch
    %10 = sbr.rel (0) target = $region9
  $region8: #{grnet_forward.3} parent=0 // pred_region
    _
  $region9: #{grnet_forward.3} parent=0 // pred_fallthru
    _
  %v12 = vld [vmem:[%s0] sm:$0xf]
  %v13 = vld [vmem:[%s0 + $0x4] sm:$0xf]
  %v14 = vld [vmem:[%s0 + $0x8] sm:$0xf]
  %v15 = vld [vmem:[%s0 + $0xc] sm:$0xf]
  %v16 = vld [vmem:[%s0 + $0x10] sm:$0xf]
  %v17 = vld [vmem:[%s0 + $0x14] sm:$0xf]
  %v18 = vld [vmem:[%s1] sm:$0xf]
  %v19 = vld [vmem:[%s1 + $0x4] sm:$0xf]
  %v26 = vunpack.c.l.b16 %v12
  %v27 = vunpack.c.l.b16 %v13
  %v28 = vunpack.c.l.b16 %v14
  %v29 = vunpack.c.l.b16 %v15
  %v30 = vunpack.c.l.b16 %v16
  %v31 = vunpack.c.l.b16 %v17
  %v32 = vpack.c.b16 %v27, %v26
  %v33 = vpack.c.b16 %v29, %v28
  %v34 = vpack.c.b16 %v31, %v30
  %v37 = vunpack.c.l.b16 %v18
  %v38 = vunpack.c.l.b16 %v19
  %v39 = vpack.c.b16 %v38, %v37
  %vm41 = vcmask 130048
  %v43 = vsel %vm41, %v32, 0
  %v46 = vsel %vm41, %v33, 0
  %v49 = vsel %vm41, %v34, 0
  %51 = vmatprep.subr.bf16.mxu0 0
  %52 = vmatpush1.bf16.msra.mxu0 0
  %53 = vmatprep.subr.bf16.mxu0 0
  %54 = vmatpush1.bf16.msra.mxu0 0
  %55 = vmatprep.subr.bf16.mxu0 0
  %56 = vmatpush1.bf16.msra.mxu0 0
  %57 = vmatprep.subr.bf16.mxu0 0
  %58 = vmatpush1.bf16.msra.mxu0 0
  %59 = vmatprep.subr.bf16.mxu0 0
  %60 = vmatpush1.bf16.msra.mxu0 0
  %61 = vmatprep.subr.bf16.mxu0 0
  %62 = vmatpush1.bf16.msra.mxu0 0
  %63 = vmatprep.subr.bf16.mxu0 0
  %64 = vmatpush1.bf16.msra.mxu0 0
  %65 = vmatprep.subr.bf16.mxu0 0
  %66 = vmatpush1.bf16.msra.mxu0 %v39
  %67 = vmatprep.subr.bf16.mxu0 0
  %68 = vmatpush2.bf16.msra.mxu0 0
  %69 = vmatprep.subr.bf16.mxu0 0
  %70 = vmatpush2.bf16.msra.mxu0 0
  %71 = vmatprep.subr.bf16.mxu0 0
  %72 = vmatpush2.bf16.msra.mxu0 0
  %73 = vmatprep.subr.bf16.mxu0 0
  %74 = vmatpush2.bf16.msra.mxu0 0
  %75 = vmatprep.subr.bf16.mxu0 0
  %76 = vmatpush2.bf16.msra.mxu0 0
  %77 = vmatprep.subr.bf16.mxu0 0
  %78 = vmatpush2.bf16.msra.mxu0 0
  %79 = vmatprep.subr.bf16.mxu0 0
  %80 = vmatpush2.bf16.msra.mxu0 0
  %81 = vmatprep.subr.bf16.mxu0 0
  %82 = vmatpush2.bf16.msra.mxu0 0
  %83 = vmatprep.mubr.bf16.mxu0 0
  %84 = vmatmul.mubr.bf16.gmra.mxu0 %v43
  %v85 = vpop.f32.mrf.mxu0
  %v86 = vadd.f32 0.0, %v85
  %v87 = vpop.f32.mrf.mxu0
  %v88 = vpop.f32.mrf.mxu0
  %v89 = vadd.f32 0.0, %v88
  %v90 = vpop.f32.mrf.mxu0
  %91 = vmatprep.mubr.bf16.mxu0 0
  %92 = vmatmul.mubr.bf16.gmra.mxu0 %v46
  %v93 = vpop.f32.mrf.mxu0
  %v94 = vadd.f32 0.0, %v93
  %v95 = vpop.f32.mrf.mxu0
  %v96 = vpop.f32.mrf.mxu0
  %v97 = vadd.f32 0.0, %v96
  %v98 = vpop.f32.mrf.mxu0
  %99 = vmatprep.mubr.bf16.mxu0 0
  %100 = vmatmul.mubr.bf16.gmra.mxu0 %v49
  %v101 = vpop.f32.mrf.mxu0
  %v102 = vadd.f32 0.0, %v101
  %v103 = vpop.f32.mrf.mxu0
  %v104 = vpop.f32.mrf.mxu0
  %v105 = vadd.f32 0.0, %v104
  %v106 = vpop.f32.mrf.mxu0
  %107 = vdwg.mxu0
  %108 = vst.msk [vmem:[%s2] sm:$0xff] %vm41, %v86
  %109 = vst.msk [vmem:[%s2 + $0x8] sm:$0xff] %vm41, %v89
  %110 = vst.msk [vmem:[%s2 + $0x10] sm:$0xff] %vm41, %v94
  %111 = vst.msk [vmem:[%s2 + $0x18] sm:$0xff] %vm41, %v97
  %112 = vst.msk [vmem:[%s2 + $0x20] sm:$0xff] %vm41, %v102
  %113 = vst.msk [vmem:[%s2 + $0x28] sm:$0xff] %vm41, %v105
  // Predicated region
  $region10: #{grnet_forward.3} parent=0 // pred_check
    _
  $region11: #{grnet_forward.3} parent=0 // pred_check_branch
    %115 = sbr.rel (0) target = $region13
  $region12: #{grnet_forward.3} parent=0 // pred_region
    _
  $region13: #{grnet_forward.3} parent=0 // pred_fallthru
    _
  // Predicated region
  $region14: #{grnet_forward.3} parent=0 // pred_check
    _
  $region15: #{grnet_forward.3} parent=0 // pred_check_branch
    %117 = sbr.rel (0) target = $region17
  $region16: #{grnet_forward.3} parent=0 // pred_region
    _
  $region17: #{grnet_forward.3} parent=0 // pred_fallthru
    _

// kernel: custom-call.11
$region0: #{custom-call.11}
  %s0 = inlined_call_operand.vmem [shape: f32[2,6,6], index: 0, kind: input, shape index: {}]
  %s1 = inlined_call_operand.vmem [shape: f32[2,6,6], index: 1, kind: input, shape index: {}]
  %s2 = inlined_call_operand.vmem [shape: f32[2,6,6], index: 2, kind: input, shape index: {}]
  %s3 = inlined_call_operand.vmem [shape: f32[2,6,6], index: 3, kind: input, shape index: {}]
  %s4 = inlined_call_operand.vmem [shape: f32[2,6], index: 4, kind: output, shape index: {0}]
  %s5 = inlined_call_operand.vmem [shape: f32[2,6], index: 5, kind: output, shape index: {1}]
  %s6 = inlined_call_operand.vmem [shape: f32[2,6,6], index: 6, kind: output, shape index: {2}]
  %s7 = inlined_call_operand.vmem [shape: f32[2,6,6], index: 7, kind: output, shape index: {3}]
  %s8 = inlined_call_operand.vmem [shape: f32[2,6,6], index: 8, kind: output, shape index: {4}]
  %s9 = inlined_call_operand.vmem [shape: f32[2,6,6], index: 9, kind: output, shape index: {5}]
  %10 = xla_tuple %s4, %s5, %s6, %s7, %s8, %s9
  $region1: #{custom-call.11} parent=0
    #allocation0 [shape = 'u8[8192]{0}', space=vmem, size = 0x2000, scoped, tag = 'operand span for operand 0']
    #allocation1 [shape = 'u8[8192]{0}', space=vmem, size = 0x2000, scoped, tag = 'operand span for operand 1']
    #allocation2 [shape = 'u8[8192]{0}', space=vmem, size = 0x2000, scoped, tag = 'operand span for operand 2']
    #allocation3 [shape = 'u8[8192]{0}', space=vmem, size = 0x2000, scoped, tag = 'operand span for operand 3']
    #allocation4 [shape = 'u8[4096]{0}', space=vmem, size = 0x1000, scoped, tag = 'operand span for operand 4']
    #allocation5 [shape = 'u8[2048]{0}', space=vmem, size = 0x800, scoped, tag = 'packed  for operand 4']
    #allocation6 [shape = 'u8[4096]{0}', space=vmem, size = 0x1000, scoped, tag = 'operand span for operand 5']
    #allocation7 [shape = 'u8[2048]{0}', space=vmem, size = 0x800, scoped, tag = 'packed  for operand 5']
    #allocation8 [shape = 'u8[8192]{0}', space=vmem, size = 0x2000, scoped, tag = 'operand span for operand 6']
    #allocation9 [shape = 'u8[8192]{0}', space=vmem, size = 0x2000, scoped, tag = 'operand span for operand 7']
    #allocation10 [shape = 'u8[8192]{0}', space=vmem, size = 0x2000, scoped, tag = 'operand span for operand 8']
    #allocation11 [shape = 'u8[8192]{0}', space=vmem, size = 0x2000, scoped, tag = 'operand span for operand 9']
    loop: start=0, step=1, limit=4
    $region2: #{custom-call.11} parent=1 // loop_pre_header
      _
    $region3: #{custom-call.11} parent=1 // loop_header
      %s12 = sphi 0, %s16
      %p13 = scmp.ge.s32.totalorder %s12, 4
      %s24 = sphi 0, %s26
      %s27 = sphi 0, %s24
      %s28 = sphi 0, %s27
      %s44 = sphi 0, %s28
      %s52 = sphi 0, %s54
      %s55 = sphi 0, %s52
      %s56 = sphi 0, %s55
      %s72 = sphi 0, %s56
    $region4: #{custom-call.11} parent=1 // loop_header_branch
      %15 = sbr.rel (%p13) target = $region8
    $region5: #{custom-call.11} parent=1 // loop_body
      %s17 = ssub.s32 %s12, 1
      %s18 = ssub.s32 %s12, 2
      %s19 = sadd.s32 %s12, 1
      %s20 = sshrl.u32 %s12, 3
      %s21 = sshrl.u32 %s19, 3
      %s22 = ssub.s32 %s20, %s21
      %p23 = scmp.eq.s32.totalorder %s22, 0
      %s25 = sadd.s32 %s24, 1
      %s26 = scalar_select %p23, %s24, %s25
      %p29 = pneg %p23
      %p30 = scmp.eq.s32.totalorder %s12, 1
      %p31 = por %p29, %p30
      %p32 = scmp.ne.s32.totalorder %s24, %s27
      %p33 = scmp.eq.s32.totalorder %s12, 0
      %p34 = por %p32, %p33
      %p35 = scmp.ne.s32.totalorder %s24, %s27
      %p36 = scmp.eq.s32.totalorder %s17, 1
      %p37 = por %p35, %p36
      %p38 = scmp.ne.s32.totalorder %s27, %s28
      %p39 = scmp.eq.s32.totalorder %s17, 0
      %p40 = por %p38, %p39
      %p41 = scmp.ne.s32.totalorder %s27, %s28
      %p42 = scmp.eq.s32.totalorder %s18, 1
      %p43 = por %p41, %p42
      %p45 = scmp.ne.s32.totalorder %s28, %s44
      %p46 = scmp.eq.s32.totalorder %s18, 0
      %p47 = por %p45, %p46
      %s48 = sshrl.u32 %s12, 3
      %s49 = sshrl.u32 %s19, 3
      %s50 = ssub.s32 %s48, %s49
      %p51 = scmp.eq.s32.totalorder %s50, 0
      %s53 = sadd.s32 %s52, 1
      %s54 = scalar_select %p51, %s52, %s53
      %p57 = pneg %p51
      %p58 = scmp.eq.s32.totalorder %s12, 1
      %p59 = por %p57, %p58
      %p60 = scmp.ne.s32.totalorder %s52, %s55
      %p61 = scmp.eq.s32.totalorder %s12, 0
      %p62 = por %p60, %p61
      %p63 = scmp.ne.s32.totalorder %s52, %s55
      %p64 = scmp.eq.s32.totalorder %s17, 1
      %p65 = por %p63, %p64
      %p66 = scmp.ne.s32.totalorder %s55, %s56
      %p67 = scmp.eq.s32.totalorder %s17, 0
      %p68 = por %p66, %p67
      %p69 = scmp.ne.s32.totalorder %s55, %s56
      %p70 = scmp.eq.s32.totalorder %s18, 1
      %p71 = por %p69, %p70
      %p73 = scmp.ne.s32.totalorder %s56, %s72
      %p74 = scmp.eq.s32.totalorder %s18, 0
      %p75 = por %p73, %p74
      %p76 = scmp.le.s32.totalorder 1, %s12
      %p77 = scmp.lt.s32.totalorder %s12, 3
      %p78 = pnand %p76, %p77
      %p79 = pneg %p78
      // Predicated region
      $region9: #{custom-call.11} parent=5 // pred_check
        _
      $region10: #{custom-call.11} parent=5 // pred_check_branch
        %81 = sbr.rel (%p78) target = $region12
      $region11: #{custom-call.11} parent=5 // pred_region
        %s82 = ssub.s32 %s12, 1
      $region12: #{custom-call.11} parent=5 // pred_fallthru
        _
      %p83 = scmp.lt.s32.totalorder %s12, 2
      // Predicated region
      $region13: #{custom-call.11} parent=5 // pred_check
        %p84 = pneg %p83
      $region14: #{custom-call.11} parent=5 // pred_check_branch
        %86 = sbr.rel (%p84) target = $region16
      $region15: #{custom-call.11} parent=5 // pred_region
        %s87 = sand.u32 %s12, 1
        %s88 = sand.u32 %s12, 1
        %s89 = smul.addr %s88, 8
        %s90 = scalar_lea.vmem [#allocation0], %s89
        %s91 = smul.addr %s12, 8
        %s92 = scalar_lea.vmem %s0, %s91
        // Predicated region
        $region17: #{custom-call.11} parent=15 // pred_check
          _
        $region18: #{custom-call.11} parent=15 // pred_check_branch
          %94 = sbr.rel (0) target = $region20
        $region19: #{custom-call.11} parent=15 // pred_region
          // Predicated region
          $region21: #{custom-call.11} parent=19 // pred_check
            _
          $region22: #{custom-call.11} parent=19 // pred_check_branch
            %96 = sbr.rel (0) target = $region24
          $region23: #{custom-call.11} parent=19 // pred_region
            // Predicated region
            $region36: #{custom-call.11} parent=23 // pred_check
              _
            $region37: #{custom-call.11} parent=23 // pred_check_branch
              %112 = sbr.rel (0) target = $region39
            $region38: #{custom-call.11} parent=23 // pred_region
              loop: start=0, step=1, limit=1
              $region40: #{custom-call.11} parent=38 // loop_pre_header
                _
              $region41: #{custom-call.11} parent=38 // loop_header
                %s114 = sphi 0, %s118
                %p115 = scmp.ge.s32.totalorder %s114, 1
                %s119 = sphi %s92, %s92
                %s120 = sphi %s90, %s90
              $region42: #{custom-call.11} parent=38 // loop_header_branch
                %117 = sbr.rel (%p115) target = $region46
              $region43: #{custom-call.11} parent=38 // loop_body
                %v121 = vld [vmem:[%s119] sm:$0xff]
                %122 = vst [vmem:[%s120] sm:$0xff] %v121
              $region44: #{custom-call.11} parent=38 // loop_footer
                %s118 = sadd.s32 1, %s114
              $region45: #{custom-call.11} parent=38 // loop_footer_branch
                %113 = sbr.rel target = $region41
              $region46: #{custom-call.11} parent=38 // loop_exit
                _
            $region39: #{custom-call.11} parent=23 // pred_fallthru
              _
            // Predicated region
            $region47: #{custom-call.11} parent=23 // pred_check
              _
            $region48: #{custom-call.11} parent=23 // pred_check_branch
              %124 = sbr.rel target = $region50
            $region49: #{custom-call.11} parent=23 // pred_region
              _
            $region50: #{custom-call.11} parent=23 // pred_fallthru
              _
          $region24: #{custom-call.11} parent=19 // pred_fallthru
            _
          // Predicated region
          $region25: #{custom-call.11} parent=19 // pred_check
            _
          $region26: #{custom-call.11} parent=19 // pred_check_branch
            %98 = sbr.rel target = $region28
          $region27: #{custom-call.11} parent=19 // pred_region
            %s100 = ssub.s32 256, 1
            loop: start=0, step=1, limit=1
            $region29: #{custom-call.11} parent=27 // loop_pre_header
              _
            $region30: #{custom-call.11} parent=27 // loop_header
              %s102 = sphi 0, %s106
              %p103 = scmp.ge.s32.totalorder %s102, 1
              %s107 = sphi %s92, %s92
              %s108 = sphi %s90, %s90
            $region31: #{custom-call.11} parent=27 // loop_header_branch
              %105 = sbr.rel (%p103) target = $region35
            $region32: #{custom-call.11} parent=27 // loop_body
              %v109 = vld [vmem:[%s107] sm:%s100]
              %110 = vst [vmem:[%s108] sm:%s100] %v109
            $region33: #{custom-call.11} parent=27 // loop_footer
              %s106 = sadd.s32 1, %s102
            $region34: #{custom-call.11} parent=27 // loop_footer_branch
              %101 = sbr.rel target = $region30
            $region35: #{custom-call.11} parent=27 // loop_exit
              _
          $region28: #{custom-call.11} parent=19 // pred_fallthru
            _
        $region20: #{custom-call.11} parent=15 // pred_fallthru
          _
        %125 = vnop
        %s126 = sand.u32 %s12, 1
        %s127 = sand.u32 %s12, 1
        %s128 = smul.addr %s127, 8
        %s129 = scalar_lea.vmem [#allocation1], %s128
        %s130 = smul.addr %s12, 8
        %s131 = scalar_lea.vmem %s1, %s130
        // Predicated region
        $region51: #{custom-call.11} parent=15 // pred_check
          _
        $region52: #{custom-call.11} parent=15 // pred_check_branch
          %133 = sbr.rel (0) target = $region54
        $region53: #{custom-call.11} parent=15 // pred_region
          // Predicated region
          $region55: #{custom-call.11} parent=53 // pred_check
            _
          $region56: #{custom-call.11} parent=53 // pred_check_branch
            %135 = sbr.rel (0) target = $region58
          $region57: #{custom-call.11} parent=53 // pred_region
            // Predicated region
            $region70: #{custom-call.11} parent=57 // pred_check
              _
            $region71: #{custom-call.11} parent=57 // pred_check_branch
              %151 = sbr.rel (0) target = $region73
            $region72: #{custom-call.11} parent=57 // pred_region
              loop: start=0, step=1, limit=1
              $region74: #{custom-call.11} parent=72 // loop_pre_header
                _
              $region75: #{custom-call.11} parent=72 // loop_header
                %s153 = sphi 0, %s157
                %p154 = scmp.ge.s32.totalorder %s153, 1
                %s158 = sphi %s131, %s131
                %s159 = sphi %s129, %s129
              $region76: #{custom-call.11} parent=72 // loop_header_branch
                %156 = sbr.rel (%p154) target = $region80
              $region77: #{custom-call.11} parent=72 // loop_body
                %v160 = vld [vmem:[%s158] sm:$0xff]
                %161 = vst [vmem:[%s159] sm:$0xff] %v160
              $region78: #{custom-call.11} parent=72 // loop_footer
                %s157 = sadd.s32 1, %s153
              $region79: #{custom-call.11} parent=72 // loop_footer_branch
                %152 = sbr.rel target = $region75
              $region80: #{custom-call.11} parent=72 // loop_exit
                _
            $region73: #{custom-call.11} parent=57 // pred_fallthru
              _
            // Predicated region
            $region81: #{custom-call.11} parent=57 // pred_check
              _
            $region82: #{custom-call.11} parent=57 // pred_check_branch
              %163 = sbr.rel target = $region84
            $region83: #{custom-call.11} parent=57 // pred_region
              _
            $region84: #{custom-call.11} parent=57 // pred_fallthru
              _
          $region58: #{custom-call.11} parent=53 // pred_fallthru
            _
          // Predicated region
          $region59: #{custom-call.11} parent=53 // pred_check
            _
          $region60: #{custom-call.11} parent=53 // pred_check_branch
            %137 = sbr.rel target = $region62
          $region61: #{custom-call.11} parent=53 // pred_region
            %s139 = ssub.s32 256, 1
            loop: start=0, step=1, limit=1
            $region63: #{custom-call.11} parent=61 // loop_pre_header
              _
            $region64: #{custom-call.11} parent=61 // loop_header
              %s141 = sphi 0, %s145
              %p142 = scmp.ge.s32.totalorder %s141, 1
              %s146 = sphi %s131, %s131
              %s147 = sphi %s129, %s129
            $region65: #{custom-call.11} parent=61 // loop_header_branch
              %144 = sbr.rel (%p142) target = $region69
            $region66: #{custom-call.11} parent=61 // loop_body
              %v148 = vld [vmem:[%s146] sm:%s139]
              %149 = vst [vmem:[%s147] sm:%s139] %v148
            $region67: #{custom-call.11} parent=61 // loop_footer
              %s145 = sadd.s32 1, %s141
            $region68: #{custom-call.11} parent=61 // loop_footer_branch
              %140 = sbr.rel target = $region64
            $region69: #{custom-call.11} parent=61 // loop_exit
              _
          $region62: #{custom-call.11} parent=53 // pred_fallthru
            _
        $region54: #{custom-call.11} parent=15 // pred_fallthru
          _
        %164 = vnop
        %s165 = sand.u32 %s12, 1
        %s166 = sand.u32 %s12, 1
        %s167 = smul.addr %s166, 8
        %s168 = scalar_lea.vmem [#allocation2], %s167
        %s169 = smul.addr %s12, 8
        %s170 = scalar_lea.vmem %s2, %s169
        // Predicated region
        $region85: #{custom-call.11} parent=15 // pred_check
          _
        $region86: #{custom-call.11} parent=15 // pred_check_branch
          %172 = sbr.rel (0) target = $region88
        $region87: #{custom-call.11} parent=15 // pred_region
          // Predicated region
          $region89: #{custom-call.11} parent=87 // pred_check
            _
          $region90: #{custom-call.11} parent=87 // pred_check_branch
            %174 = sbr.rel (0) target = $region92
          $region91: #{custom-call.11} parent=87 // pred_region
            // Predicated region
            $region104: #{custom-call.11} parent=91 // pred_check
              _
            $region105: #{custom-call.11} parent=91 // pred_check_branch
              %190 = sbr.rel (0) target = $region107
            $region106: #{custom-call.11} parent=91 // pred_region
              loop: start=0, step=1, limit=1
              $region108: #{custom-call.11} parent=106 // loop_pre_header
                _
              $region109: #{custom-call.11} parent=106 // loop_header
                %s192 = sphi 0, %s196
                %p193 = scmp.ge.s32.totalorder %s192, 1
                %s197 = sphi %s170, %s170
                %s198 = sphi %s168, %s168
              $region110: #{custom-call.11} parent=106 // loop_header_branch
                %195 = sbr.rel (%p193) target = $region114
              $region111: #{custom-call.11} parent=106 // loop_body
                %v199 = vld [vmem:[%s197] sm:$0xff]
                %200 = vst [vmem:[%s198] sm:$0xff] %v199
              $region112: #{custom-call.11} parent=106 // loop_footer
                %s196 = sadd.s32 1, %s192
              $region113: #{custom-call.11} parent=106 // loop_footer_branch
                %191 = sbr.rel target = $region109
              $region114: #{custom-call.11} parent=106 // loop_exit
                _
            $region107: #{custom-call.11} parent=91 // pred_fallthru
              _
            // Predicated region
            $region115: #{custom-call.11} parent=91 // pred_check
              _
            $region116: #{custom-call.11} parent=91 // pred_check_branch
              %202 = sbr.rel target = $region118
            $region117: #{custom-call.11} parent=91 // pred_region
              _
            $region118: #{custom-call.11} parent=91 // pred_fallthru
              _
          $region92: #{custom-call.11} parent=87 // pred_fallthru
            _
          // Predicated region
          $region93: #{custom-call.11} parent=87 // pred_check
            _
          $region94: #{custom-call.11} parent=87 // pred_check_branch
            %176 = sbr.rel target = $region96
          $region95: #{custom-call.11} parent=87 // pred_region
            %s178 = ssub.s32 256, 1
            loop: start=0, step=1, limit=1
            $region97: #{custom-call.11} parent=95 // loop_pre_header
              _
            $region98: #{custom-call.11} parent=95 // loop_header
              %s180 = sphi 0, %s184
              %p181 = scmp.ge.s32.totalorder %s180, 1
              %s185 = sphi %s170, %s170
              %s186 = sphi %s168, %s168
            $region99: #{custom-call.11} parent=95 // loop_header_branch
              %183 = sbr.rel (%p181) target = $region103
            $region100: #{custom-call.11} parent=95 // loop_body
              %v187 = vld [vmem:[%s185] sm:%s178]
              %188 = vst [vmem:[%s186] sm:%s178] %v187
            $region101: #{custom-call.11} parent=95 // loop_footer
              %s184 = sadd.s32 1, %s180
            $region102: #{custom-call.11} parent=95 // loop_footer_branch
              %179 = sbr.rel target = $region98
            $region103: #{custom-call.11} parent=95 // loop_exit
              _
          $region96: #{custom-call.11} parent=87 // pred_fallthru
            _
        $region88: #{custom-call.11} parent=15 // pred_fallthru
          _
        %203 = vnop
        %s204 = sand.u32 %s12, 1
        %s205 = sand.u32 %s12, 1
        %s206 = smul.addr %s205, 8
        %s207 = scalar_lea.vmem [#allocation3], %s206
        %s208 = smul.addr %s12, 8
        %s209 = scalar_lea.vmem %s3, %s208
        // Predicated region
        $region119: #{custom-call.11} parent=15 // pred_check
          _
        $region120: #{custom-call.11} parent=15 // pred_check_branch
          %211 = sbr.rel (0) target = $region122
        $region121: #{custom-call.11} parent=15 // pred_region
          // Predicated region
          $region123: #{custom-call.11} parent=121 // pred_check
            _
          $region124: #{custom-call.11} parent=121 // pred_check_branch
            %213 = sbr.rel (0) target = $region126
          $region125: #{custom-call.11} parent=121 // pred_region
            // Predicated region
            $region138: #{custom-call.11} parent=125 // pred_check
              _
            $region139: #{custom-call.11} parent=125 // pred_check_branch
              %229 = sbr.rel (0) target = $region141
            $region140: #{custom-call.11} parent=125 // pred_region
              loop: start=0, step=1, limit=1
              $region142: #{custom-call.11} parent=140 // loop_pre_header
                _
              $region143: #{custom-call.11} parent=140 // loop_header
                %s231 = sphi 0, %s235
                %p232 = scmp.ge.s32.totalorder %s231, 1
                %s236 = sphi %s209, %s209
                %s237 = sphi %s207, %s207
              $region144: #{custom-call.11} parent=140 // loop_header_branch
                %234 = sbr.rel (%p232) target = $region148
              $region145: #{custom-call.11} parent=140 // loop_body
                %v238 = vld [vmem:[%s236] sm:$0xff]
                %239 = vst [vmem:[%s237] sm:$0xff] %v238
              $region146: #{custom-call.11} parent=140 // loop_footer
                %s235 = sadd.s32 1, %s231
              $region147: #{custom-call.11} parent=140 // loop_footer_branch
                %230 = sbr.rel target = $region143
              $region148: #{custom-call.11} parent=140 // loop_exit
                _
            $region141: #{custom-call.11} parent=125 // pred_fallthru
              _
            // Predicated region
            $region149: #{custom-call.11} parent=125 // pred_check
              _
            $region150: #{custom-call.11} parent=125 // pred_check_branch
              %241 = sbr.rel target = $region152
            $region151: #{custom-call.11} parent=125 // pred_region
              _
            $region152: #{custom-call.11} parent=125 // pred_fallthru
              _
          $region126: #{custom-call.11} parent=121 // pred_fallthru
            _
          // Predicated region
          $region127: #{custom-call.11} parent=121 // pred_check
            _
          $region128: #{custom-call.11} parent=121 // pred_check_branch
            %215 = sbr.rel target = $region130
          $region129: #{custom-call.11} parent=121 // pred_region
            %s217 = ssub.s32 256, 1
            loop: start=0, step=1, limit=1
            $region131: #{custom-call.11} parent=129 // loop_pre_header
              _
            $region132: #{custom-call.11} parent=129 // loop_header
              %s219 = sphi 0, %s223
              %p220 = scmp.ge.s32.totalorder %s219, 1
              %s224 = sphi %s209, %s209
              %s225 = sphi %s207, %s207
            $region133: #{custom-call.11} parent=129 // loop_header_branch
              %222 = sbr.rel (%p220) target = $region137
            $region134: #{custom-call.11} parent=129 // loop_body
              %v226 = vld [vmem:[%s224] sm:%s217]
              %227 = vst [vmem:[%s225] sm:%s217] %v226
            $region135: #{custom-call.11} parent=129 // loop_footer
              %s223 = sadd.s32 1, %s219
            $region136: #{custom-call.11} parent=129 // loop_footer_branch
              %218 = sbr.rel target = $region132
            $region137: #{custom-call.11} parent=129 // loop_exit
              _
          $region130: #{custom-call.11} parent=121 // pred_fallthru
            _
        $region122: #{custom-call.11} parent=15 // pred_fallthru
          _
        %242 = vnop
      $region16: #{custom-call.11} parent=5 // pred_fallthru
        _
      %p243 = scmp.le.s32.totalorder 1, %s12
      %p244 = scmp.lt.s32.totalorder %s12, 3
      %p245 = pnand %p243, %p244
      %p246 = pneg %p245
      // Predicated region
      $region153: #{custom-call.11} parent=5 // pred_check
        _
      $region154: #{custom-call.11} parent=5 // pred_check_branch
        %248 = sbr.rel (%p245) target = $region156
      $region155: #{custom-call.11} parent=5 // pred_region
        #allocation12 [shape = 'f32[6,6]{1,0}', space=vmem, size = 0x1000, scoped, tag = 'a top-left matrix']
        #allocation13 [shape = 'f32[6,6]{1,0}', space=vmem, size = 0x1000, scoped, tag = 'a top-right matrix']
        #allocation14 [shape = 'f32[6,6]{1,0}', space=vmem, size = 0x1000, scoped, tag = 'a bottom-left matrix']
        #allocation15 [shape = 'f32[6,6]{1,0}', space=vmem, size = 0x1000, scoped, tag = 'a bottom-right matrix']
        %s249 = ssub.s32 %s12, 1
        %s250 = sand.u32 %s17, 1
        %s251 = sand.u32 %s17, 1
        %s252 = smul.addr %s251, 8
        %s253 = scalar_lea.vmem [#allocation0], %s252
        %s254 = sand.u32 %s17, 1
        %s255 = sand.u32 %s17, 1
        %s256 = smul.addr %s255, 8
        %s257 = scalar_lea.vmem [#allocation1], %s256
        %s258 = sand.u32 %s17, 1
        %s259 = sand.u32 %s17, 1
        %s260 = smul.addr %s259, 8
        %s261 = scalar_lea.vmem [#allocation2], %s260
        %s262 = sand.u32 %s17, 1
        %s263 = sand.u32 %s17, 1
        %s264 = smul.addr %s263, 8
        %s265 = scalar_lea.vmem [#allocation3], %s264
        %s266 = sand.u32 %s17, 1
        %s267 = sand.u32 %s17, 1
        %s268 = smul.addr %s267, 8
        %s269 = scalar_lea.vmem [#allocation0], %s268
        %s270 = sand.u32 %s17, 1
        %s271 = sand.u32 %s17, 1
        %s272 = smul.addr %s271, 8
        %s273 = scalar_lea.vmem [#allocation1], %s272
        %s274 = sand.u32 %s17, 1
        %s275 = sand.u32 %s17, 1
        %s276 = smul.addr %s275, 8
        %s277 = scalar_lea.vmem [#allocation2], %s276
        %s278 = sand.u32 %s17, 1
        %s279 = sand.u32 %s17, 1
        %s280 = smul.addr %s279, 8
        %s281 = scalar_lea.vmem [#allocation3], %s280
        %p282 = pneg %p40
        %p283 = pneg %p37
        %s284 = sand.u32 %s27, 1
        %s285 = sand.u32 %s27, 1
        %s286 = smul.addr %s285, 2
        %s287 = scalar_lea.vmem [#allocation5], %s286
        %p288 = pneg %p68
        %p289 = pneg %p65
        %s290 = sand.u32 %s55, 1
        %s291 = sand.u32 %s55, 1
        %s292 = smul.addr %s291, 2
        %s293 = scalar_lea.vmem [#allocation7], %s292
        %s294 = sand.u32 %s17, 1
        %s295 = sand.u32 %s17, 1
        %s296 = smul.addr %s295, 8
        %s297 = scalar_lea.vmem [#allocation8], %s296
        %s298 = sand.u32 %s17, 1
        %s299 = sand.u32 %s17, 1
        %s300 = smul.addr %s299, 8
        %s301 = scalar_lea.vmem [#allocation9], %s300
        %s302 = sand.u32 %s17, 1
        %s303 = sand.u32 %s17, 1
        %s304 = smul.addr %s303, 8
        %s305 = scalar_lea.vmem [#allocation10], %s304
        %s306 = sand.u32 %s17, 1
        %s307 = sand.u32 %s17, 1
        %s308 = smul.addr %s307, 8
        %s309 = scalar_lea.vmem [#allocation11], %s308
        %s310 = sshrl.u32 %s17, 3
        %s311 = sshrl.u32 %s17, 3
        %s312 = smov [#allocation12]
        %v313 = vld [vmem:[%s253] sm:$0xff]
        %314 = vst [vmem:[%s312] sm:$0xff] %v313
        %s315 = smov [#allocation13]
        %v316 = vld [vmem:[%s257] sm:$0xff]
        %317 = vst [vmem:[%s315] sm:$0xff] %v316
        %s318 = smov [#allocation14]
        %v319 = vld [vmem:[%s261] sm:$0xff]
        %320 = vst [vmem:[%s318] sm:$0xff] %v319
        %s321 = smov [#allocation15]
        %v322 = vld [vmem:[%s265] sm:$0xff]
        %323 = vst [vmem:[%s321] sm:$0xff] %v322
        %324 = vst [vmem:[%s297] sm:$0xff] 0.0
        %325 = vst [vmem:[%s301] sm:$0xff] 0.0
        %326 = vst [vmem:[%s305] sm:$0xff] 0.0
        %327 = vst [vmem:[%s309] sm:$0xff] 0.0
        %s328 = smov %s297
        %v329 = vlaneseq
        %v330 = vand.u32 %v329, 127
        %v331 = vmov %v330
        %v332 = vlaneseq
        %v333 = vshrl.u32 %v332, 7
        %v334 = vmov %v333
        %v335 = vld [vmem:[%s328] sm:$0x3f]
        %vm338 = vcmp.eq.s32.totalorder %v334, %v331
        %v339 = vsel %vm338, 1.0, %v335
        %340 = vst [vmem:[%s328] sm:$0x3f] %v339
        %s341 = smov %s309
        %v342 = vlaneseq
        %v343 = vand.u32 %v342, 127
        %v344 = vmov %v343
        %v345 = vlaneseq
        %v346 = vshrl.u32 %v345, 7
        %v347 = vmov %v346
        %v348 = vld [vmem:[%s341] sm:$0x3f]
        %vm351 = vcmp.eq.s32.totalorder %v347, %v344
        %v352 = vsel %vm351, 1.0, %v348
        %353 = vst [vmem:[%s341] sm:$0x3f] %v352
        // While loop
        $region157: #{custom-call.11} parent=155 // loop_pre_header
          _
        $region158: #{custom-call.11} parent=155 // loop_header
          %s355 = sphi 0, %s897
          %v356 = vlaneseq
          %v357 = vand.u32 %v356, 127
          %v358 = vmov %v357
          %v359 = vlaneseq
          %v360 = vshrl.u32 %v359, 7
          %v361 = vmov %v360
          %s362 = smov [#allocation12]
          %v363 = vlaneseq
          %v364 = vand.u32 %v363, 127
          %vm365 = vcmp.ge.s32.totalorder %v364, 0
          %vm366 = vcmp.lt.s32.totalorder %v364, 6
          %vm367 = vmand %vm365, %vm366
          %v368 = vld [vmem:[%s362] sm:$0x3f]
          %v369 = vsel %vm367, %v368, 0.0
          %v370 = vmul.f32 %v369, %v369
          %vm373 = vcmp.eq.s32.totalorder %v361, %v358
          %v374 = vsel %vm373, 0.0, %v370
          %v375 = vlaneseq
          %v376 = vand.u32 %v375, 127
          %v377 = vmov %v376
          %v378 = vlaneseq
          %v379 = vshrl.u32 %v378, 7
          %v380 = vmov %v379
          %s381 = smov [#allocation13]
          %v382 = vlaneseq
          %v383 = vand.u32 %v382, 127
          %vm384 = vcmp.ge.s32.totalorder %v383, 0
          %vm385 = vcmp.lt.s32.totalorder %v383, 6
          %vm386 = vmand %vm384, %vm385
          %v387 = vld [vmem:[%s381] sm:$0x3f]
          %v388 = vsel %vm386, %v387, 0.0
          %v389 = vmul.f32 %v388, %v388
          %v390 = vadd.f32 %v374, %v389
          %v391 = vadd.f32 %v370, %v389
          %v392 = vlaneseq
          %v393 = vand.u32 %v392, 127
          %v394 = vmov %v393
          %v395 = vlaneseq
          %v396 = vshrl.u32 %v395, 7
          %v397 = vmov %v396
          %s398 = smov [#allocation14]
          %v399 = vlaneseq
          %v400 = vand.u32 %v399, 127
          %vm401 = vcmp.ge.s32.totalorder %v400, 0
          %vm402 = vcmp.lt.s32.totalorder %v400, 6
          %vm403 = vmand %vm401, %vm402
          %v404 = vld [vmem:[%s398] sm:$0x3f]
          %v405 = vsel %vm403, %v404, 0.0
          %v406 = vmul.f32 %v405, %v405
          %v407 = vadd.f32 %v390, %v406
          %v408 = vadd.f32 %v391, %v406
          %v409 = vlaneseq
          %v410 = vand.u32 %v409, 127
          %v411 = vmov %v410
          %v412 = vlaneseq
          %v413 = vshrl.u32 %v412, 7
          %v414 = vmov %v413
          %s415 = smov [#allocation15]
          %v416 = vlaneseq
          %v417 = vand.u32 %v416, 127
          %vm418 = vcmp.ge.s32.totalorder %v417, 0
          %vm419 = vcmp.lt.s32.totalorder %v417, 6
          %vm420 = vmand %vm418, %vm419
          %v421 = vld [vmem:[%s415] sm:$0x3f]
          %v422 = vsel %vm420, %v421, 0.0
          %v423 = vmul.f32 %v422, %v422
          %vm426 = vcmp.eq.s32.totalorder %v414, %v411
          %v427 = vsel %vm426, 0.0, %v423
          %v428 = vadd.f32 %v407, %v427
          %v429 = vadd.f32 %v408, %v423
          %430 = vadd.xlane.f32.xlu0 %v429
          %v431 = vpop.xlane.xlu0 %430
          %v432 = vrot.slane %v431, 4
          %v433 = vadd.f32 %v431, %v432
          %v434 = vrot.slane %v433, 2
          %v435 = vadd.f32 %v433, %v434
          %v436 = vrot.slane %v435, 1
          %v437 = vadd.f32 %v435, %v436
          %438 = vadd.xlane.f32.xlu0 %v428
          %v439 = vpop.xlane.xlu0 %438
          %v440 = vrot.slane %v439, 4
          %v441 = vadd.f32 %v439, %v440
          %v442 = vrot.slane %v441, 2
          %v443 = vadd.f32 %v441, %v442
          %v444 = vrot.slane %v443, 1
          %v445 = vadd.f32 %v443, %v444
          %s446 = vtos %v445
          %s447 = vtos %v437
          %s448 = smul.f32 1e-10, %s447
          %p449 = scmp.le.f32.partialorder %s446, %s448
          %p450 = scmp.ge.s32.totalorder %s355, 15
          %p451 = por %p449, %p450
        $region159: #{custom-call.11} parent=155 // loop_header_branch
          %899 = sbr.rel (%p451) target = $region163
        $region160: #{custom-call.11} parent=155 // loop_body
          loop: start=0, step=1, limit=11
          $region164: #{custom-call.11} parent=160 // loop_pre_header
            _
          $region165: #{custom-call.11} parent=160 // loop_header
            %s453 = sphi 0, %s457
            %p454 = scmp.ge.s32.totalorder %s453, 11
          $region166: #{custom-call.11} parent=160 // loop_header_branch
            %456 = sbr.rel (%p454) target = $region170
          $region167: #{custom-call.11} parent=160 // loop_body
            #allocation16 [shape = 'f32[1024]{0}', space=vmem, size = 0x1000, scoped, tag = 'a_tl_diag vmem']
            #allocation17 [shape = 'f32[1024]{0}', space=vmem, size = 0x1000, scoped, tag = 'a_tr_diag vmem']
            #allocation18 [shape = 'f32[1024]{0}', space=vmem, size = 0x1000, scoped, tag = 'a_br_diag vmem']
            #allocation19 [shape = 'f32[1024]{0}', space=vmem, size = 0x1000, scoped, tag = 'rt1 vmem']
            #allocation20 [shape = 'f32[1024]{0}', space=vmem, size = 0x1000, scoped, tag = 'rt2 vmem']
            #allocation21 [shape = 'f32[1024]{0}', space=vmem, size = 0x1000, scoped, tag = 'c vmem']
            #allocation22 [shape = 'f32[1024]{0}', space=vmem, size = 0x1000, scoped, tag = 's vmem']
            #allocation23 [shape = 'f32[4096]{0}', space=vmem, size = 0x4000, scoped, tag = 'c broadcast']
            #allocation24 [shape = 'f32[4096]{0}', space=vmem, size = 0x4000, scoped, tag = 's broadcast']
            %s458 = smov [#allocation12]
            %s459 = smov [#allocation16]
            %v460 = vlaneseq
            %v461 = vand.u32 %v460, 127
            %v462 = vmov %v461
            %v463 = vlaneseq
            %v464 = vshrl.u32 %v463, 7
            %v465 = vmov %v464
            %v466 = vld [vmem:[%s458] sm:$0x3f]
            %vm469 = vcmp.eq.s32.totalorder %v465, %v462
            %v470 = vsel %vm469, %v466, 0.0
            %v471 = vrot.slane %v470, 4
            %v472 = vadd.f32 %v470, %v471
            %v473 = vrot.slane %v472, 2
            %v474 = vadd.f32 %v472, %v473
            %v475 = vrot.slane %v474, 1
            %v476 = vadd.f32 %v474, %v475
            %477 = vst [vmem:[%s459] sm:$0x1] %v476
            %s478 = smov [#allocation13]
            %s479 = smov [#allocation17]
            %v480 = vlaneseq
            %v481 = vand.u32 %v480, 127
            %v482 = vmov %v481
            %v483 = vlaneseq
            %v484 = vshrl.u32 %v483, 7
            %v485 = vmov %v484
            %v486 = vld [vmem:[%s478] sm:$0x3f]
            %vm489 = vcmp.eq.s32.totalorder %v485, %v482
            %v490 = vsel %vm489, %v486, 0.0
            %v491 = vrot.slane %v490, 4
            %v492 = vadd.f32 %v490, %v491
            %v493 = vrot.slane %v492, 2
            %v494 = vadd.f32 %v492, %v493
            %v495 = vrot.slane %v494, 1
            %v496 = vadd.f32 %v494, %v495
            %497 = vst [vmem:[%s479] sm:$0x1] %v496
            %s498 = smov [#allocation15]
            %s499 = smov [#allocation18]
            %v500 = vlaneseq
            %v501 = vand.u32 %v500, 127
            %v502 = vmov %v501
            %v503 = vlaneseq
            %v504 = vshrl.u32 %v503, 7
            %v505 = vmov %v504
            %v506 = vld [vmem:[%s498] sm:$0x3f]
            %vm509 = vcmp.eq.s32.totalorder %v505, %v502
            %v510 = vsel %vm509, %v506, 0.0
            %v511 = vrot.slane %v510, 4
            %v512 = vadd.f32 %v510, %v511
            %v513 = vrot.slane %v512, 2
            %v514 = vadd.f32 %v512, %v513
            %v515 = vrot.slane %v514, 1
            %v516 = vadd.f32 %v514, %v515
            %517 = vst [vmem:[%s499] sm:$0x1] %v516
            %s518 = smov [#allocation21]
            %s519 = smov [#allocation22]
            %s520 = smov [#allocation16]
            %v521 = vld [vmem:[%s520] sm:$0xff]
            %s522 = smov [#allocation17]
            %v523 = vld [vmem:[%s522] sm:$0xff]
            %s524 = smov [#allocation18]
            %v525 = vld [vmem:[%s524] sm:$0xff]
            %v526 = vsub.f32 %v525, %v521
            %v527 = vmul.f32 2.0, %v523
            %v528 = vrcp.pop %v527
            %v529 = vmul.f32 %v526, %v528
            %vm530 = vcmp.ge.f32.partialorder %v529, 0.0
            %v531 = vmul.f32 %v529, %v529
            %v532 = vadd.f32 1.0, %v531
            %v533 = vrsqrt.pop %v532
            %v534 = vmul.f32 %v532, %v533
            %vm535 = vcmp.eq.f32.partialorder %v532, inf
            %v536 = vsel %vm535, %v532, %v534
            %vm537 = vcmp.eq.f32.partialorder %v532, 0.0
            %v538 = vand.u32 %v532, 2147483648
            %v539 = vsel %vm537, %v538, %v536
            %v540 = vxor.u32 %v539, 2147483648
            %v541 = vsel %vm530, %v539, %v540
            %v542 = vadd.f32 %v529, %v541
            %v543 = vrcp.pop %v542
            %v544 = vand.u32 2147483647, %v521
            %v545 = vand.u32 2147483647, %v523
            %v546 = vand.u32 2147483647, %v525
            %v547 = vmin.f32 %v544, %v546
            %v548 = vmul.f32 1.1920929e-08, %v547
            %vm549 = vcmp.le.f32.partialorder %v545, %v548
            %v550 = vsel %vm549, 0.0, %v543
            %v551 = vmul.f32 %v550, %v550
            %v552 = vadd.f32 1.0, %v551
            %v553 = vrsqrt.pop %v552
            %v554 = vmul.f32 %v550, %v553
            %v555 = vmul.f32 %v550, %v523
            %v556 = vsub.f32 %v521, %v555
            %v557 = vmul.f32 %v550, %v523
            %v558 = vadd.f32 %v525, %v557
            %s559 = smov [#allocation19]
            %560 = vst [vmem:[%s559] sm:$0xff] %v556
            %s561 = smov [#allocation20]
            %562 = vst [vmem:[%s561] sm:$0xff] %v558
            %s563 = smov %s518
            %564 = vst [vmem:[%s563] sm:$0xff] %v553
            %s565 = smov %s519
            %566 = vst [vmem:[%s565] sm:$0xff] %v554
            %s567 = smov [#allocation21]
            %v568 = vld [vmem:[%s567] ss:$0 sm:$0xff]
            %v569 = vlaneseq
            %v570 = vand.u32 %v569, 127
            %v571 = vmov %v570
            %v572 = vlaneseq
            %v573 = vshrl.u32 %v572, 7
            %v574 = vmov %v573
            %vm576 = vcmp.eq.s32.totalorder %v574, %v571
            %v577 = vsel %vm576, %v568, 0.0
            %578 = vadd.xlane.f32.xlu0 %v577
            %v579 = vpop.xlane.xlu0 %578
            %s580 = smov [#allocation23]
            %581 = vst [vmem:[%s580] sm:$0xff] %v579
            %s582 = smov [#allocation22]
            %v583 = vld [vmem:[%s582] ss:$0 sm:$0xff]
            %v584 = vlaneseq
            %v585 = vand.u32 %v584, 127
            %v586 = vmov %v585
            %v587 = vlaneseq
            %v588 = vshrl.u32 %v587, 7
            %v589 = vmov %v588
            %vm591 = vcmp.eq.s32.totalorder %v589, %v586
            %v592 = vsel %vm591, %v583, 0.0
            %593 = vadd.xlane.f32.xlu0 %v592
            %v594 = vpop.xlane.xlu0 %593
            %s595 = smov [#allocation24]
            %596 = vst [vmem:[%s595] sm:$0xff] %v594
            %s597 = smov [#allocation23]
            %v598 = vld [vmem:[%s597] sm:$0xff]
            %s599 = smov [#allocation24]
            %v600 = vld [vmem:[%s599] sm:$0xff]
            %s601 = smov [#allocation12]
            %s602 = smov [#allocation13]
            %s603 = smov [#allocation14]
            %s604 = smov [#allocation15]
            %v605 = vld [vmem:[%s601] sm:$0x3f]
            %v606 = vld [vmem:[%s602] sm:$0x3f]
            %v607 = vld [vmem:[%s603] sm:$0x3f]
            %v608 = vld [vmem:[%s604] sm:$0x3f]
            %v609 = vmul.f32 %v598, %v605
            %v610 = vmul.f32 %v600, %v607
            %v611 = vsub.f32 %v609, %v610
            %v612 = vmul.f32 %v598, %v606
            %v613 = vmul.f32 %v600, %v608
            %v614 = vsub.f32 %v612, %v613
            %v615 = vmul.f32 %v600, %v605
            %v616 = vmul.f32 %v598, %v607
            %v617 = vadd.f32 %v615, %v616
            %v618 = vmul.f32 %v600, %v606
            %v619 = vmul.f32 %v598, %v608
            %v620 = vadd.f32 %v618, %v619
            %621 = vst [vmem:[%s601] sm:$0x3f] %v611
            %622 = vst [vmem:[%s602] sm:$0x3f] %v614
            %623 = vst [vmem:[%s603] sm:$0x3f] %v617
            %624 = vst [vmem:[%s604] sm:$0x3f] %v620
            %s625 = smov [#allocation21]
            %v626 = vld [vmem:[%s625] ss:$0 sm:$0xff]
            %s627 = smov [#allocation22]
            %v628 = vld [vmem:[%s627] ss:$0 sm:$0xff]
            %s629 = smov [#allocation12]
            %s630 = smov [#allocation13]
            %s631 = smov [#allocation14]
            %s632 = smov [#allocation15]
            %v633 = vld [vmem:[%s629] sm:$0x3f]
            %v634 = vld [vmem:[%s630] sm:$0x3f]
            %v635 = vld [vmem:[%s631] sm:$0x3f]
            %v636 = vld [vmem:[%s632] sm:$0x3f]
            %v637 = vmul.f32 %v626, %v633
            %v638 = vmul.f32 %v628, %v634
            %v639 = vsub.f32 %v637, %v638
            %v640 = vmul.f32 %v628, %v633
            %v641 = vmul.f32 %v626, %v634
            %v642 = vadd.f32 %v640, %v641
            %v643 = vmul.f32 %v626, %v635
            %v644 = vmul.f32 %v628, %v636
            %v645 = vsub.f32 %v643, %v644
            %v646 = vmul.f32 %v628, %v635
            %v647 = vmul.f32 %v626, %v636
            %v648 = vadd.f32 %v646, %v647
            %649 = vst [vmem:[%s629] sm:$0x3f] %v639
            %650 = vst [vmem:[%s630] sm:$0x3f] %v642
            %651 = vst [vmem:[%s631] sm:$0x3f] %v645
            %652 = vst [vmem:[%s632] sm:$0x3f] %v648
            %s653 = smov [#allocation12]
            %s654 = smov [#allocation19]
            %v655 = vlaneseq
            %v656 = vand.u32 %v655, 127
            %v657 = vmov %v656
            %v658 = vlaneseq
            %v659 = vshrl.u32 %v658, 7
            %v660 = vmov %v659
            %v661 = vld [vmem:[%s654] ss:$0 sm:$0xff]
            %v662 = vld [vmem:[%s653] sm:$0x3f]
            %vm665 = vcmp.eq.s32.totalorder %v660, %v657
            %v666 = vsel %vm665, %v661, %v662
            %667 = vst [vmem:[%s653] sm:$0x3f] %v666
            %s668 = smov [#allocation13]
            %v669 = vlaneseq
            %v670 = vand.u32 %v669, 127
            %v671 = vmov %v670
            %v672 = vlaneseq
            %v673 = vshrl.u32 %v672, 7
            %v674 = vmov %v673
            %v675 = vld [vmem:[%s668] sm:$0x3f]
            %vm678 = vcmp.eq.s32.totalorder %v674, %v671
            %v679 = vsel %vm678, 0.0, %v675
            %680 = vst [vmem:[%s668] sm:$0x3f] %v679
            %s681 = smov [#allocation14]
            %v682 = vlaneseq
            %v683 = vand.u32 %v682, 127
            %v684 = vmov %v683
            %v685 = vlaneseq
            %v686 = vshrl.u32 %v685, 7
            %v687 = vmov %v686
            %v688 = vld [vmem:[%s681] sm:$0x3f]
            %vm691 = vcmp.eq.s32.totalorder %v687, %v684
            %v692 = vsel %vm691, 0.0, %v688
            %693 = vst [vmem:[%s681] sm:$0x3f] %v692
            %s694 = smov [#allocation15]
            %s695 = smov [#allocation20]
            %v696 = vlaneseq
            %v697 = vand.u32 %v696, 127
            %v698 = vmov %v697
            %v699 = vlaneseq
            %v700 = vshrl.u32 %v699, 7
            %v701 = vmov %v700
            %v702 = vld [vmem:[%s695] ss:$0 sm:$0xff]
            %v703 = vld [vmem:[%s694] sm:$0x3f]
            %vm706 = vcmp.eq.s32.totalorder %v701, %v698
            %v707 = vsel %vm706, %v702, %v703
            %708 = vst [vmem:[%s694] sm:$0x3f] %v707
            %s709 = smov [#allocation12]
            %s710 = smov [#allocation13]
            %v711 = vld [vmem:[%s710] sm:$0x3f]
            %712 = vrot.lane.b32.xlu0 %v711, 1
            %v713 = vpop.permute.xlu0 %712
            %v714 = vld [vmem:[%s709] sm:$0x3f]
            %v715 = vld [vmem:[%s709] sm:$0x3f]
            %716 = vrot.lane.b32.xlu0 %v715, 1
            %v717 = vpop.permute.xlu0 %716
            %v718 = vlaneseq
            %v719 = vand.u32 %v718, 127
            %vm720 = vcmp.eq.s32.totalorder %v719, 0
            %v721 = vsel %vm720, %v715, %v717
            %v722 = vlaneseq
            %v723 = vand.u32 %v722, 127
            %vm724 = vcmp.eq.s32.totalorder %v723, 1
            %v725 = vsel %vm724, %v713, %v721
            %v726 = vlaneseq
            %v727 = vand.u32 %v726, 127
            %vm728 = vcmp.ge.s32.totalorder %v727, 0
            %vm729 = vcmp.lt.s32.totalorder %v727, 6
            %vm730 = vmand %vm728, %vm729
            %v731 = vsel %vm730, %v725, 0.0
            %v732 = vld [vmem:[%s710] sm:$0x3f]
            %733 = vrot.lane.b32.xlu0 %v732, 127
            %v734 = vpop.permute.xlu0 %733
            %v735 = vlaneseq
            %v736 = vand.u32 %v735, 127
            %vm737 = vcmp.eq.s32.totalorder %v736, 5
            %v738 = vsel %vm737, %v714, %v734
            %739 = vst [vmem:[%s709] sm:$0x3f] %v731
            %740 = vst [vmem:[%s710] sm:$0x3f] %v738
            %s741 = smov [#allocation14]
            %s742 = smov [#allocation15]
            %v743 = vld [vmem:[%s742] sm:$0x3f]
            %744 = vrot.lane.b32.xlu0 %v743, 1
            %v745 = vpop.permute.xlu0 %744
            %v746 = vld [vmem:[%s741] sm:$0x3f]
            %v747 = vld [vmem:[%s741] sm:$0x3f]
            %748 = vrot.lane.b32.xlu0 %v747, 1
            %v749 = vpop.permute.xlu0 %748
            %v750 = vlaneseq
            %v751 = vand.u32 %v750, 127
            %vm752 = vcmp.eq.s32.totalorder %v751, 0
            %v753 = vsel %vm752, %v747, %v749
            %v754 = vlaneseq
            %v755 = vand.u32 %v754, 127
            %vm756 = vcmp.eq.s32.totalorder %v755, 1
            %v757 = vsel %vm756, %v745, %v753
            %v758 = vlaneseq
            %v759 = vand.u32 %v758, 127
            %vm760 = vcmp.ge.s32.totalorder %v759, 0
            %vm761 = vcmp.lt.s32.totalorder %v759, 6
            %vm762 = vmand %vm760, %vm761
            %v763 = vsel %vm762, %v757, 0.0
            %v764 = vld [vmem:[%s742] sm:$0x3f]
            %765 = vrot.lane.b32.xlu0 %v764, 127
            %v766 = vpop.permute.xlu0 %765
            %v767 = vlaneseq
            %v768 = vand.u32 %v767, 127
            %vm769 = vcmp.eq.s32.totalorder %v768, 5
            %v770 = vsel %vm769, %v746, %v766
            %771 = vst [vmem:[%s741] sm:$0x3f] %v763
            %772 = vst [vmem:[%s742] sm:$0x3f] %v770
            %s773 = smov [#allocation12]
            %s774 = smov [#allocation14]
            %v775 = vld [vmem:[%s773] ss:$0 sm:$0xff]
            %s777 = scalar_lea.vmem %s773, 4294967295
            %v778 = vld [vmem:[%s777] sm:$0x3e]
            %v779 = vlaneseq
            %v780 = vshrl.u32 %v779, 7
            %vm781 = vcmp.eq.s32.totalorder %v780, 0
            %v782 = vsel %vm781, %v775, %v778
            %s783 = scalar_lea.vmem %s773, 5
            %v784 = vld [vmem:[%s783] ss:$0 sm:$0xff]
            %785 = vst [vmem:[%s773] sm:$0x3f] %v782
            %v786 = vld [vmem:[%s774] ss:$0 sm:$0xff]
            %s787 = scalar_lea.vmem %s773, 1
            %788 = vst [vmem:[%s787] sm:$0x1] %v786
            %s789 = scalar_lea.vmem %s774, 1
            %v790 = vld [vmem:[%s789] sm:$0x1f]
            %v791 = vlaneseq
            %v792 = vshrl.u32 %v791, 7
            %vm793 = vcmp.eq.s32.totalorder %v792, 5
            %v794 = vsel %vm793, %v784, %v790
            %v795 = vld [vmem:[%s774] ss:$0 sm:$0xff]
            %796 = vst [vmem:[%s774] sm:$0x3f] %v794
            %s797 = smov [#allocation13]
            %s798 = smov [#allocation15]
            %v799 = vld [vmem:[%s797] ss:$0 sm:$0xff]
            %s801 = scalar_lea.vmem %s797, 4294967295
            %v802 = vld [vmem:[%s801] sm:$0x3e]
            %v803 = vlaneseq
            %v804 = vshrl.u32 %v803, 7
            %vm805 = vcmp.eq.s32.totalorder %v804, 0
            %v806 = vsel %vm805, %v799, %v802
            %s807 = scalar_lea.vmem %s797, 5
            %v808 = vld [vmem:[%s807] ss:$0 sm:$0xff]
            %809 = vst [vmem:[%s797] sm:$0x3f] %v806
            %v810 = vld [vmem:[%s798] ss:$0 sm:$0xff]
            %s811 = scalar_lea.vmem %s797, 1
            %812 = vst [vmem:[%s811] sm:$0x1] %v810
            %s813 = scalar_lea.vmem %s798, 1
            %v814 = vld [vmem:[%s813] sm:$0x1f]
            %v815 = vlaneseq
            %v816 = vshrl.u32 %v815, 7
            %vm817 = vcmp.eq.s32.totalorder %v816, 5
            %v818 = vsel %vm817, %v808, %v814
            %v819 = vld [vmem:[%s798] ss:$0 sm:$0xff]
            %820 = vst [vmem:[%s798] sm:$0x3f] %v818
            %s821 = smov [#allocation23]
            %v822 = vld [vmem:[%s821] sm:$0xff]
            %s823 = smov [#allocation24]
            %v824 = vld [vmem:[%s823] sm:$0xff]
            %s825 = smov %s297
            %s826 = smov %s301
            %s827 = smov %s305
            %s828 = smov %s309
            %v829 = vld [vmem:[%s825] sm:$0x3f]
            %v830 = vld [vmem:[%s826] sm:$0x3f]
            %v831 = vld [vmem:[%s827] sm:$0x3f]
            %v832 = vld [vmem:[%s828] sm:$0x3f]
            %v833 = vmul.f32 %v822, %v829
            %v834 = vmul.f32 %v824, %v831
            %v835 = vsub.f32 %v833, %v834
            %v836 = vmul.f32 %v822, %v830
            %v837 = vmul.f32 %v824, %v832
            %v838 = vsub.f32 %v836, %v837
            %v839 = vmul.f32 %v824, %v829
            %v840 = vmul.f32 %v822, %v831
            %v841 = vadd.f32 %v839, %v840
            %v842 = vmul.f32 %v824, %v830
            %v843 = vmul.f32 %v822, %v832
            %v844 = vadd.f32 %v842, %v843
            %845 = vst [vmem:[%s825] sm:$0x3f] %v835
            %846 = vst [vmem:[%s826] sm:$0x3f] %v838
            %847 = vst [vmem:[%s827] sm:$0x3f] %v841
            %848 = vst [vmem:[%s828] sm:$0x3f] %v844
            %s849 = smov %s297
            %s850 = smov %s305
            %v851 = vld [vmem:[%s849] ss:$0 sm:$0xff]
            %s853 = scalar_lea.vmem %s849, 4294967295
            %v854 = vld [vmem:[%s853] sm:$0x3e]
            %v855 = vlaneseq
            %v856 = vshrl.u32 %v855, 7
            %vm857 = vcmp.eq.s32.totalorder %v856, 0
            %v858 = vsel %vm857, %v851, %v854
            %s859 = scalar_lea.vmem %s849, 5
            %v860 = vld [vmem:[%s859] ss:$0 sm:$0xff]
            %861 = vst [vmem:[%s849] sm:$0x3f] %v858
            %v862 = vld [vmem:[%s850] ss:$0 sm:$0xff]
            %s863 = scalar_lea.vmem %s849, 1
            %864 = vst [vmem:[%s863] sm:$0x1] %v862
            %s865 = scalar_lea.vmem %s850, 1
            %v866 = vld [vmem:[%s865] sm:$0x1f]
            %v867 = vlaneseq
            %v868 = vshrl.u32 %v867, 7
            %vm869 = vcmp.eq.s32.totalorder %v868, 5
            %v870 = vsel %vm869, %v860, %v866
            %v871 = vld [vmem:[%s850] ss:$0 sm:$0xff]
            %872 = vst [vmem:[%s850] sm:$0x3f] %v870
            %s873 = smov %s301
            %s874 = smov %s309
            %v875 = vld [vmem:[%s873] ss:$0 sm:$0xff]
            %s877 = scalar_lea.vmem %s873, 4294967295
            %v878 = vld [vmem:[%s877] sm:$0x3e]
            %v879 = vlaneseq
            %v880 = vshrl.u32 %v879, 7
            %vm881 = vcmp.eq.s32.totalorder %v880, 0
            %v882 = vsel %vm881, %v875, %v878
            %s883 = scalar_lea.vmem %s873, 5
            %v884 = vld [vmem:[%s883] ss:$0 sm:$0xff]
            %885 = vst [vmem:[%s873] sm:$0x3f] %v882
            %v886 = vld [vmem:[%s874] ss:$0 sm:$0xff]
            %s887 = scalar_lea.vmem %s873, 1
            %888 = vst [vmem:[%s887] sm:$0x1] %v886
            %s889 = scalar_lea.vmem %s874, 1
            %v890 = vld [vmem:[%s889] sm:$0x1f]
            %v891 = vlaneseq
            %v892 = vshrl.u32 %v891, 7
            %vm893 = vcmp.eq.s32.totalorder %v892, 5
            %v894 = vsel %vm893, %v884, %v890
            %v895 = vld [vmem:[%s874] ss:$0 sm:$0xff]
            %896 = vst [vmem:[%s874] sm:$0x3f] %v894
          $region168: #{custom-call.11} parent=160 // loop_footer
            %s457 = sadd.s32 1, %s453
          $region169: #{custom-call.11} parent=160 // loop_footer_branch
            %452 = sbr.rel target = $region165
          $region170: #{custom-call.11} parent=160 // loop_exit
            _
          %s897 = sadd.s32 %s355, 1
        $region161: #{custom-call.11} parent=155 // loop_footer
          _
        $region162: #{custom-call.11} parent=155 // loop_footer_branch
          %354 = sbr.rel target = $region158
        $region163: #{custom-call.11} parent=155 // loop_exit
          _
        %s900 = sand.u32 %s17, 7
        %s901 = scalar_lea.vmem [#allocation4], %s900
        %s902 = sand.u32 %s17, 7
        %s903 = scalar_lea.vmem [#allocation6], %s902
        %s904 = smov [#allocation12]
        %s905 = smov %s901
        %v906 = vlaneseq
        %v907 = vand.u32 %v906, 127
        %v908 = vmov %v907
        %v909 = vlaneseq
        %v910 = vshrl.u32 %v909, 7
        %v911 = vmov %v910
        %v912 = vld [vmem:[%s904] sm:$0x3f]
        %vm915 = vcmp.eq.s32.totalorder %v911, %v908
        %v916 = vsel %vm915, %v912, 0.0
        %v917 = vrot.slane %v916, 4
        %v918 = vadd.f32 %v916, %v917
        %v919 = vrot.slane %v918, 2
        %v920 = vadd.f32 %v918, %v919
        %v921 = vrot.slane %v920, 1
        %v922 = vadd.f32 %v920, %v921
        %923 = vst [vmem:[%s905] sm:$0x1] %v922
        %s924 = smov [#allocation15]
        %s925 = smov %s903
        %v926 = vlaneseq
        %v927 = vand.u32 %v926, 127
        %v928 = vmov %v927
        %v929 = vlaneseq
        %v930 = vshrl.u32 %v929, 7
        %v931 = vmov %v930
        %v932 = vld [vmem:[%s924] sm:$0x3f]
        %vm935 = vcmp.eq.s32.totalorder %v931, %v928
        %v936 = vsel %vm935, %v932, 0.0
        %v937 = vrot.slane %v936, 4
        %v938 = vadd.f32 %v936, %v937
        %v939 = vrot.slane %v938, 2
        %v940 = vadd.f32 %v938, %v939
        %v941 = vrot.slane %v940, 1
        %v942 = vadd.f32 %v940, %v941
        %943 = vst [vmem:[%s925] sm:$0x1] %v942
        %s945 = sshll.u32 1, 2
        %s946 = ssub.s32 %s945, 1
        %v948 = vld [vmem:[#allocation4] sm:%s946]
        %s949 = sshll.u32 1, 2
        %s950 = ssub.s32 %s949, 1
        %951 = vst [vmem:[%s287] sm:%s950] %v948
        %s953 = sshll.u32 1, 2
        %s954 = ssub.s32 %s953, 1
        %v956 = vld [vmem:[#allocation6] sm:%s954]
        %s957 = sshll.u32 1, 2
        %s958 = ssub.s32 %s957, 1
        %959 = vst [vmem:[%s293] sm:%s958] %v956
        %s960 = sand.u32 %s27, 1
        %s961 = sand.u32 %s27, 1
        %s962 = smul.addr %s961, 2
        %s963 = scalar_lea.vmem [#allocation5], %s962
        %s964 = sand.u32 %s55, 1
        %s965 = sand.u32 %s55, 1
        %s966 = smul.addr %s965, 2
        %s967 = scalar_lea.vmem [#allocation7], %s966
        %s968 = sand.u32 %s17, 1
        %s969 = sand.u32 %s17, 1
        %s970 = smul.addr %s969, 8
        %s971 = scalar_lea.vmem [#allocation8], %s970
        %s972 = sand.u32 %s17, 1
        %s973 = sand.u32 %s17, 1
        %s974 = smul.addr %s973, 8
        %s975 = scalar_lea.vmem [#allocation9], %s974
        %s976 = sand.u32 %s17, 1
        %s977 = sand.u32 %s17, 1
        %s978 = smul.addr %s977, 8
        %s979 = scalar_lea.vmem [#allocation10], %s978
        %s980 = sand.u32 %s17, 1
        %s981 = sand.u32 %s17, 1
        %s982 = smul.addr %s981, 8
        %s983 = scalar_lea.vmem [#allocation11], %s982
        // Predicated region
        $region171: #{custom-call.11} parent=155 // pred_check
          %p984 = pneg %p37
        $region172: #{custom-call.11} parent=155 // pred_check_branch
          %986 = sbr.rel (%p984) target = $region174
        $region173: #{custom-call.11} parent=155 // pred_region
          %s987 = sshrl.u32 %s17, 3
          %s988 = smul.addr %s987, 2
          %s989 = scalar_lea.vmem %s4, %s988
          // Predicated region
          $region175: #{custom-call.11} parent=173 // pred_check
            _
          $region176: #{custom-call.11} parent=173 // pred_check_branch
            %991 = sbr.rel (0) target = $region178
          $region177: #{custom-call.11} parent=173 // pred_region
            // Predicated region
            $region179: #{custom-call.11} parent=177 // pred_check
              _
            $region180: #{custom-call.11} parent=177 // pred_check_branch
              %993 = sbr.rel target = $region182
            $region181: #{custom-call.11} parent=177 // pred_region
              // Predicated region
              $region194: #{custom-call.11} parent=181 // pred_check
                _
              $region195: #{custom-call.11} parent=181 // pred_check_branch
                %1009 = sbr.rel (0) target = $region197
              $region196: #{custom-call.11} parent=181 // pred_region
                %s1011 = ssub.s32 4, 1
                loop: start=0, step=1, limit=1
                $region198: #{custom-call.11} parent=196 // loop_pre_header
                  _
                $region199: #{custom-call.11} parent=196 // loop_header
                  %s1013 = sphi 0, %s1017
                  %p1014 = scmp.ge.s32.totalorder %s1013, 1
                  %s1018 = sphi %s963, %s963
                  %s1019 = sphi %s989, %s989
                $region200: #{custom-call.11} parent=196 // loop_header_branch
                  %1016 = sbr.rel (%p1014) target = $region204
                $region201: #{custom-call.11} parent=196 // loop_body
                  %v1020 = vld [vmem:[%s1018] sm:%s1011]
                  %1021 = vst [vmem:[%s1019] sm:%s1011] %v1020
                $region202: #{custom-call.11} parent=196 // loop_footer
                  %s1017 = sadd.s32 1, %s1013
                $region203: #{custom-call.11} parent=196 // loop_footer_branch
                  %1012 = sbr.rel target = $region199
                $region204: #{custom-call.11} parent=196 // loop_exit
                  _
              $region197: #{custom-call.11} parent=181 // pred_fallthru
                _
            $region182: #{custom-call.11} parent=177 // pred_fallthru
              _
            // Predicated region
            $region183: #{custom-call.11} parent=177 // pred_check
              _
            $region184: #{custom-call.11} parent=177 // pred_check_branch
              %995 = sbr.rel (0) target = $region186
            $region185: #{custom-call.11} parent=177 // pred_region
              %s997 = ssub.s32 4, 1
              loop: start=0, step=1, limit=1
              $region187: #{custom-call.11} parent=185 // loop_pre_header
                _
              $region188: #{custom-call.11} parent=185 // loop_header
                %s999 = sphi 0, %s1003
                %p1000 = scmp.ge.s32.totalorder %s999, 1
                %s1004 = sphi %s963, %s963
                %s1005 = sphi %s989, %s989
              $region189: #{custom-call.11} parent=185 // loop_header_branch
                %1002 = sbr.rel (%p1000) target = $region193
              $region190: #{custom-call.11} parent=185 // loop_body
                %v1006 = vld [vmem:[%s1004] sm:%s997]
                %1007 = vst [vmem:[%s1005] sm:%s997] %v1006
              $region191: #{custom-call.11} parent=185 // loop_footer
                %s1003 = sadd.s32 1, %s999
              $region192: #{custom-call.11} parent=185 // loop_footer_branch
                %998 = sbr.rel target = $region188
              $region193: #{custom-call.11} parent=185 // loop_exit
                _
            $region186: #{custom-call.11} parent=177 // pred_fallthru
              _
          $region178: #{custom-call.11} parent=173 // pred_fallthru
            _
          %1022 = vnop
        $region174: #{custom-call.11} parent=155 // pred_fallthru
          _
        // Predicated region
        $region205: #{custom-call.11} parent=155 // pred_check
          %p1023 = pneg %p65
        $region206: #{custom-call.11} parent=155 // pred_check_branch
          %1025 = sbr.rel (%p1023) target = $region208
        $region207: #{custom-call.11} parent=155 // pred_region
          %s1026 = sshrl.u32 %s17, 3
          %s1027 = smul.addr %s1026, 2
          %s1028 = scalar_lea.vmem %s5, %s1027
          // Predicated region
          $region209: #{custom-call.11} parent=207 // pred_check
            _
          $region210: #{custom-call.11} parent=207 // pred_check_branch
            %1030 = sbr.rel (0) target = $region212
          $region211: #{custom-call.11} parent=207 // pred_region
            // Predicated region
            $region213: #{custom-call.11} parent=211 // pred_check
              _
            $region214: #{custom-call.11} parent=211 // pred_check_branch
              %1032 = sbr.rel target = $region216
            $region215: #{custom-call.11} parent=211 // pred_region
              // Predicated region
              $region228: #{custom-call.11} parent=215 // pred_check
                _
              $region229: #{custom-call.11} parent=215 // pred_check_branch
                %1048 = sbr.rel (0) target = $region231
              $region230: #{custom-call.11} parent=215 // pred_region
                %s1050 = ssub.s32 4, 1
                loop: start=0, step=1, limit=1
                $region232: #{custom-call.11} parent=230 // loop_pre_header
                  _
                $region233: #{custom-call.11} parent=230 // loop_header
                  %s1052 = sphi 0, %s1056
                  %p1053 = scmp.ge.s32.totalorder %s1052, 1
                  %s1057 = sphi %s967, %s967
                  %s1058 = sphi %s1028, %s1028
                $region234: #{custom-call.11} parent=230 // loop_header_branch
                  %1055 = sbr.rel (%p1053) target = $region238
                $region235: #{custom-call.11} parent=230 // loop_body
                  %v1059 = vld [vmem:[%s1057] sm:%s1050]
                  %1060 = vst [vmem:[%s1058] sm:%s1050] %v1059
                $region236: #{custom-call.11} parent=230 // loop_footer
                  %s1056 = sadd.s32 1, %s1052
                $region237: #{custom-call.11} parent=230 // loop_footer_branch
                  %1051 = sbr.rel target = $region233
                $region238: #{custom-call.11} parent=230 // loop_exit
                  _
              $region231: #{custom-call.11} parent=215 // pred_fallthru
                _
            $region216: #{custom-call.11} parent=211 // pred_fallthru
              _
            // Predicated region
            $region217: #{custom-call.11} parent=211 // pred_check
              _
            $region218: #{custom-call.11} parent=211 // pred_check_branch
              %1034 = sbr.rel (0) target = $region220
            $region219: #{custom-call.11} parent=211 // pred_region
              %s1036 = ssub.s32 4, 1
              loop: start=0, step=1, limit=1
              $region221: #{custom-call.11} parent=219 // loop_pre_header
                _
              $region222: #{custom-call.11} parent=219 // loop_header
                %s1038 = sphi 0, %s1042
                %p1039 = scmp.ge.s32.totalorder %s1038, 1
                %s1043 = sphi %s967, %s967
                %s1044 = sphi %s1028, %s1028
              $region223: #{custom-call.11} parent=219 // loop_header_branch
                %1041 = sbr.rel (%p1039) target = $region227
              $region224: #{custom-call.11} parent=219 // loop_body
                %v1045 = vld [vmem:[%s1043] sm:%s1036]
                %1046 = vst [vmem:[%s1044] sm:%s1036] %v1045
              $region225: #{custom-call.11} parent=219 // loop_footer
                %s1042 = sadd.s32 1, %s1038
              $region226: #{custom-call.11} parent=219 // loop_footer_branch
                %1037 = sbr.rel target = $region222
              $region227: #{custom-call.11} parent=219 // loop_exit
                _
            $region220: #{custom-call.11} parent=211 // pred_fallthru
              _
          $region212: #{custom-call.11} parent=207 // pred_fallthru
            _
          %1061 = vnop
        $region208: #{custom-call.11} parent=155 // pred_fallthru
          _
        %s1062 = smul.addr %s17, 8
        %s1063 = scalar_lea.vmem %s6, %s1062
        // Predicated region
        $region239: #{custom-call.11} parent=155 // pred_check
          _
        $region240: #{custom-call.11} parent=155 // pred_check_branch
          %1065 = sbr.rel (0) target = $region242
        $region241: #{custom-call.11} parent=155 // pred_region
          // Predicated region
          $region243: #{custom-call.11} parent=241 // pred_check
            _
          $region244: #{custom-call.11} parent=241 // pred_check_branch
            %1067 = sbr.rel (0) target = $region246
          $region245: #{custom-call.11} parent=241 // pred_region
            // Predicated region
            $region258: #{custom-call.11} parent=245 // pred_check
              _
            $region259: #{custom-call.11} parent=245 // pred_check_branch
              %1083 = sbr.rel (0) target = $region261
            $region260: #{custom-call.11} parent=245 // pred_region
              loop: start=0, step=1, limit=1
              $region262: #{custom-call.11} parent=260 // loop_pre_header
                _
              $region263: #{custom-call.11} parent=260 // loop_header
                %s1085 = sphi 0, %s1089
                %p1086 = scmp.ge.s32.totalorder %s1085, 1
                %s1090 = sphi %s971, %s971
                %s1091 = sphi %s1063, %s1063
              $region264: #{custom-call.11} parent=260 // loop_header_branch
                %1088 = sbr.rel (%p1086) target = $region268
              $region265: #{custom-call.11} parent=260 // loop_body
                %v1092 = vld [vmem:[%s1090] sm:$0xff]
                %1093 = vst [vmem:[%s1091] sm:$0xff] %v1092
              $region266: #{custom-call.11} parent=260 // loop_footer
                %s1089 = sadd.s32 1, %s1085
              $region267: #{custom-call.11} parent=260 // loop_footer_branch
                %1084 = sbr.rel target = $region263
              $region268: #{custom-call.11} parent=260 // loop_exit
                _
            $region261: #{custom-call.11} parent=245 // pred_fallthru
              _
            // Predicated region
            $region269: #{custom-call.11} parent=245 // pred_check
              _
            $region270: #{custom-call.11} parent=245 // pred_check_branch
              %1095 = sbr.rel target = $region272
            $region271: #{custom-call.11} parent=245 // pred_region
              _
            $region272: #{custom-call.11} parent=245 // pred_fallthru
              _
          $region246: #{custom-call.11} parent=241 // pred_fallthru
            _
          // Predicated region
          $region247: #{custom-call.11} parent=241 // pred_check
            _
          $region248: #{custom-call.11} parent=241 // pred_check_branch
            %1069 = sbr.rel target = $region250
          $region249: #{custom-call.11} parent=241 // pred_region
            %s1071 = ssub.s32 256, 1
            loop: start=0, step=1, limit=1
            $region251: #{custom-call.11} parent=249 // loop_pre_header
              _
            $region252: #{custom-call.11} parent=249 // loop_header
              %s1073 = sphi 0, %s1077
              %p1074 = scmp.ge.s32.totalorder %s1073, 1
              %s1078 = sphi %s971, %s971
              %s1079 = sphi %s1063, %s1063
            $region253: #{custom-call.11} parent=249 // loop_header_branch
              %1076 = sbr.rel (%p1074) target = $region257
            $region254: #{custom-call.11} parent=249 // loop_body
              %v1080 = vld [vmem:[%s1078] sm:%s1071]
              %1081 = vst [vmem:[%s1079] sm:%s1071] %v1080
            $region255: #{custom-call.11} parent=249 // loop_footer
              %s1077 = sadd.s32 1, %s1073
            $region256: #{custom-call.11} parent=249 // loop_footer_branch
              %1072 = sbr.rel target = $region252
            $region257: #{custom-call.11} parent=249 // loop_exit
              _
          $region250: #{custom-call.11} parent=241 // pred_fallthru
            _
        $region242: #{custom-call.11} parent=155 // pred_fallthru
          _
        %1096 = vnop
        %s1097 = smul.addr %s17, 8
        %s1098 = scalar_lea.vmem %s7, %s1097
        // Predicated region
        $region273: #{custom-call.11} parent=155 // pred_check
          _
        $region274: #{custom-call.11} parent=155 // pred_check_branch
          %1100 = sbr.rel (0) target = $region276
        $region275: #{custom-call.11} parent=155 // pred_region
          // Predicated region
          $region277: #{custom-call.11} parent=275 // pred_check
            _
          $region278: #{custom-call.11} parent=275 // pred_check_branch
            %1102 = sbr.rel (0) target = $region280
          $region279: #{custom-call.11} parent=275 // pred_region
            // Predicated region
            $region292: #{custom-call.11} parent=279 // pred_check
              _
            $region293: #{custom-call.11} parent=279 // pred_check_branch
              %1118 = sbr.rel (0) target = $region295
            $region294: #{custom-call.11} parent=279 // pred_region
              loop: start=0, step=1, limit=1
              $region296: #{custom-call.11} parent=294 // loop_pre_header
                _
              $region297: #{custom-call.11} parent=294 // loop_header
                %s1120 = sphi 0, %s1124
                %p1121 = scmp.ge.s32.totalorder %s1120, 1
                %s1125 = sphi %s975, %s975
                %s1126 = sphi %s1098, %s1098
              $region298: #{custom-call.11} parent=294 // loop_header_branch
                %1123 = sbr.rel (%p1121) target = $region302
              $region299: #{custom-call.11} parent=294 // loop_body
                %v1127 = vld [vmem:[%s1125] sm:$0xff]
                %1128 = vst [vmem:[%s1126] sm:$0xff] %v1127
              $region300: #{custom-call.11} parent=294 // loop_footer
                %s1124 = sadd.s32 1, %s1120
              $region301: #{custom-call.11} parent=294 // loop_footer_branch
                %1119 = sbr.rel target = $region297
              $region302: #{custom-call.11} parent=294 // loop_exit
                _
            $region295: #{custom-call.11} parent=279 // pred_fallthru
              _
            // Predicated region
            $region303: #{custom-call.11} parent=279 // pred_check
              _
            $region304: #{custom-call.11} parent=279 // pred_check_branch
              %1130 = sbr.rel target = $region306
            $region305: #{custom-call.11} parent=279 // pred_region
              _
            $region306: #{custom-call.11} parent=279 // pred_fallthru
              _
          $region280: #{custom-call.11} parent=275 // pred_fallthru
            _
          // Predicated region
          $region281: #{custom-call.11} parent=275 // pred_check
            _
          $region282: #{custom-call.11} parent=275 // pred_check_branch
            %1104 = sbr.rel target = $region284
          $region283: #{custom-call.11} parent=275 // pred_region
            %s1106 = ssub.s32 256, 1
            loop: start=0, step=1, limit=1
            $region285: #{custom-call.11} parent=283 // loop_pre_header
              _
            $region286: #{custom-call.11} parent=283 // loop_header
              %s1108 = sphi 0, %s1112
              %p1109 = scmp.ge.s32.totalorder %s1108, 1
              %s1113 = sphi %s975, %s975
              %s1114 = sphi %s1098, %s1098
            $region287: #{custom-call.11} parent=283 // loop_header_branch
              %1111 = sbr.rel (%p1109) target = $region291
            $region288: #{custom-call.11} parent=283 // loop_body
              %v1115 = vld [vmem:[%s1113] sm:%s1106]
              %1116 = vst [vmem:[%s1114] sm:%s1106] %v1115
            $region289: #{custom-call.11} parent=283 // loop_footer
              %s1112 = sadd.s32 1, %s1108
            $region290: #{custom-call.11} parent=283 // loop_footer_branch
              %1107 = sbr.rel target = $region286
            $region291: #{custom-call.11} parent=283 // loop_exit
              _
          $region284: #{custom-call.11} parent=275 // pred_fallthru
            _
        $region276: #{custom-call.11} parent=155 // pred_fallthru
          _
        %1131 = vnop
        %s1132 = smul.addr %s17, 8
        %s1133 = scalar_lea.vmem %s8, %s1132
        // Predicated region
        $region307: #{custom-call.11} parent=155 // pred_check
          _
        $region308: #{custom-call.11} parent=155 // pred_check_branch
          %1135 = sbr.rel (0) target = $region310
        $region309: #{custom-call.11} parent=155 // pred_region
          // Predicated region
          $region311: #{custom-call.11} parent=309 // pred_check
            _
          $region312: #{custom-call.11} parent=309 // pred_check_branch
            %1137 = sbr.rel (0) target = $region314
          $region313: #{custom-call.11} parent=309 // pred_region
            // Predicated region
            $region326: #{custom-call.11} parent=313 // pred_check
              _
            $region327: #{custom-call.11} parent=313 // pred_check_branch
              %1153 = sbr.rel (0) target = $region329
            $region328: #{custom-call.11} parent=313 // pred_region
              loop: start=0, step=1, limit=1
              $region330: #{custom-call.11} parent=328 // loop_pre_header
                _
              $region331: #{custom-call.11} parent=328 // loop_header
                %s1155 = sphi 0, %s1159
                %p1156 = scmp.ge.s32.totalorder %s1155, 1
                %s1160 = sphi %s979, %s979
                %s1161 = sphi %s1133, %s1133
              $region332: #{custom-call.11} parent=328 // loop_header_branch
                %1158 = sbr.rel (%p1156) target = $region336
              $region333: #{custom-call.11} parent=328 // loop_body
                %v1162 = vld [vmem:[%s1160] sm:$0xff]
                %1163 = vst [vmem:[%s1161] sm:$0xff] %v1162
              $region334: #{custom-call.11} parent=328 // loop_footer
                %s1159 = sadd.s32 1, %s1155
              $region335: #{custom-call.11} parent=328 // loop_footer_branch
                %1154 = sbr.rel target = $region331
              $region336: #{custom-call.11} parent=328 // loop_exit
                _
            $region329: #{custom-call.11} parent=313 // pred_fallthru
              _
            // Predicated region
            $region337: #{custom-call.11} parent=313 // pred_check
              _
            $region338: #{custom-call.11} parent=313 // pred_check_branch
              %1165 = sbr.rel target = $region340
            $region339: #{custom-call.11} parent=313 // pred_region
              _
            $region340: #{custom-call.11} parent=313 // pred_fallthru
              _
          $region314: #{custom-call.11} parent=309 // pred_fallthru
            _
          // Predicated region
          $region315: #{custom-call.11} parent=309 // pred_check
            _
          $region316: #{custom-call.11} parent=309 // pred_check_branch
            %1139 = sbr.rel target = $region318
          $region317: #{custom-call.11} parent=309 // pred_region
            %s1141 = ssub.s32 256, 1
            loop: start=0, step=1, limit=1
            $region319: #{custom-call.11} parent=317 // loop_pre_header
              _
            $region320: #{custom-call.11} parent=317 // loop_header
              %s1143 = sphi 0, %s1147
              %p1144 = scmp.ge.s32.totalorder %s1143, 1
              %s1148 = sphi %s979, %s979
              %s1149 = sphi %s1133, %s1133
            $region321: #{custom-call.11} parent=317 // loop_header_branch
              %1146 = sbr.rel (%p1144) target = $region325
            $region322: #{custom-call.11} parent=317 // loop_body
              %v1150 = vld [vmem:[%s1148] sm:%s1141]
              %1151 = vst [vmem:[%s1149] sm:%s1141] %v1150
            $region323: #{custom-call.11} parent=317 // loop_footer
              %s1147 = sadd.s32 1, %s1143
            $region324: #{custom-call.11} parent=317 // loop_footer_branch
              %1142 = sbr.rel target = $region320
            $region325: #{custom-call.11} parent=317 // loop_exit
              _
          $region318: #{custom-call.11} parent=309 // pred_fallthru
            _
        $region310: #{custom-call.11} parent=155 // pred_fallthru
          _
        %1166 = vnop
        %s1167 = smul.addr %s17, 8
        %s1168 = scalar_lea.vmem %s9, %s1167
        // Predicated region
        $region341: #{custom-call.11} parent=155 // pred_check
          _
        $region342: #{custom-call.11} parent=155 // pred_check_branch
          %1170 = sbr.rel (0) target = $region344
        $region343: #{custom-call.11} parent=155 // pred_region
          // Predicated region
          $region345: #{custom-call.11} parent=343 // pred_check
            _
          $region346: #{custom-call.11} parent=343 // pred_check_branch
            %1172 = sbr.rel (0) target = $region348
          $region347: #{custom-call.11} parent=343 // pred_region
            // Predicated region
            $region360: #{custom-call.11} parent=347 // pred_check
              _
            $region361: #{custom-call.11} parent=347 // pred_check_branch
              %1188 = sbr.rel (0) target = $region363
            $region362: #{custom-call.11} parent=347 // pred_region
              loop: start=0, step=1, limit=1
              $region364: #{custom-call.11} parent=362 // loop_pre_header
                _
              $region365: #{custom-call.11} parent=362 // loop_header
                %s1190 = sphi 0, %s1194
                %p1191 = scmp.ge.s32.totalorder %s1190, 1
                %s1195 = sphi %s983, %s983
                %s1196 = sphi %s1168, %s1168
              $region366: #{custom-call.11} parent=362 // loop_header_branch
                %1193 = sbr.rel (%p1191) target = $region370
              $region367: #{custom-call.11} parent=362 // loop_body
                %v1197 = vld [vmem:[%s1195] sm:$0xff]
                %1198 = vst [vmem:[%s1196] sm:$0xff] %v1197
              $region368: #{custom-call.11} parent=362 // loop_footer
                %s1194 = sadd.s32 1, %s1190
              $region369: #{custom-call.11} parent=362 // loop_footer_branch
                %1189 = sbr.rel target = $region365
              $region370: #{custom-call.11} parent=362 // loop_exit
                _
            $region363: #{custom-call.11} parent=347 // pred_fallthru
              _
            // Predicated region
            $region371: #{custom-call.11} parent=347 // pred_check
              _
            $region372: #{custom-call.11} parent=347 // pred_check_branch
              %1200 = sbr.rel target = $region374
            $region373: #{custom-call.11} parent=347 // pred_region
              _
            $region374: #{custom-call.11} parent=347 // pred_fallthru
              _
          $region348: #{custom-call.11} parent=343 // pred_fallthru
            _
          // Predicated region
          $region349: #{custom-call.11} parent=343 // pred_check
            _
          $region350: #{custom-call.11} parent=343 // pred_check_branch
            %1174 = sbr.rel target = $region352
          $region351: #{custom-call.11} parent=343 // pred_region
            %s1176 = ssub.s32 256, 1
            loop: start=0, step=1, limit=1
            $region353: #{custom-call.11} parent=351 // loop_pre_header
              _
            $region354: #{custom-call.11} parent=351 // loop_header
              %s1178 = sphi 0, %s1182
              %p1179 = scmp.ge.s32.totalorder %s1178, 1
              %s1183 = sphi %s983, %s983
              %s1184 = sphi %s1168, %s1168
            $region355: #{custom-call.11} parent=351 // loop_header_branch
              %1181 = sbr.rel (%p1179) target = $region359
            $region356: #{custom-call.11} parent=351 // loop_body
              %v1185 = vld [vmem:[%s1183] sm:%s1176]
              %1186 = vst [vmem:[%s1184] sm:%s1176] %v1185
            $region357: #{custom-call.11} parent=351 // loop_footer
              %s1182 = sadd.s32 1, %s1178
            $region358: #{custom-call.11} parent=351 // loop_footer_branch
              %1177 = sbr.rel target = $region354
            $region359: #{custom-call.11} parent=351 // loop_exit
              _
          $region352: #{custom-call.11} parent=343 // pred_fallthru
            _
        $region344: #{custom-call.11} parent=155 // pred_fallthru
          _
        %1201 = vnop
      $region156: #{custom-call.11} parent=5 // pred_fallthru
        _
      %p1202 = scmp.le.s32.totalorder 2, %s12
      // Predicated region
      $region375: #{custom-call.11} parent=5 // pred_check
        %p1203 = pneg %p1202
      $region376: #{custom-call.11} parent=5 // pred_check_branch
        %1205 = sbr.rel (%p1203) target = $region378
      $region377: #{custom-call.11} parent=5 // pred_region
        %s1206 = ssub.s32 %s12, 2
        // Predicated region
        $region379: #{custom-call.11} parent=377 // pred_check
          %p1207 = pneg %p43
        $region380: #{custom-call.11} parent=377 // pred_check_branch
          %1209 = sbr.rel (%p1207) target = $region382
        $region381: #{custom-call.11} parent=377 // pred_region
          %s1210 = sand.u32 %s28, 1
          %s1211 = sand.u32 %s28, 1
          %s1212 = smul.addr %s1211, 2
          %s1213 = scalar_lea.vmem [#allocation5], %s1212
        $region382: #{custom-call.11} parent=377 // pred_fallthru
          _
        // Predicated region
        $region383: #{custom-call.11} parent=377 // pred_check
          %p1214 = pneg %p71
        $region384: #{custom-call.11} parent=377 // pred_check_branch
          %1216 = sbr.rel (%p1214) target = $region386
        $region385: #{custom-call.11} parent=377 // pred_region
          %s1217 = sand.u32 %s56, 1
          %s1218 = sand.u32 %s56, 1
          %s1219 = smul.addr %s1218, 2
          %s1220 = scalar_lea.vmem [#allocation7], %s1219
        $region386: #{custom-call.11} parent=377 // pred_fallthru
          _
        %s1221 = sand.u32 %s18, 1
        %s1222 = sand.u32 %s18, 1
        %s1223 = smul.addr %s1222, 8
        %s1224 = scalar_lea.vmem [#allocation8], %s1223
        %s1225 = sand.u32 %s18, 1
        %s1226 = sand.u32 %s18, 1
        %s1227 = smul.addr %s1226, 8
        %s1228 = scalar_lea.vmem [#allocation9], %s1227
        %s1229 = sand.u32 %s18, 1
        %s1230 = sand.u32 %s18, 1
        %s1231 = smul.addr %s1230, 8
        %s1232 = scalar_lea.vmem [#allocation10], %s1231
        %s1233 = sand.u32 %s18, 1
        %s1234 = sand.u32 %s18, 1
        %s1235 = smul.addr %s1234, 8
        %s1236 = scalar_lea.vmem [#allocation11], %s1235
      $region378: #{custom-call.11} parent=5 // pred_fallthru
        _
    $region6: #{custom-call.11} parent=1 // loop_footer
      %s16 = sadd.s32 1, %s12
    $region7: #{custom-call.11} parent=1 // loop_footer_branch
      %11 = sbr.rel target = $region3
    $region8: #{custom-call.11} parent=1 // loop_exit
      _

// kernel: grnet_forward.4
$region0: #{grnet_forward.4}
  #allocation0 [shape = 'u32[]', space=smem, size = 0x4, offset = 0x4, fixed_abs, tag = 'smem constant byte address 0x4 - core index']
  #allocation1 [shape = 'u32[144,128]{1,0:T(1,128)}', space=vmem, size = 0x12000, scoped, tag = 'internal scratch']
  %s0 = inlined_call_operand.vmem [shape: bf16[2,12,32], index: 0, kind: input, shape index: {}]
  %s1 = inlined_call_operand.vmem [shape: f32[2,12,12], index: 1, kind: output, shape index: {}]
  %s2 = sld [smem:[#allocation0]]
  $region14: #{grnet_forward.4} parent=0
    _
  %s4 = ssub.s32 1, %s2
  %s5 = scalar_select 0, %s4, %s2
  // Predicated region
  $region2: #{grnet_forward.4} parent=0 // pred_check
    _
  $region3: #{grnet_forward.4} parent=0 // pred_check_branch
    %7 = sbr.rel (0) target = $region5
  $region4: #{grnet_forward.4} parent=0 // pred_region
    _
  $region5: #{grnet_forward.4} parent=0 // pred_fallthru
    _
  %v9 = vld [vmem:[%s0] sm:$0xf]
  %v10 = vld [vmem:[%s0 + $0x4] sm:$0x3]
  %v11 = vld [vmem:[%s0 + $0x8] sm:$0xf]
  %v12 = vld [vmem:[%s0 + $0xc] sm:$0x3]
  %v15 = vunpack.c.l.b16 %v9
  %v16 = vunpack.c.l.b16 %v10
  %v17 = vpack.c.b16 %v16, %v15
  %vm18 = vcmask 261120
  %v20 = vsel %vm18, %v17, 0
  %22 = vmatprep.subr.bf16.mxu0 0
  %23 = vmatpush1.bf16.xpose.msra.mxu0 0
  %24 = vmatprep.subr.bf16.mxu0 0
  %25 = vmatpush1.bf16.xpose.msra.mxu0 0
  %26 = vmatprep.subr.bf16.mxu0 0
  %27 = vmatpush1.bf16.xpose.msra.mxu0 0
  %28 = vmatprep.subr.bf16.mxu0 0
  %29 = vmatpush1.bf16.xpose.msra.mxu0 0
  %30 = vmatprep.subr.bf16.mxu0 0
  %31 = vmatpush1.bf16.xpose.msra.mxu0 0
  %32 = vmatprep.subr.bf16.mxu0 0
  %33 = vmatpush1.bf16.xpose.msra.mxu0 0
  %34 = vmatprep.subr.bf16.mxu0 0
  %35 = vmatpush1.bf16.xpose.msra.mxu0 0
  %36 = vmatprep.subr.bf16.mxu0 0
  %37 = vmatpush1.bf16.xpose.msra.mxu0 %v20
  %38 = vmatprep.subr.bf16.mxu0 0
  %39 = vmatpush2.bf16.xpose.msra.mxu0 0
  %40 = vmatprep.subr.bf16.mxu0 0
  %41 = vmatpush2.bf16.xpose.msra.mxu0 0
  %42 = vmatprep.subr.bf16.mxu0 0
  %43 = vmatpush2.bf16.xpose.msra.mxu0 0
  %44 = vmatprep.subr.bf16.mxu0 0
  %45 = vmatpush2.bf16.xpose.msra.mxu0 0
  %46 = vmatprep.subr.bf16.mxu0 0
  %47 = vmatpush2.bf16.xpose.msra.mxu0 0
  %48 = vmatprep.subr.bf16.mxu0 0
  %49 = vmatpush2.bf16.xpose.msra.mxu0 0
  %50 = vmatprep.subr.bf16.mxu0 0
  %51 = vmatpush2.bf16.xpose.msra.mxu0 0
  %52 = vmatprep.subr.bf16.mxu0 0
  %53 = vmatpush2.bf16.xpose.msra.mxu0 0
  %54 = vmatprep.mubr.bf16.mxu0 0
  %55 = vmatmul.mubr.bf16.gmra.mxu0 %v20
  %v56 = vpop.f32.mrf.mxu0
  %v57 = vadd.f32 0.0, %v56
  %v58 = vpop.f32.mrf.mxu0
  %v59 = vpop.f32.mrf.mxu0
  %v60 = vadd.f32 0.0, %v59
  %v61 = vpop.f32.mrf.mxu0
  %62 = vdwg.mxu0
  %v65 = vunpack.c.l.b16 %v11
  %v66 = vunpack.c.l.b16 %v12
  %v67 = vpack.c.b16 %v66, %v65
  %v69 = vsel %vm18, %v67, 0
  %71 = vmatprep.subr.bf16.mxu0 0
  %72 = vmatpush1.bf16.xpose.msra.mxu0 0
  %73 = vmatprep.subr.bf16.mxu0 0
  %74 = vmatpush1.bf16.xpose.msra.mxu0 0
  %75 = vmatprep.subr.bf16.mxu0 0
  %76 = vmatpush1.bf16.xpose.msra.mxu0 0
  %77 = vmatprep.subr.bf16.mxu0 0
  %78 = vmatpush1.bf16.xpose.msra.mxu0 0
  %79 = vmatprep.subr.bf16.mxu0 0
  %80 = vmatpush1.bf16.xpose.msra.mxu0 0
  %81 = vmatprep.subr.bf16.mxu0 0
  %82 = vmatpush1.bf16.xpose.msra.mxu0 0
  %83 = vmatprep.subr.bf16.mxu0 0
  %84 = vmatpush1.bf16.xpose.msra.mxu0 0
  %85 = vmatprep.subr.bf16.mxu0 0
  %86 = vmatpush1.bf16.xpose.msra.mxu0 %v69
  %87 = vmatprep.subr.bf16.mxu0 0
  %88 = vmatpush2.bf16.xpose.msra.mxu0 0
  %89 = vmatprep.subr.bf16.mxu0 0
  %90 = vmatpush2.bf16.xpose.msra.mxu0 0
  %91 = vmatprep.subr.bf16.mxu0 0
  %92 = vmatpush2.bf16.xpose.msra.mxu0 0
  %93 = vmatprep.subr.bf16.mxu0 0
  %94 = vmatpush2.bf16.xpose.msra.mxu0 0
  %95 = vmatprep.subr.bf16.mxu0 0
  %96 = vmatpush2.bf16.xpose.msra.mxu0 0
  %97 = vmatprep.subr.bf16.mxu0 0
  %98 = vmatpush2.bf16.xpose.msra.mxu0 0
  %99 = vmatprep.subr.bf16.mxu0 0
  %100 = vmatpush2.bf16.xpose.msra.mxu0 0
  %101 = vmatprep.subr.bf16.mxu0 0
  %102 = vmatpush2.bf16.xpose.msra.mxu0 0
  %103 = vmatprep.mubr.bf16.mxu0 0
  %104 = vmatmul.mubr.bf16.gmra.mxu0 %v69
  %v105 = vpop.f32.mrf.mxu0
  %v106 = vadd.f32 0.0, %v105
  %v107 = vpop.f32.mrf.mxu0
  %v108 = vpop.f32.mrf.mxu0
  %v109 = vadd.f32 0.0, %v108
  %v110 = vpop.f32.mrf.mxu0
  %111 = vdwg.mxu0
  %vm112 = vcmask 97280
  %113 = vst.msk [vmem:[%s1] sm:$0xff] %vm112, %v57
  %vm114 = vcmask 93184
  %115 = vst.msk [vmem:[%s1 + $0x8] sm:$0xf] %vm114, %v60
  %116 = vst.msk [vmem:[%s1 + $0x10] sm:$0xff] %vm112, %v106
  %117 = vst.msk [vmem:[%s1 + $0x18] sm:$0xf] %vm114, %v109
  // Predicated region
  $region6: #{grnet_forward.4} parent=0 // pred_check
    _
  $region7: #{grnet_forward.4} parent=0 // pred_check_branch
    %119 = sbr.rel (0) target = $region9
  $region8: #{grnet_forward.4} parent=0 // pred_region
    _
  $region9: #{grnet_forward.4} parent=0 // pred_fallthru
    _
  // Predicated region
  $region10: #{grnet_forward.4} parent=0 // pred_check
    _
  $region11: #{grnet_forward.4} parent=0 // pred_check_branch
    %121 = sbr.rel (0) target = $region13
  $region12: #{grnet_forward.4} parent=0 // pred_region
    _
  $region13: #{grnet_forward.4} parent=0 // pred_fallthru
    _

// kernel: grnet_forward.5
$region0: #{grnet_forward.5}
  #allocation0 [shape = 'u32[]', space=smem, size = 0x4, offset = 0x4, fixed_abs, tag = 'smem constant byte address 0x4 - core index']
  #allocation1 [shape = 'u32[144,128]{1,0:T(1,128)}', space=vmem, size = 0x12000, scoped, tag = 'internal scratch']
  %s0 = inlined_call_operand.vmem [shape: f32[2,12,8], index: 0, kind: input, shape index: {}]
  %s1 = inlined_call_operand.vmem [shape: f32[12,12,10], index: 1, kind: input, shape index: {}]
  %s2 = inlined_call_operand.vmem [shape: f32[1,10], index: 2, kind: input, shape index: {}]
  %s3 = inlined_call_operand.hbm [shape: f32[2,10], index: 3, kind: output, shape index: {}]
  %s4 = sld [smem:[#allocation0]]
  $region22: #{grnet_forward.5} parent=0
    _
  %s6 = ssub.s32 1, %s4
  %s7 = scalar_select 0, %s6, %s4
  $region1: #{grnet_forward.5} parent=0
    #allocation2 [shape = 'u8[1024]{0}', space=vmem, size = 0x400, scoped, tag = 'output window, operand 0, single buffered']
    #allocation3 [shape = 's32[1]{0}', space=sflag, size = 0x4, scoped, tag = 'scoped memory for grnet_forward.5']
    %8 = vsyncpa [#allocation3], 0
    // Predicated region
    $region2: #{grnet_forward.5} parent=1 // pred_check
      _
    $region3: #{grnet_forward.5} parent=1 // pred_check_branch
      %10 = sbr.rel (0) target = $region5
    $region4: #{grnet_forward.5} parent=1 // pred_region
      _
    $region5: #{grnet_forward.5} parent=1 // pred_fallthru
      _
    // Predicated region
    $region6: #{grnet_forward.5} parent=1 // pred_check
      _
    $region7: #{grnet_forward.5} parent=1 // pred_check_branch
      %12 = sbr.rel (0) target = $region9
    $region8: #{grnet_forward.5} parent=1 // pred_region
      _
    $region9: #{grnet_forward.5} parent=1 // pred_fallthru
      _
    // Predicated region
    $region10: #{grnet_forward.5} parent=1 // pred_check
      _
    $region11: #{grnet_forward.5} parent=1 // pred_check_branch
      %14 = sbr.rel (0) target = $region13
    $region12: #{grnet_forward.5} parent=1 // pred_region
      _
    $region13: #{grnet_forward.5} parent=1 // pred_fallthru
      _
    %v15 = vld [vmem:[%s0] sm:$0xff]
    %v16 = vld [vmem:[%s0 + $0x8] sm:$0xf]
    %v17 = vld [vmem:[%s0 + $0x10] sm:$0xff]
    %v18 = vld [vmem:[%s0 + $0x18] sm:$0xf]
    %vm19 = vcmask 64512
    %v21 = vsel %vm19, %v15, 0
    %v24 = vsel %vm19, %v16, 0
    %26 = vmatprep.subr.mxu0 0.0
    %27 = vmatpush1.xpose.msra.mxu0 0.0
    %28 = vmatprep.subr.mxu0 0.0
    %29 = vmatpush1.xpose.msra.mxu0 0.0
    %30 = vmatprep.subr.mxu0 0.0
    %31 = vmatpush1.xpose.msra.mxu0 0.0
    %32 = vmatprep.subr.mxu0 0.0
    %33 = vmatpush1.xpose.msra.mxu0 0.0
    %34 = vmatprep.subr.mxu0 0.0
    %35 = vmatpush1.xpose.msra.mxu0 0.0
    %36 = vmatprep.subr.mxu0 0.0
    %37 = vmatpush1.xpose.msra.mxu0 0.0
    %38 = vmatprep.subr.mxu0 0.0
    %39 = vmatpush1.xpose.msra.mxu0 0.0
    %40 = vmatprep.subr.mxu0 0.0
    %41 = vmatpush1.xpose.msra.mxu0 0.0
    %42 = vmatprep.subr.mxu0 0.0
    %43 = vmatpush1.xpose.msra.mxu0 0.0
    %44 = vmatprep.subr.mxu0 0.0
    %45 = vmatpush1.xpose.msra.mxu0 0.0
    %46 = vmatprep.subr.mxu0 0.0
    %47 = vmatpush1.xpose.msra.mxu0 0.0
    %48 = vmatprep.subr.mxu0 0.0
    %49 = vmatpush1.xpose.msra.mxu0 0.0
    %50 = vmatprep.subr.mxu0 0.0
    %51 = vmatpush1.xpose.msra.mxu0 0.0
    %52 = vmatprep.subr.mxu0 0.0
    %53 = vmatpush1.xpose.msra.mxu0 0.0
    %54 = vmatprep.subr.mxu0 0.0
    %55 = vmatpush1.xpose.msra.mxu0 %v24
    %56 = vmatprep.subr.mxu0 0.0
    %57 = vmatpush1.xpose.msra.mxu0 %v21
    %58 = vmatprep.subr.mxu0 0.0
    %59 = vmatpush2.xpose.msra.mxu0 0.0
    %60 = vmatprep.subr.mxu0 0.0
    %61 = vmatpush2.xpose.msra.mxu0 0.0
    %62 = vmatprep.subr.mxu0 0.0
    %63 = vmatpush2.xpose.msra.mxu0 0.0
    %64 = vmatprep.subr.mxu0 0.0
    %65 = vmatpush2.xpose.msra.mxu0 0.0
    %66 = vmatprep.subr.mxu0 0.0
    %67 = vmatpush2.xpose.msra.mxu0 0.0
    %68 = vmatprep.subr.mxu0 0.0
    %69 = vmatpush2.xpose.msra.mxu0 0.0
    %70 = vmatprep.subr.mxu0 0.0
    %71 = vmatpush2.xpose.msra.mxu0 0.0
    %72 = vmatprep.subr.mxu0 0.0
    %73 = vmatpush2.xpose.msra.mxu0 0.0
    %74 = vmatprep.subr.mxu0 0.0
    %75 = vmatpush2.xpose.msra.mxu0 0.0
    %76 = vmatprep.subr.mxu0 0.0
    %77 = vmatpush2.xpose.msra.mxu0 0.0
    %78 = vmatprep.subr.mxu0 0.0
    %79 = vmatpush2.xpose.msra.mxu0 0.0
    %80 = vmatprep.subr.mxu0 0.0
    %81 = vmatpush2.xpose.msra.mxu0 0.0
    %82 = vmatprep.subr.mxu0 0.0
    %83 = vmatpush2.xpose.msra.mxu0 0.0
    %84 = vmatprep.subr.mxu0 0.0
    %85 = vmatpush2.xpose.msra.mxu0 0.0
    %86 = vmatprep.subr.mxu0 0.0
    %87 = vmatpush2.xpose.msra.mxu0 0.0
    %88 = vmatprep.subr.mxu0 0.0
    %89 = vmatpush2.xpose.msra.mxu0 0.0
    %90 = vmatprep.mubr.f32.mxu0 0.0
    %91 = vmatmul.mubr.f32.gmra.mxu0 %v21
    %v92 = vpop.f32.mrf.mxu0
    %v93 = vadd.f32 0.0, %v92
    %v94 = vpop.f32.mrf.mxu0
    %95 = vmatprep.mubr.f32.mxu0 0.0
    %96 = vmatmul.mubr.f32.gmra.mxu0 %v24
    %v97 = vpop.f32.mrf.mxu0
    %v98 = vadd.f32 0.0, %v97
    %v99 = vpop.f32.mrf.mxu0
    %100 = vdwg.mxu0
    %v102 = vsel %vm19, %v17, 0
    %v105 = vsel %vm19, %v18, 0
    %107 = vmatprep.subr.mxu0 0.0
    %108 = vmatpush1.xpose.msra.mxu0 0.0
    %109 = vmatprep.subr.mxu0 0.0
    %110 = vmatpush1.xpose.msra.mxu0 0.0
    %111 = vmatprep.subr.mxu0 0.0
    %112 = vmatpush1.xpose.msra.mxu0 0.0
    %113 = vmatprep.subr.mxu0 0.0
    %114 = vmatpush1.xpose.msra.mxu0 0.0
    %115 = vmatprep.subr.mxu0 0.0
    %116 = vmatpush1.xpose.msra.mxu0 0.0
    %117 = vmatprep.subr.mxu0 0.0
    %118 = vmatpush1.xpose.msra.mxu0 0.0
    %119 = vmatprep.subr.mxu0 0.0
    %120 = vmatpush1.xpose.msra.mxu0 0.0
    %121 = vmatprep.subr.mxu0 0.0
    %122 = vmatpush1.xpose.msra.mxu0 0.0
    %123 = vmatprep.subr.mxu0 0.0
    %124 = vmatpush1.xpose.msra.mxu0 0.0
    %125 = vmatprep.subr.mxu0 0.0
    %126 = vmatpush1.xpose.msra.mxu0 0.0
    %127 = vmatprep.subr.mxu0 0.0
    %128 = vmatpush1.xpose.msra.mxu0 0.0
    %129 = vmatprep.subr.mxu0 0.0
    %130 = vmatpush1.xpose.msra.mxu0 0.0
    %131 = vmatprep.subr.mxu0 0.0
    %132 = vmatpush1.xpose.msra.mxu0 0.0
    %133 = vmatprep.subr.mxu0 0.0
    %134 = vmatpush1.xpose.msra.mxu0 0.0
    %135 = vmatprep.subr.mxu0 0.0
    %136 = vmatpush1.xpose.msra.mxu0 %v105
    %137 = vmatprep.subr.mxu0 0.0
    %138 = vmatpush1.xpose.msra.mxu0 %v102
    %139 = vmatprep.subr.mxu0 0.0
    %140 = vmatpush2.xpose.msra.mxu0 0.0
    %141 = vmatprep.subr.mxu0 0.0
    %142 = vmatpush2.xpose.msra.mxu0 0.0
    %143 = vmatprep.subr.mxu0 0.0
    %144 = vmatpush2.xpose.msra.mxu0 0.0
    %145 = vmatprep.subr.mxu0 0.0
    %146 = vmatpush2.xpose.msra.mxu0 0.0
    %147 = vmatprep.subr.mxu0 0.0
    %148 = vmatpush2.xpose.msra.mxu0 0.0
    %149 = vmatprep.subr.mxu0 0.0
    %150 = vmatpush2.xpose.msra.mxu0 0.0
    %151 = vmatprep.subr.mxu0 0.0
    %152 = vmatpush2.xpose.msra.mxu0 0.0
    %153 = vmatprep.subr.mxu0 0.0
    %154 = vmatpush2.xpose.msra.mxu0 0.0
    %155 = vmatprep.subr.mxu0 0.0
    %156 = vmatpush2.xpose.msra.mxu0 0.0
    %157 = vmatprep.subr.mxu0 0.0
    %158 = vmatpush2.xpose.msra.mxu0 0.0
    %159 = vmatprep.subr.mxu0 0.0
    %160 = vmatpush2.xpose.msra.mxu0 0.0
    %161 = vmatprep.subr.mxu0 0.0
    %162 = vmatpush2.xpose.msra.mxu0 0.0
    %163 = vmatprep.subr.mxu0 0.0
    %164 = vmatpush2.xpose.msra.mxu0 0.0
    %165 = vmatprep.subr.mxu0 0.0
    %166 = vmatpush2.xpose.msra.mxu0 0.0
    %167 = vmatprep.subr.mxu0 0.0
    %168 = vmatpush2.xpose.msra.mxu0 0.0
    %169 = vmatprep.subr.mxu0 0.0
    %170 = vmatpush2.xpose.msra.mxu0 0.0
    %171 = vmatprep.mubr.f32.mxu0 0.0
    %172 = vmatmul.mubr.f32.gmra.mxu0 %v102
    %v173 = vpop.f32.mrf.mxu0
    %v174 = vadd.f32 0.0, %v173
    %v175 = vpop.f32.mrf.mxu0
    %176 = vmatprep.mubr.f32.mxu0 0.0
    %177 = vmatmul.mubr.f32.gmra.mxu0 %v105
    %v178 = vpop.f32.mrf.mxu0
    %v179 = vadd.f32 0.0, %v178
    %v180 = vpop.f32.mrf.mxu0
    %181 = vdwg.mxu0
    %v182 = vld [vmem:[%s1] sm:$0xff]
    %v183 = vld [vmem:[%s1 + $0x8] sm:$0xf]
    %s184 = scalar_lea.vmem %s1, 16
    %v185 = vld [vmem:[%s184] sm:$0xff]
    %v186 = vld [vmem:[%s184 + $0x8] sm:$0xf]
    %v189 = vrot.slane %v93, 1
    %vm190 = vcmask 1041409
    %v191 = vsel %vm190, %v174, %v189
    %vm192 = vcmask 97280
    %v193 = vsel %vm192, %v191, 0
    %vm195 = vcmask 1043456
    %v197 = vsel %vm195, %v186, 0
    %199 = vmatprep.subr.mxu0 0.0
    %200 = vmatpush1.msra.mxu0 0.0
    %201 = vmatprep.subr.mxu0 0.0
    %202 = vmatpush1.msra.mxu0 0.0
    %203 = vmatprep.subr.mxu0 0.0
    %204 = vmatpush1.msra.mxu0 0.0
    %205 = vmatprep.subr.mxu0 0.0
    %206 = vmatpush1.msra.mxu0 0.0
    %207 = vmatprep.subr.mxu0 0.0
    %208 = vmatpush1.msra.mxu0 0.0
    %209 = vmatprep.subr.mxu0 0.0
    %210 = vmatpush1.msra.mxu0 0.0
    %211 = vmatprep.subr.mxu0 0.0
    %212 = vmatpush1.msra.mxu0 0.0
    %213 = vmatprep.subr.mxu0 0.0
    %214 = vmatpush1.msra.mxu0 0.0
    %215 = vmatprep.subr.mxu0 0.0
    %216 = vmatpush1.msra.mxu0 0.0
    %217 = vmatprep.subr.mxu0 0.0
    %218 = vmatpush1.msra.mxu0 0.0
    %219 = vmatprep.subr.mxu0 0.0
    %220 = vmatpush1.msra.mxu0 0.0
    %221 = vmatprep.subr.mxu0 0.0
    %222 = vmatpush1.msra.mxu0 0.0
    %223 = vmatprep.subr.mxu0 0.0
    %224 = vmatpush1.msra.mxu0 0.0
    %225 = vmatprep.subr.mxu0 0.0
    %226 = vmatpush1.msra.mxu0 0.0
    %227 = vmatprep.subr.mxu0 0.0
    %228 = vmatpush1.msra.mxu0 %v197
    %229 = vmatprep.subr.mxu0 0.0
    %230 = vmatpush1.msra.mxu0 %v185
    %231 = vmatprep.subr.mxu0 0.0
    %232 = vmatpush2.msra.mxu0 0.0
    %233 = vmatprep.subr.mxu0 0.0
    %234 = vmatpush2.msra.mxu0 0.0
    %235 = vmatprep.subr.mxu0 0.0
    %236 = vmatpush2.msra.mxu0 0.0
    %237 = vmatprep.subr.mxu0 0.0
    %238 = vmatpush2.msra.mxu0 0.0
    %239 = vmatprep.subr.mxu0 0.0
    %240 = vmatpush2.msra.mxu0 0.0
    %241 = vmatprep.subr.mxu0 0.0
    %242 = vmatpush2.msra.mxu0 0.0
    %243 = vmatprep.subr.mxu0 0.0
    %244 = vmatpush2.msra.mxu0 0.0
    %245 = vmatprep.subr.mxu0 0.0
    %246 = vmatpush2.msra.mxu0 0.0
    %247 = vmatprep.subr.mxu0 0.0
    %248 = vmatpush2.msra.mxu0 0.0
    %249 = vmatprep.subr.mxu0 0.0
    %250 = vmatpush2.msra.mxu0 0.0
    %251 = vmatprep.subr.mxu0 0.0
    %252 = vmatpush2.msra.mxu0 0.0
    %253 = vmatprep.subr.mxu0 0.0
    %254 = vmatpush2.msra.mxu0 0.0
    %255 = vmatprep.subr.mxu0 0.0
    %256 = vmatpush2.msra.mxu0 0.0
    %257 = vmatprep.subr.mxu0 0.0
    %258 = vmatpush2.msra.mxu0 0.0
    %259 = vmatprep.subr.mxu0 0.0
    %260 = vmatpush2.msra.mxu0 0.0
    %261 = vmatprep.subr.mxu0 0.0
    %262 = vmatpush2.msra.mxu0 0.0
    %263 = vmatprep.mubr.f32.mxu0 0.0
    %264 = vmatmul.mubr.f32.gmra.mxu0 %v193
    %v265 = vpop.f32.mrf.mxu0
    %v266 = vadd.f32 0.0, %v265
    %v267 = vpop.f32.mrf.mxu0
    %268 = vdwg.mxu0
    %v269 = vrot.slane %v174, 7
    %v270 = vsel %vm190, %v269, %v93
    %v271 = vsel %vm192, %v270, 0
    %v274 = vsel %vm195, %v183, 0
    %276 = vmatprep.subr.mxu0 0.0
    %277 = vmatpush1.msra.mxu0 0.0
    %278 = vmatprep.subr.mxu0 0.0
    %279 = vmatpush1.msra.mxu0 0.0
    %280 = vmatprep.subr.mxu0 0.0
    %281 = vmatpush1.msra.mxu0 0.0
    %282 = vmatprep.subr.mxu0 0.0
    %283 = vmatpush1.msra.mxu0 0.0
    %284 = vmatprep.subr.mxu0 0.0
    %285 = vmatpush1.msra.mxu0 0.0
    %286 = vmatprep.subr.mxu0 0.0
    %287 = vmatpush1.msra.mxu0 0.0
    %288 = vmatprep.subr.mxu0 0.0
    %289 = vmatpush1.msra.mxu0 0.0
    %290 = vmatprep.subr.mxu0 0.0
    %291 = vmatpush1.msra.mxu0 0.0
    %292 = vmatprep.subr.mxu0 0.0
    %293 = vmatpush1.msra.mxu0 0.0
    %294 = vmatprep.subr.mxu0 0.0
    %295 = vmatpush1.msra.mxu0 0.0
    %296 = vmatprep.subr.mxu0 0.0
    %297 = vmatpush1.msra.mxu0 0.0
    %298 = vmatprep.subr.mxu0 0.0
    %299 = vmatpush1.msra.mxu0 0.0
    %300 = vmatprep.subr.mxu0 0.0
    %301 = vmatpush1.msra.mxu0 0.0
    %302 = vmatprep.subr.mxu0 0.0
    %303 = vmatpush1.msra.mxu0 0.0
    %304 = vmatprep.subr.mxu0 0.0
    %305 = vmatpush1.msra.mxu0 %v274
    %306 = vmatprep.subr.mxu0 0.0
    %307 = vmatpush1.msra.mxu0 %v182
    %308 = vmatprep.subr.mxu0 0.0
    %309 = vmatpush2.msra.mxu0 0.0
    %310 = vmatprep.subr.mxu0 0.0
    %311 = vmatpush2.msra.mxu0 0.0
    %312 = vmatprep.subr.mxu0 0.0
    %313 = vmatpush2.msra.mxu0 0.0
    %314 = vmatprep.subr.mxu0 0.0
    %315 = vmatpush2.msra.mxu0 0.0
    %316 = vmatprep.subr.mxu0 0.0
    %317 = vmatpush2.msra.mxu0 0.0
    %318 = vmatprep.subr.mxu0 0.0
    %319 = vmatpush2.msra.mxu0 0.0
    %320 = vmatprep.subr.mxu0 0.0
    %321 = vmatpush2.msra.mxu0 0.0
    %322 = vmatprep.subr.mxu0 0.0
    %323 = vmatpush2.msra.mxu0 0.0
    %324 = vmatprep.subr.mxu0 0.0
    %325 = vmatpush2.msra.mxu0 0.0
    %326 = vmatprep.subr.mxu0 0.0
    %327 = vmatpush2.msra.mxu0 0.0
    %328 = vmatprep.subr.mxu0 0.0
    %329 = vmatpush2.msra.mxu0 0.0
    %330 = vmatprep.subr.mxu0 0.0
    %331 = vmatpush2.msra.mxu0 0.0
    %332 = vmatprep.subr.mxu0 0.0
    %333 = vmatpush2.msra.mxu0 0.0
    %334 = vmatprep.subr.mxu0 0.0
    %335 = vmatpush2.msra.mxu0 0.0
    %336 = vmatprep.subr.mxu0 0.0
    %337 = vmatpush2.msra.mxu0 0.0
    %338 = vmatprep.subr.mxu0 0.0
    %339 = vmatpush2.msra.mxu0 0.0
    %340 = vmatprep.mubr.f32.mxu0 0.0
    %341 = vmatmul.mubr.f32.gmra.mxu0 %v271
    %v342 = vpop.f32.mrf.mxu0
    %v343 = vadd.f32 %v266, %v342
    %v344 = vpop.f32.mrf.mxu0
    %345 = vdwg.mxu0
    %s346 = scalar_lea.vmem %s1, 32
    %v347 = vld [vmem:[%s346] sm:$0xff]
    %v348 = vld [vmem:[%s346 + $0x8] sm:$0xf]
    %v349 = vrot.slane %v93, 2
    %v350 = vrot.slane %v174, 1
    %v351 = vsel %vm190, %v350, %v349
    %v352 = vsel %vm192, %v351, 0
    %v355 = vsel %vm195, %v348, 0
    %357 = vmatprep.subr.mxu0 0.0
    %358 = vmatpush1.msra.mxu0 0.0
    %359 = vmatprep.subr.mxu0 0.0
    %360 = vmatpush1.msra.mxu0 0.0
    %361 = vmatprep.subr.mxu0 0.0
    %362 = vmatpush1.msra.mxu0 0.0
    %363 = vmatprep.subr.mxu0 0.0
    %364 = vmatpush1.msra.mxu0 0.0
    %365 = vmatprep.subr.mxu0 0.0
    %366 = vmatpush1.msra.mxu0 0.0
    %367 = vmatprep.subr.mxu0 0.0
    %368 = vmatpush1.msra.mxu0 0.0
    %369 = vmatprep.subr.mxu0 0.0
    %370 = vmatpush1.msra.mxu0 0.0
    %371 = vmatprep.subr.mxu0 0.0
    %372 = vmatpush1.msra.mxu0 0.0
    %373 = vmatprep.subr.mxu0 0.0
    %374 = vmatpush1.msra.mxu0 0.0
    %375 = vmatprep.subr.mxu0 0.0
    %376 = vmatpush1.msra.mxu0 0.0
    %377 = vmatprep.subr.mxu0 0.0
    %378 = vmatpush1.msra.mxu0 0.0
    %379 = vmatprep.subr.mxu0 0.0
    %380 = vmatpush1.msra.mxu0 0.0
    %381 = vmatprep.subr.mxu0 0.0
    %382 = vmatpush1.msra.mxu0 0.0
    %383 = vmatprep.subr.mxu0 0.0
    %384 = vmatpush1.msra.mxu0 0.0
    %385 = vmatprep.subr.mxu0 0.0
    %386 = vmatpush1.msra.mxu0 %v355
    %387 = vmatprep.subr.mxu0 0.0
    %388 = vmatpush1.msra.mxu0 %v347
    %389 = vmatprep.subr.mxu0 0.0
    %390 = vmatpush2.msra.mxu0 0.0
    %391 = vmatprep.subr.mxu0 0.0
    %392 = vmatpush2.msra.mxu0 0.0
    %393 = vmatprep.subr.mxu0 0.0
    %394 = vmatpush2.msra.mxu0 0.0
    %395 = vmatprep.subr.mxu0 0.0
    %396 = vmatpush2.msra.mxu0 0.0
    %397 = vmatprep.subr.mxu0 0.0
    %398 = vmatpush2.msra.mxu0 0.0
    %399 = vmatprep.subr.mxu0 0.0
    %400 = vmatpush2.msra.mxu0 0.0
    %401 = vmatprep.subr.mxu0 0.0
    %402 = vmatpush2.msra.mxu0 0.0
    %403 = vmatprep.subr.mxu0 0.0
    %404 = vmatpush2.msra.mxu0 0.0
    %405 = vmatprep.subr.mxu0 0.0
    %406 = vmatpush2.msra.mxu0 0.0
    %407 = vmatprep.subr.mxu0 0.0
    %408 = vmatpush2.msra.mxu0 0.0
    %409 = vmatprep.subr.mxu0 0.0
    %410 = vmatpush2.msra.mxu0 0.0
    %411 = vmatprep.subr.mxu0 0.0
    %412 = vmatpush2.msra.mxu0 0.0
    %413 = vmatprep.subr.mxu0 0.0
    %414 = vmatpush2.msra.mxu0 0.0
    %415 = vmatprep.subr.mxu0 0.0
    %416 = vmatpush2.msra.mxu0 0.0
    %417 = vmatprep.subr.mxu0 0.0
    %418 = vmatpush2.msra.mxu0 0.0
    %419 = vmatprep.subr.mxu0 0.0
    %420 = vmatpush2.msra.mxu0 0.0
    %421 = vmatprep.mubr.f32.mxu0 0.0
    %422 = vmatmul.mubr.f32.gmra.mxu0 %v352
    %v423 = vpop.f32.mrf.mxu0
    %v424 = vadd.f32 0.0, %v423
    %v425 = vpop.f32.mrf.mxu0
    %426 = vdwg.mxu0
    %v427 = vadd.f32 %v343, %v424
    %s428 = scalar_lea.vmem %s1, 48
    %v429 = vld [vmem:[%s428] sm:$0xff]
    %v430 = vld [vmem:[%s428 + $0x8] sm:$0xf]
    %v431 = vrot.slane %v93, 3
    %v432 = vrot.slane %v174, 2
    %v433 = vsel %vm190, %v432, %v431
    %v434 = vsel %vm192, %v433, 0
    %v437 = vsel %vm195, %v430, 0
    %439 = vmatprep.subr.mxu0 0.0
    %440 = vmatpush1.msra.mxu0 0.0
    %441 = vmatprep.subr.mxu0 0.0
    %442 = vmatpush1.msra.mxu0 0.0
    %443 = vmatprep.subr.mxu0 0.0
    %444 = vmatpush1.msra.mxu0 0.0
    %445 = vmatprep.subr.mxu0 0.0
    %446 = vmatpush1.msra.mxu0 0.0
    %447 = vmatprep.subr.mxu0 0.0
    %448 = vmatpush1.msra.mxu0 0.0
    %449 = vmatprep.subr.mxu0 0.0
    %450 = vmatpush1.msra.mxu0 0.0
    %451 = vmatprep.subr.mxu0 0.0
    %452 = vmatpush1.msra.mxu0 0.0
    %453 = vmatprep.subr.mxu0 0.0
    %454 = vmatpush1.msra.mxu0 0.0
    %455 = vmatprep.subr.mxu0 0.0
    %456 = vmatpush1.msra.mxu0 0.0
    %457 = vmatprep.subr.mxu0 0.0
    %458 = vmatpush1.msra.mxu0 0.0
    %459 = vmatprep.subr.mxu0 0.0
    %460 = vmatpush1.msra.mxu0 0.0
    %461 = vmatprep.subr.mxu0 0.0
    %462 = vmatpush1.msra.mxu0 0.0
    %463 = vmatprep.subr.mxu0 0.0
    %464 = vmatpush1.msra.mxu0 0.0
    %465 = vmatprep.subr.mxu0 0.0
    %466 = vmatpush1.msra.mxu0 0.0
    %467 = vmatprep.subr.mxu0 0.0
    %468 = vmatpush1.msra.mxu0 %v437
    %469 = vmatprep.subr.mxu0 0.0
    %470 = vmatpush1.msra.mxu0 %v429
    %471 = vmatprep.subr.mxu0 0.0
    %472 = vmatpush2.msra.mxu0 0.0
    %473 = vmatprep.subr.mxu0 0.0
    %474 = vmatpush2.msra.mxu0 0.0
    %475 = vmatprep.subr.mxu0 0.0
    %476 = vmatpush2.msra.mxu0 0.0
    %477 = vmatprep.subr.mxu0 0.0
    %478 = vmatpush2.msra.mxu0 0.0
    %479 = vmatprep.subr.mxu0 0.0
    %480 = vmatpush2.msra.mxu0 0.0
    %481 = vmatprep.subr.mxu0 0.0
    %482 = vmatpush2.msra.mxu0 0.0
    %483 = vmatprep.subr.mxu0 0.0
    %484 = vmatpush2.msra.mxu0 0.0
    %485 = vmatprep.subr.mxu0 0.0
    %486 = vmatpush2.msra.mxu0 0.0
    %487 = vmatprep.subr.mxu0 0.0
    %488 = vmatpush2.msra.mxu0 0.0
    %489 = vmatprep.subr.mxu0 0.0
    %490 = vmatpush2.msra.mxu0 0.0
    %491 = vmatprep.subr.mxu0 0.0
    %492 = vmatpush2.msra.mxu0 0.0
    %493 = vmatprep.subr.mxu0 0.0
    %494 = vmatpush2.msra.mxu0 0.0
    %495 = vmatprep.subr.mxu0 0.0
    %496 = vmatpush2.msra.mxu0 0.0
    %497 = vmatprep.subr.mxu0 0.0
    %498 = vmatpush2.msra.mxu0 0.0
    %499 = vmatprep.subr.mxu0 0.0
    %500 = vmatpush2.msra.mxu0 0.0
    %501 = vmatprep.subr.mxu0 0.0
    %502 = vmatpush2.msra.mxu0 0.0
    %503 = vmatprep.mubr.f32.mxu0 0.0
    %504 = vmatmul.mubr.f32.gmra.mxu0 %v434
    %v505 = vpop.f32.mrf.mxu0
    %v506 = vadd.f32 0.0, %v505
    %v507 = vpop.f32.mrf.mxu0
    %508 = vdwg.mxu0
    %v509 = vadd.f32 %v427, %v506
    %s510 = scalar_lea.vmem %s1, 64
    %v511 = vld [vmem:[%s510] sm:$0xff]
    %v512 = vld [vmem:[%s510 + $0x8] sm:$0xf]
    %v513 = vrot.slane %v93, 4
    %v514 = vrot.slane %v174, 3
    %v515 = vsel %vm190, %v514, %v513
    %v516 = vsel %vm192, %v515, 0
    %v519 = vsel %vm195, %v512, 0
    %521 = vmatprep.subr.mxu0 0.0
    %522 = vmatpush1.msra.mxu0 0.0
    %523 = vmatprep.subr.mxu0 0.0
    %524 = vmatpush1.msra.mxu0 0.0
    %525 = vmatprep.subr.mxu0 0.0
    %526 = vmatpush1.msra.mxu0 0.0
    %527 = vmatprep.subr.mxu0 0.0
    %528 = vmatpush1.msra.mxu0 0.0
    %529 = vmatprep.subr.mxu0 0.0
    %530 = vmatpush1.msra.mxu0 0.0
    %531 = vmatprep.subr.mxu0 0.0
    %532 = vmatpush1.msra.mxu0 0.0
    %533 = vmatprep.subr.mxu0 0.0
    %534 = vmatpush1.msra.mxu0 0.0
    %535 = vmatprep.subr.mxu0 0.0
    %536 = vmatpush1.msra.mxu0 0.0
    %537 = vmatprep.subr.mxu0 0.0
    %538 = vmatpush1.msra.mxu0 0.0
    %539 = vmatprep.subr.mxu0 0.0
    %540 = vmatpush1.msra.mxu0 0.0
    %541 = vmatprep.subr.mxu0 0.0
    %542 = vmatpush1.msra.mxu0 0.0
    %543 = vmatprep.subr.mxu0 0.0
    %544 = vmatpush1.msra.mxu0 0.0
    %545 = vmatprep.subr.mxu0 0.0
    %546 = vmatpush1.msra.mxu0 0.0
    %547 = vmatprep.subr.mxu0 0.0
    %548 = vmatpush1.msra.mxu0 0.0
    %549 = vmatprep.subr.mxu0 0.0
    %550 = vmatpush1.msra.mxu0 %v519
    %551 = vmatprep.subr.mxu0 0.0
    %552 = vmatpush1.msra.mxu0 %v511
    %553 = vmatprep.subr.mxu0 0.0
    %554 = vmatpush2.msra.mxu0 0.0
    %555 = vmatprep.subr.mxu0 0.0
    %556 = vmatpush2.msra.mxu0 0.0
    %557 = vmatprep.subr.mxu0 0.0
    %558 = vmatpush2.msra.mxu0 0.0
    %559 = vmatprep.subr.mxu0 0.0
    %560 = vmatpush2.msra.mxu0 0.0
    %561 = vmatprep.subr.mxu0 0.0
    %562 = vmatpush2.msra.mxu0 0.0
    %563 = vmatprep.subr.mxu0 0.0
    %564 = vmatpush2.msra.mxu0 0.0
    %565 = vmatprep.subr.mxu0 0.0
    %566 = vmatpush2.msra.mxu0 0.0
    %567 = vmatprep.subr.mxu0 0.0
    %568 = vmatpush2.msra.mxu0 0.0
    %569 = vmatprep.subr.mxu0 0.0
    %570 = vmatpush2.msra.mxu0 0.0
    %571 = vmatprep.subr.mxu0 0.0
    %572 = vmatpush2.msra.mxu0 0.0
    %573 = vmatprep.subr.mxu0 0.0
    %574 = vmatpush2.msra.mxu0 0.0
    %575 = vmatprep.subr.mxu0 0.0
    %576 = vmatpush2.msra.mxu0 0.0
    %577 = vmatprep.subr.mxu0 0.0
    %578 = vmatpush2.msra.mxu0 0.0
    %579 = vmatprep.subr.mxu0 0.0
    %580 = vmatpush2.msra.mxu0 0.0
    %581 = vmatprep.subr.mxu0 0.0
    %582 = vmatpush2.msra.mxu0 0.0
    %583 = vmatprep.subr.mxu0 0.0
    %584 = vmatpush2.msra.mxu0 0.0
    %585 = vmatprep.mubr.f32.mxu0 0.0
    %586 = vmatmul.mubr.f32.gmra.mxu0 %v516
    %v587 = vpop.f32.mrf.mxu0
    %v588 = vadd.f32 0.0, %v587
    %v589 = vpop.f32.mrf.mxu0
    %590 = vdwg.mxu0
    %v591 = vadd.f32 %v509, %v588
    %s592 = scalar_lea.vmem %s1, 80
    %v593 = vld [vmem:[%s592] sm:$0xff]
    %v594 = vld [vmem:[%s592 + $0x8] sm:$0xf]
    %v595 = vrot.slane %v93, 5
    %v596 = vrot.slane %v174, 4
    %v597 = vsel %vm190, %v596, %v595
    %v598 = vsel %vm192, %v597, 0
    %v601 = vsel %vm195, %v594, 0
    %603 = vmatprep.subr.mxu0 0.0
    %604 = vmatpush1.msra.mxu0 0.0
    %605 = vmatprep.subr.mxu0 0.0
    %606 = vmatpush1.msra.mxu0 0.0
    %607 = vmatprep.subr.mxu0 0.0
    %608 = vmatpush1.msra.mxu0 0.0
    %609 = vmatprep.subr.mxu0 0.0
    %610 = vmatpush1.msra.mxu0 0.0
    %611 = vmatprep.subr.mxu0 0.0
    %612 = vmatpush1.msra.mxu0 0.0
    %613 = vmatprep.subr.mxu0 0.0
    %614 = vmatpush1.msra.mxu0 0.0
    %615 = vmatprep.subr.mxu0 0.0
    %616 = vmatpush1.msra.mxu0 0.0
    %617 = vmatprep.subr.mxu0 0.0
    %618 = vmatpush1.msra.mxu0 0.0
    %619 = vmatprep.subr.mxu0 0.0
    %620 = vmatpush1.msra.mxu0 0.0
    %621 = vmatprep.subr.mxu0 0.0
    %622 = vmatpush1.msra.mxu0 0.0
    %623 = vmatprep.subr.mxu0 0.0
    %624 = vmatpush1.msra.mxu0 0.0
    %625 = vmatprep.subr.mxu0 0.0
    %626 = vmatpush1.msra.mxu0 0.0
    %627 = vmatprep.subr.mxu0 0.0
    %628 = vmatpush1.msra.mxu0 0.0
    %629 = vmatprep.subr.mxu0 0.0
    %630 = vmatpush1.msra.mxu0 0.0
    %631 = vmatprep.subr.mxu0 0.0
    %632 = vmatpush1.msra.mxu0 %v601
    %633 = vmatprep.subr.mxu0 0.0
    %634 = vmatpush1.msra.mxu0 %v593
    %635 = vmatprep.subr.mxu0 0.0
    %636 = vmatpush2.msra.mxu0 0.0
    %637 = vmatprep.subr.mxu0 0.0
    %638 = vmatpush2.msra.mxu0 0.0
    %639 = vmatprep.subr.mxu0 0.0
    %640 = vmatpush2.msra.mxu0 0.0
    %641 = vmatprep.subr.mxu0 0.0
    %642 = vmatpush2.msra.mxu0 0.0
    %643 = vmatprep.subr.mxu0 0.0
    %644 = vmatpush2.msra.mxu0 0.0
    %645 = vmatprep.subr.mxu0 0.0
    %646 = vmatpush2.msra.mxu0 0.0
    %647 = vmatprep.subr.mxu0 0.0
    %648 = vmatpush2.msra.mxu0 0.0
    %649 = vmatprep.subr.mxu0 0.0
    %650 = vmatpush2.msra.mxu0 0.0
    %651 = vmatprep.subr.mxu0 0.0
    %652 = vmatpush2.msra.mxu0 0.0
    %653 = vmatprep.subr.mxu0 0.0
    %654 = vmatpush2.msra.mxu0 0.0
    %655 = vmatprep.subr.mxu0 0.0
    %656 = vmatpush2.msra.mxu0 0.0
    %657 = vmatprep.subr.mxu0 0.0
    %658 = vmatpush2.msra.mxu0 0.0
    %659 = vmatprep.subr.mxu0 0.0
    %660 = vmatpush2.msra.mxu0 0.0
    %661 = vmatprep.subr.mxu0 0.0
    %662 = vmatpush2.msra.mxu0 0.0
    %663 = vmatprep.subr.mxu0 0.0
    %664 = vmatpush2.msra.mxu0 0.0
    %665 = vmatprep.subr.mxu0 0.0
    %666 = vmatpush2.msra.mxu0 0.0
    %667 = vmatprep.mubr.f32.mxu0 0.0
    %668 = vmatmul.mubr.f32.gmra.mxu0 %v598
    %v669 = vpop.f32.mrf.mxu0
    %v670 = vadd.f32 0.0, %v669
    %v671 = vpop.f32.mrf.mxu0
    %672 = vdwg.mxu0
    %v673 = vadd.f32 %v591, %v670
    %s674 = scalar_lea.vmem %s1, 96
    %v675 = vld [vmem:[%s674] sm:$0xff]
    %v676 = vld [vmem:[%s674 + $0x8] sm:$0xf]
    %v677 = vrot.slane %v93, 6
    %v678 = vrot.slane %v174, 5
    %v679 = vsel %vm190, %v678, %v677
    %v680 = vsel %vm192, %v679, 0
    %v683 = vsel %vm195, %v676, 0
    %685 = vmatprep.subr.mxu0 0.0
    %686 = vmatpush1.msra.mxu0 0.0
    %687 = vmatprep.subr.mxu0 0.0
    %688 = vmatpush1.msra.mxu0 0.0
    %689 = vmatprep.subr.mxu0 0.0
    %690 = vmatpush1.msra.mxu0 0.0
    %691 = vmatprep.subr.mxu0 0.0
    %692 = vmatpush1.msra.mxu0 0.0
    %693 = vmatprep.subr.mxu0 0.0
    %694 = vmatpush1.msra.mxu0 0.0
    %695 = vmatprep.subr.mxu0 0.0
    %696 = vmatpush1.msra.mxu0 0.0
    %697 = vmatprep.subr.mxu0 0.0
    %698 = vmatpush1.msra.mxu0 0.0
    %699 = vmatprep.subr.mxu0 0.0
    %700 = vmatpush1.msra.mxu0 0.0
    %701 = vmatprep.subr.mxu0 0.0
    %702 = vmatpush1.msra.mxu0 0.0
    %703 = vmatprep.subr.mxu0 0.0
    %704 = vmatpush1.msra.mxu0 0.0
    %705 = vmatprep.subr.mxu0 0.0
    %706 = vmatpush1.msra.mxu0 0.0
    %707 = vmatprep.subr.mxu0 0.0
    %708 = vmatpush1.msra.mxu0 0.0
    %709 = vmatprep.subr.mxu0 0.0
    %710 = vmatpush1.msra.mxu0 0.0
    %711 = vmatprep.subr.mxu0 0.0
    %712 = vmatpush1.msra.mxu0 0.0
    %713 = vmatprep.subr.mxu0 0.0
    %714 = vmatpush1.msra.mxu0 %v683
    %715 = vmatprep.subr.mxu0 0.0
    %716 = vmatpush1.msra.mxu0 %v675
    %717 = vmatprep.subr.mxu0 0.0
    %718 = vmatpush2.msra.mxu0 0.0
    %719 = vmatprep.subr.mxu0 0.0
    %720 = vmatpush2.msra.mxu0 0.0
    %721 = vmatprep.subr.mxu0 0.0
    %722 = vmatpush2.msra.mxu0 0.0
    %723 = vmatprep.subr.mxu0 0.0
    %724 = vmatpush2.msra.mxu0 0.0
    %725 = vmatprep.subr.mxu0 0.0
    %726 = vmatpush2.msra.mxu0 0.0
    %727 = vmatprep.subr.mxu0 0.0
    %728 = vmatpush2.msra.mxu0 0.0
    %729 = vmatprep.subr.mxu0 0.0
    %730 = vmatpush2.msra.mxu0 0.0
    %731 = vmatprep.subr.mxu0 0.0
    %732 = vmatpush2.msra.mxu0 0.0
    %733 = vmatprep.subr.mxu0 0.0
    %734 = vmatpush2.msra.mxu0 0.0
    %735 = vmatprep.subr.mxu0 0.0
    %736 = vmatpush2.msra.mxu0 0.0
    %737 = vmatprep.subr.mxu0 0.0
    %738 = vmatpush2.msra.mxu0 0.0
    %739 = vmatprep.subr.mxu0 0.0
    %740 = vmatpush2.msra.mxu0 0.0
    %741 = vmatprep.subr.mxu0 0.0
    %742 = vmatpush2.msra.mxu0 0.0
    %743 = vmatprep.subr.mxu0 0.0
    %744 = vmatpush2.msra.mxu0 0.0
    %745 = vmatprep.subr.mxu0 0.0
    %746 = vmatpush2.msra.mxu0 0.0
    %747 = vmatprep.subr.mxu0 0.0
    %748 = vmatpush2.msra.mxu0 0.0
    %749 = vmatprep.mubr.f32.mxu0 0.0
    %750 = vmatmul.mubr.f32.gmra.mxu0 %v680
    %v751 = vpop.f32.mrf.mxu0
    %v752 = vadd.f32 0.0, %v751
    %v753 = vpop.f32.mrf.mxu0
    %754 = vdwg.mxu0
    %v755 = vadd.f32 %v673, %v752
    %s756 = scalar_lea.vmem %s1, 112
    %v757 = vld [vmem:[%s756] sm:$0xff]
    %v758 = vld [vmem:[%s756 + $0x8] sm:$0xf]
    %v759 = vrot.slane %v93, 7
    %v760 = vrot.slane %v174, 6
    %v761 = vsel %vm190, %v760, %v759
    %v762 = vsel %vm192, %v761, 0
    %v765 = vsel %vm195, %v758, 0
    %767 = vmatprep.subr.mxu0 0.0
    %768 = vmatpush1.msra.mxu0 0.0
    %769 = vmatprep.subr.mxu0 0.0
    %770 = vmatpush1.msra.mxu0 0.0
    %771 = vmatprep.subr.mxu0 0.0
    %772 = vmatpush1.msra.mxu0 0.0
    %773 = vmatprep.subr.mxu0 0.0
    %774 = vmatpush1.msra.mxu0 0.0
    %775 = vmatprep.subr.mxu0 0.0
    %776 = vmatpush1.msra.mxu0 0.0
    %777 = vmatprep.subr.mxu0 0.0
    %778 = vmatpush1.msra.mxu0 0.0
    %779 = vmatprep.subr.mxu0 0.0
    %780 = vmatpush1.msra.mxu0 0.0
    %781 = vmatprep.subr.mxu0 0.0
    %782 = vmatpush1.msra.mxu0 0.0
    %783 = vmatprep.subr.mxu0 0.0
    %784 = vmatpush1.msra.mxu0 0.0
    %785 = vmatprep.subr.mxu0 0.0
    %786 = vmatpush1.msra.mxu0 0.0
    %787 = vmatprep.subr.mxu0 0.0
    %788 = vmatpush1.msra.mxu0 0.0
    %789 = vmatprep.subr.mxu0 0.0
    %790 = vmatpush1.msra.mxu0 0.0
    %791 = vmatprep.subr.mxu0 0.0
    %792 = vmatpush1.msra.mxu0 0.0
    %793 = vmatprep.subr.mxu0 0.0
    %794 = vmatpush1.msra.mxu0 0.0
    %795 = vmatprep.subr.mxu0 0.0
    %796 = vmatpush1.msra.mxu0 %v765
    %797 = vmatprep.subr.mxu0 0.0
    %798 = vmatpush1.msra.mxu0 %v757
    %799 = vmatprep.subr.mxu0 0.0
    %800 = vmatpush2.msra.mxu0 0.0
    %801 = vmatprep.subr.mxu0 0.0
    %802 = vmatpush2.msra.mxu0 0.0
    %803 = vmatprep.subr.mxu0 0.0
    %804 = vmatpush2.msra.mxu0 0.0
    %805 = vmatprep.subr.mxu0 0.0
    %806 = vmatpush2.msra.mxu0 0.0
    %807 = vmatprep.subr.mxu0 0.0
    %808 = vmatpush2.msra.mxu0 0.0
    %809 = vmatprep.subr.mxu0 0.0
    %810 = vmatpush2.msra.mxu0 0.0
    %811 = vmatprep.subr.mxu0 0.0
    %812 = vmatpush2.msra.mxu0 0.0
    %813 = vmatprep.subr.mxu0 0.0
    %814 = vmatpush2.msra.mxu0 0.0
    %815 = vmatprep.subr.mxu0 0.0
    %816 = vmatpush2.msra.mxu0 0.0
    %817 = vmatprep.subr.mxu0 0.0
    %818 = vmatpush2.msra.mxu0 0.0
    %819 = vmatprep.subr.mxu0 0.0
    %820 = vmatpush2.msra.mxu0 0.0
    %821 = vmatprep.subr.mxu0 0.0
    %822 = vmatpush2.msra.mxu0 0.0
    %823 = vmatprep.subr.mxu0 0.0
    %824 = vmatpush2.msra.mxu0 0.0
    %825 = vmatprep.subr.mxu0 0.0
    %826 = vmatpush2.msra.mxu0 0.0
    %827 = vmatprep.subr.mxu0 0.0
    %828 = vmatpush2.msra.mxu0 0.0
    %829 = vmatprep.subr.mxu0 0.0
    %830 = vmatpush2.msra.mxu0 0.0
    %831 = vmatprep.mubr.f32.mxu0 0.0
    %832 = vmatmul.mubr.f32.gmra.mxu0 %v762
    %v833 = vpop.f32.mrf.mxu0
    %v834 = vadd.f32 0.0, %v833
    %v835 = vpop.f32.mrf.mxu0
    %836 = vdwg.mxu0
    %v837 = vadd.f32 %v755, %v834
    %s838 = scalar_lea.vmem %s1, 128
    %v839 = vld [vmem:[%s838] sm:$0xff]
    %v840 = vld [vmem:[%s838 + $0x8] sm:$0xf]
    %v843 = vrot.slane %v179, 7
    %v844 = vsel %vm190, %v843, %v98
    %v845 = vsel %vm192, %v844, 0
    %v848 = vsel %vm195, %v840, 0
    %850 = vmatprep.subr.mxu0 0.0
    %851 = vmatpush1.msra.mxu0 0.0
    %852 = vmatprep.subr.mxu0 0.0
    %853 = vmatpush1.msra.mxu0 0.0
    %854 = vmatprep.subr.mxu0 0.0
    %855 = vmatpush1.msra.mxu0 0.0
    %856 = vmatprep.subr.mxu0 0.0
    %857 = vmatpush1.msra.mxu0 0.0
    %858 = vmatprep.subr.mxu0 0.0
    %859 = vmatpush1.msra.mxu0 0.0
    %860 = vmatprep.subr.mxu0 0.0
    %861 = vmatpush1.msra.mxu0 0.0
    %862 = vmatprep.subr.mxu0 0.0
    %863 = vmatpush1.msra.mxu0 0.0
    %864 = vmatprep.subr.mxu0 0.0
    %865 = vmatpush1.msra.mxu0 0.0
    %866 = vmatprep.subr.mxu0 0.0
    %867 = vmatpush1.msra.mxu0 0.0
    %868 = vmatprep.subr.mxu0 0.0
    %869 = vmatpush1.msra.mxu0 0.0
    %870 = vmatprep.subr.mxu0 0.0
    %871 = vmatpush1.msra.mxu0 0.0
    %872 = vmatprep.subr.mxu0 0.0
    %873 = vmatpush1.msra.mxu0 0.0
    %874 = vmatprep.subr.mxu0 0.0
    %875 = vmatpush1.msra.mxu0 0.0
    %876 = vmatprep.subr.mxu0 0.0
    %877 = vmatpush1.msra.mxu0 0.0
    %878 = vmatprep.subr.mxu0 0.0
    %879 = vmatpush1.msra.mxu0 %v848
    %880 = vmatprep.subr.mxu0 0.0
    %881 = vmatpush1.msra.mxu0 %v839
    %882 = vmatprep.subr.mxu0 0.0
    %883 = vmatpush2.msra.mxu0 0.0
    %884 = vmatprep.subr.mxu0 0.0
    %885 = vmatpush2.msra.mxu0 0.0
    %886 = vmatprep.subr.mxu0 0.0
    %887 = vmatpush2.msra.mxu0 0.0
    %888 = vmatprep.subr.mxu0 0.0
    %889 = vmatpush2.msra.mxu0 0.0
    %890 = vmatprep.subr.mxu0 0.0
    %891 = vmatpush2.msra.mxu0 0.0
    %892 = vmatprep.subr.mxu0 0.0
    %893 = vmatpush2.msra.mxu0 0.0
    %894 = vmatprep.subr.mxu0 0.0
    %895 = vmatpush2.msra.mxu0 0.0
    %896 = vmatprep.subr.mxu0 0.0
    %897 = vmatpush2.msra.mxu0 0.0
    %898 = vmatprep.subr.mxu0 0.0
    %899 = vmatpush2.msra.mxu0 0.0
    %900 = vmatprep.subr.mxu0 0.0
    %901 = vmatpush2.msra.mxu0 0.0
    %902 = vmatprep.subr.mxu0 0.0
    %903 = vmatpush2.msra.mxu0 0.0
    %904 = vmatprep.subr.mxu0 0.0
    %905 = vmatpush2.msra.mxu0 0.0
    %906 = vmatprep.subr.mxu0 0.0
    %907 = vmatpush2.msra.mxu0 0.0
    %908 = vmatprep.subr.mxu0 0.0
    %909 = vmatpush2.msra.mxu0 0.0
    %910 = vmatprep.subr.mxu0 0.0
    %911 = vmatpush2.msra.mxu0 0.0
    %912 = vmatprep.subr.mxu0 0.0
    %913 = vmatpush2.msra.mxu0 0.0
    %914 = vmatprep.mubr.f32.mxu0 0.0
    %915 = vmatmul.mubr.f32.gmra.mxu0 %v845
    %v916 = vpop.f32.mrf.mxu0
    %v917 = vadd.f32 0.0, %v916
    %v918 = vpop.f32.mrf.mxu0
    %919 = vdwg.mxu0
    %v920 = vadd.f32 %v837, %v917
    %s921 = scalar_lea.vmem %s1, 144
    %v922 = vld [vmem:[%s921] sm:$0xff]
    %v923 = vld [vmem:[%s921 + $0x8] sm:$0xf]
    %v924 = vrot.slane %v98, 1
    %v925 = vsel %vm190, %v179, %v924
    %v926 = vsel %vm192, %v925, 0
    %v929 = vsel %vm195, %v923, 0
    %931 = vmatprep.subr.mxu0 0.0
    %932 = vmatpush1.msra.mxu0 0.0
    %933 = vmatprep.subr.mxu0 0.0
    %934 = vmatpush1.msra.mxu0 0.0
    %935 = vmatprep.subr.mxu0 0.0
    %936 = vmatpush1.msra.mxu0 0.0
    %937 = vmatprep.subr.mxu0 0.0
    %938 = vmatpush1.msra.mxu0 0.0
    %939 = vmatprep.subr.mxu0 0.0
    %940 = vmatpush1.msra.mxu0 0.0
    %941 = vmatprep.subr.mxu0 0.0
    %942 = vmatpush1.msra.mxu0 0.0
    %943 = vmatprep.subr.mxu0 0.0
    %944 = vmatpush1.msra.mxu0 0.0
    %945 = vmatprep.subr.mxu0 0.0
    %946 = vmatpush1.msra.mxu0 0.0
    %947 = vmatprep.subr.mxu0 0.0
    %948 = vmatpush1.msra.mxu0 0.0
    %949 = vmatprep.subr.mxu0 0.0
    %950 = vmatpush1.msra.mxu0 0.0
    %951 = vmatprep.subr.mxu0 0.0
    %952 = vmatpush1.msra.mxu0 0.0
    %953 = vmatprep.subr.mxu0 0.0
    %954 = vmatpush1.msra.mxu0 0.0
    %955 = vmatprep.subr.mxu0 0.0
    %956 = vmatpush1.msra.mxu0 0.0
    %957 = vmatprep.subr.mxu0 0.0
    %958 = vmatpush1.msra.mxu0 0.0
    %959 = vmatprep.subr.mxu0 0.0
    %960 = vmatpush1.msra.mxu0 %v929
    %961 = vmatprep.subr.mxu0 0.0
    %962 = vmatpush1.msra.mxu0 %v922
    %963 = vmatprep.subr.mxu0 0.0
    %964 = vmatpush2.msra.mxu0 0.0
    %965 = vmatprep.subr.mxu0 0.0
    %966 = vmatpush2.msra.mxu0 0.0
    %967 = vmatprep.subr.mxu0 0.0
    %968 = vmatpush2.msra.mxu0 0.0
    %969 = vmatprep.subr.mxu0 0.0
    %970 = vmatpush2.msra.mxu0 0.0
    %971 = vmatprep.subr.mxu0 0.0
    %972 = vmatpush2.msra.mxu0 0.0
    %973 = vmatprep.subr.mxu0 0.0
    %974 = vmatpush2.msra.mxu0 0.0
    %975 = vmatprep.subr.mxu0 0.0
    %976 = vmatpush2.msra.mxu0 0.0
    %977 = vmatprep.subr.mxu0 0.0
    %978 = vmatpush2.msra.mxu0 0.0
    %979 = vmatprep.subr.mxu0 0.0
    %980 = vmatpush2.msra.mxu0 0.0
    %981 = vmatprep.subr.mxu0 0.0
    %982 = vmatpush2.msra.mxu0 0.0
    %983 = vmatprep.subr.mxu0 0.0
    %984 = vmatpush2.msra.mxu0 0.0
    %985 = vmatprep.subr.mxu0 0.0
    %986 = vmatpush2.msra.mxu0 0.0
    %987 = vmatprep.subr.mxu0 0.0
    %988 = vmatpush2.msra.mxu0 0.0
    %989 = vmatprep.subr.mxu0 0.0
    %990 = vmatpush2.msra.mxu0 0.0
    %991 = vmatprep.subr.mxu0 0.0
    %992 = vmatpush2.msra.mxu0 0.0
    %993 = vmatprep.subr.mxu0 0.0
    %994 = vmatpush2.msra.mxu0 0.0
    %995 = vmatprep.mubr.f32.mxu0 0.0
    %996 = vmatmul.mubr.f32.gmra.mxu0 %v926
    %v997 = vpop.f32.mrf.mxu0
    %v998 = vadd.f32 0.0, %v997
    %v999 = vpop.f32.mrf.mxu0
    %1000 = vdwg.mxu0
    %v1001 = vadd.f32 %v920, %v998
    %s1002 = scalar_lea.vmem %s1, 160
    %v1003 = vld [vmem:[%s1002] sm:$0xff]
    %v1004 = vld [vmem:[%s1002 + $0x8] sm:$0xf]
    %v1005 = vrot.slane %v98, 2
    %v1006 = vrot.slane %v179, 1
    %v1007 = vsel %vm190, %v1006, %v1005
    %v1008 = vsel %vm192, %v1007, 0
    %v1011 = vsel %vm195, %v1004, 0
    %1013 = vmatprep.subr.mxu0 0.0
    %1014 = vmatpush1.msra.mxu0 0.0
    %1015 = vmatprep.subr.mxu0 0.0
    %1016 = vmatpush1.msra.mxu0 0.0
    %1017 = vmatprep.subr.mxu0 0.0
    %1018 = vmatpush1.msra.mxu0 0.0
    %1019 = vmatprep.subr.mxu0 0.0
    %1020 = vmatpush1.msra.mxu0 0.0
    %1021 = vmatprep.subr.mxu0 0.0
    %1022 = vmatpush1.msra.mxu0 0.0
    %1023 = vmatprep.subr.mxu0 0.0
    %1024 = vmatpush1.msra.mxu0 0.0
    %1025 = vmatprep.subr.mxu0 0.0
    %1026 = vmatpush1.msra.mxu0 0.0
    %1027 = vmatprep.subr.mxu0 0.0
    %1028 = vmatpush1.msra.mxu0 0.0
    %1029 = vmatprep.subr.mxu0 0.0
    %1030 = vmatpush1.msra.mxu0 0.0
    %1031 = vmatprep.subr.mxu0 0.0
    %1032 = vmatpush1.msra.mxu0 0.0
    %1033 = vmatprep.subr.mxu0 0.0
    %1034 = vmatpush1.msra.mxu0 0.0
    %1035 = vmatprep.subr.mxu0 0.0
    %1036 = vmatpush1.msra.mxu0 0.0
    %1037 = vmatprep.subr.mxu0 0.0
    %1038 = vmatpush1.msra.mxu0 0.0
    %1039 = vmatprep.subr.mxu0 0.0
    %1040 = vmatpush1.msra.mxu0 0.0
    %1041 = vmatprep.subr.mxu0 0.0
    %1042 = vmatpush1.msra.mxu0 %v1011
    %1043 = vmatprep.subr.mxu0 0.0
    %1044 = vmatpush1.msra.mxu0 %v1003
    %1045 = vmatprep.subr.mxu0 0.0
    %1046 = vmatpush2.msra.mxu0 0.0
    %1047 = vmatprep.subr.mxu0 0.0
    %1048 = vmatpush2.msra.mxu0 0.0
    %1049 = vmatprep.subr.mxu0 0.0
    %1050 = vmatpush2.msra.mxu0 0.0
    %1051 = vmatprep.subr.mxu0 0.0
    %1052 = vmatpush2.msra.mxu0 0.0
    %1053 = vmatprep.subr.mxu0 0.0
    %1054 = vmatpush2.msra.mxu0 0.0
    %1055 = vmatprep.subr.mxu0 0.0
    %1056 = vmatpush2.msra.mxu0 0.0
    %1057 = vmatprep.subr.mxu0 0.0
    %1058 = vmatpush2.msra.mxu0 0.0
    %1059 = vmatprep.subr.mxu0 0.0
    %1060 = vmatpush2.msra.mxu0 0.0
    %1061 = vmatprep.subr.mxu0 0.0
    %1062 = vmatpush2.msra.mxu0 0.0
    %1063 = vmatprep.subr.mxu0 0.0
    %1064 = vmatpush2.msra.mxu0 0.0
    %1065 = vmatprep.subr.mxu0 0.0
    %1066 = vmatpush2.msra.mxu0 0.0
    %1067 = vmatprep.subr.mxu0 0.0
    %1068 = vmatpush2.msra.mxu0 0.0
    %1069 = vmatprep.subr.mxu0 0.0
    %1070 = vmatpush2.msra.mxu0 0.0
    %1071 = vmatprep.subr.mxu0 0.0
    %1072 = vmatpush2.msra.mxu0 0.0
    %1073 = vmatprep.subr.mxu0 0.0
    %1074 = vmatpush2.msra.mxu0 0.0
    %1075 = vmatprep.subr.mxu0 0.0
    %1076 = vmatpush2.msra.mxu0 0.0
    %1077 = vmatprep.mubr.f32.mxu0 0.0
    %1078 = vmatmul.mubr.f32.gmra.mxu0 %v1008
    %v1079 = vpop.f32.mrf.mxu0
    %v1080 = vadd.f32 0.0, %v1079
    %v1081 = vpop.f32.mrf.mxu0
    %1082 = vdwg.mxu0
    %v1083 = vadd.f32 %v1001, %v1080
    %s1084 = scalar_lea.vmem %s1, 176
    %v1085 = vld [vmem:[%s1084] sm:$0xff]
    %v1086 = vld [vmem:[%s1084 + $0x8] sm:$0xf]
    %v1087 = vrot.slane %v98, 3
    %v1088 = vrot.slane %v179, 2
    %v1089 = vsel %vm190, %v1088, %v1087
    %v1090 = vsel %vm192, %v1089, 0
    %v1093 = vsel %vm195, %v1086, 0
    %1095 = vmatprep.subr.mxu0 0.0
    %1096 = vmatpush1.msra.mxu0 0.0
    %1097 = vmatprep.subr.mxu0 0.0
    %1098 = vmatpush1.msra.mxu0 0.0
    %1099 = vmatprep.subr.mxu0 0.0
    %1100 = vmatpush1.msra.mxu0 0.0
    %1101 = vmatprep.subr.mxu0 0.0
    %1102 = vmatpush1.msra.mxu0 0.0
    %1103 = vmatprep.subr.mxu0 0.0
    %1104 = vmatpush1.msra.mxu0 0.0
    %1105 = vmatprep.subr.mxu0 0.0
    %1106 = vmatpush1.msra.mxu0 0.0
    %1107 = vmatprep.subr.mxu0 0.0
    %1108 = vmatpush1.msra.mxu0 0.0
    %1109 = vmatprep.subr.mxu0 0.0
    %1110 = vmatpush1.msra.mxu0 0.0
    %1111 = vmatprep.subr.mxu0 0.0
    %1112 = vmatpush1.msra.mxu0 0.0
    %1113 = vmatprep.subr.mxu0 0.0
    %1114 = vmatpush1.msra.mxu0 0.0
    %1115 = vmatprep.subr.mxu0 0.0
    %1116 = vmatpush1.msra.mxu0 0.0
    %1117 = vmatprep.subr.mxu0 0.0
    %1118 = vmatpush1.msra.mxu0 0.0
    %1119 = vmatprep.subr.mxu0 0.0
    %1120 = vmatpush1.msra.mxu0 0.0
    %1121 = vmatprep.subr.mxu0 0.0
    %1122 = vmatpush1.msra.mxu0 0.0
    %1123 = vmatprep.subr.mxu0 0.0
    %1124 = vmatpush1.msra.mxu0 %v1093
    %1125 = vmatprep.subr.mxu0 0.0
    %1126 = vmatpush1.msra.mxu0 %v1085
    %1127 = vmatprep.subr.mxu0 0.0
    %1128 = vmatpush2.msra.mxu0 0.0
    %1129 = vmatprep.subr.mxu0 0.0
    %1130 = vmatpush2.msra.mxu0 0.0
    %1131 = vmatprep.subr.mxu0 0.0
    %1132 = vmatpush2.msra.mxu0 0.0
    %1133 = vmatprep.subr.mxu0 0.0
    %1134 = vmatpush2.msra.mxu0 0.0
    %1135 = vmatprep.subr.mxu0 0.0
    %1136 = vmatpush2.msra.mxu0 0.0
    %1137 = vmatprep.subr.mxu0 0.0
    %1138 = vmatpush2.msra.mxu0 0.0
    %1139 = vmatprep.subr.mxu0 0.0
    %1140 = vmatpush2.msra.mxu0 0.0
    %1141 = vmatprep.subr.mxu0 0.0
    %1142 = vmatpush2.msra.mxu0 0.0
    %1143 = vmatprep.subr.mxu0 0.0
    %1144 = vmatpush2.msra.mxu0 0.0
    %1145 = vmatprep.subr.mxu0 0.0
    %1146 = vmatpush2.msra.mxu0 0.0
    %1147 = vmatprep.subr.mxu0 0.0
    %1148 = vmatpush2.msra.mxu0 0.0
    %1149 = vmatprep.subr.mxu0 0.0
    %1150 = vmatpush2.msra.mxu0 0.0
    %1151 = vmatprep.subr.mxu0 0.0
    %1152 = vmatpush2.msra.mxu0 0.0
    %1153 = vmatprep.subr.mxu0 0.0
    %1154 = vmatpush2.msra.mxu0 0.0
    %1155 = vmatprep.subr.mxu0 0.0
    %1156 = vmatpush2.msra.mxu0 0.0
    %1157 = vmatprep.subr.mxu0 0.0
    %1158 = vmatpush2.msra.mxu0 0.0
    %1159 = vmatprep.mubr.f32.mxu0 0.0
    %1160 = vmatmul.mubr.f32.gmra.mxu0 %v1090
    %v1161 = vpop.f32.mrf.mxu0
    %v1162 = vadd.f32 0.0, %v1161
    %v1163 = vpop.f32.mrf.mxu0
    %1164 = vdwg.mxu0
    %v1165 = vadd.f32 %v1083, %v1162
    %v1166 = vld [vmem:[%s2] sm:$0x1]
    %v1168 = vlaneseq
    %v1169 = vshrl.u32 %v1168, 7
    %v1170 = vsub.s32 0, %v1169
    %v1171 = vrot.slane %v1166, %v1170
    %v1173 = vadd.f32 %v1165, %v1171
    %vm1174 = vcmask 74752
    %v1175 = vsel %vm1174, %v1173, -inf
    %1176 = vmax.xlane.f32.xlu0 %v1175
    %v1177 = vpop.xlane.xlu0 %1176
    %v1178 = vsub.f32 %v1173, %v1177
    %v1179 = vmul.f32 %v1178, 1.442695
    %v1180 = vpow.pop %v1179
    %v1181 = vsel %vm1174, %v1180, 0.0
    %1182 = vadd.xlane.f32.xlu0 %v1181
    %v1183 = vpop.xlane.xlu0 %1182
    %v1184 = vlog2.pop %v1183
    %v1185 = vmul.f32 %v1184, 0.6931472
    %v1186 = vsub.f32 %v1178, %v1185
    %1187 = vst.msk [vmem:[#allocation2] sm:$0x3] %vm1174, %v1186
    // Predicated region
    $region14: #{grnet_forward.5} parent=1 // pred_check
      _
    $region15: #{grnet_forward.5} parent=1 // pred_check_branch
      %1189 = sbr.rel (0) target = $region17
    $region16: #{grnet_forward.5} parent=1 // pred_region
      %s1191 = ssub.s32 32, 32
      %1192 = vsyncadd [#allocation3], %s1191
      %s1194 = sshll.u32 [#allocation2], 4
      %s1195 = int_to_ptr.vmem [resolvable:$true] %s1194
      %1197 = dma.vmem_to_hbm [thread:$0]  %s1195, 32, %s3, [#allocation3]
    $region17: #{grnet_forward.5} parent=1 // pred_fallthru
      _
    // Predicated region
    $region18: #{grnet_forward.5} parent=1 // pred_check
      _
    $region19: #{grnet_forward.5} parent=1 // pred_check_branch
      %1199 = sbr.rel (0) target = $region21
    $region20: #{grnet_forward.5} parent=1 // pred_region
      %1200 = dma.done [#allocation3], 32
    $region21: #{grnet_forward.5} parent=1 // pred_fallthru
      _
    %1201 = vsyncpa [#allocation3], 1

</llo_original>
